<compile_context>
chip_gen: v6e
topology: v6e:2x2x1
jax: 0.10.0
libtpu: 0.0.40
codegen_flags: <defaults>
</compile_context>

<pallas_src>
import math

import jax
import jax.numpy as jnp
from jax.experimental import pallas as pl
from jax.experimental.pallas import tpu as pltpu

# ---------------------------------------------------------------------------
# config ("train_args")
# ---------------------------------------------------------------------------
DIM = 32
NUM_NODES = 32
BATCH_SIZE = 8
NUM_HEADS = 1
NUM_LAYERS = 1          # trans_layers
THRESH_CN = 1e-2
THRESH_1HOP = 1e-2
THRESH_NON1HOP = 1e-2                       # unused downstream (as in reference)
COUNT_DIM = 4                               # mask == 'all'
PAIRWISE_DIM = DIM * NUM_HEADS + COUNT_DIM  # dim*num_heads + count_dim
OUT_PAD = 128                               # lane-dense output slab width
LANES = 128

# packing assumptions for the lane-dense slabs
assert 3 * NUM_NODES + DIM == LANES         # graph slab [adj|ppr|dist|x]
assert 4 * DIM == LANES                     # pos-enc scratch slab / pe_w2 K=128
assert 2 * DIM <= OUT_PAD

# ---------------------------------------------------------------------------
# weight slab layout: (name, n_rows, n_cols) at static row offsets, lanes 0:n_cols
# ---------------------------------------------------------------------------
WEIGHT_SPEC = (
    ("gnn_w",    DIM,          DIM),           # NodeEncoder stand-in weight
    ("el_w1",    DIM,          DIM),           # elementwise_lin layer 1
    ("el_w2",    DIM,          DIM),           # elementwise_lin layer 2
    ("att_a",    DIM,          DIM),           # Wq[:D] @ Wk^T  (folded)
    ("att_b",    DIM,          DIM),           # Wq[D:] @ Wk^T  (folded)
    ("att_vo",   DIM,          DIM),           # Wv @ Wo        (folded)
    ("pe_w2",    4 * DIM,      DIM),           # [cn_w2; oh_w2; nh_w2; 0] K=128
    ("pw_w1a",   DIM,          PAIRWISE_DIM),  # pairwise_lin W1 rows 0:32
    ("pw_w1b",   COUNT_DIM,    PAIRWISE_DIM),  # pairwise_lin W1 rows 32:36
    ("pw_w2",    PAIRWISE_DIM, DIM),
    ("gnn_b",    1, DIM),
    ("ln_g",     1, DIM),
    ("ln_b",     1, DIM),
    ("el_b1",    1, DIM),
    ("el_b2",    1, DIM),
    ("pe_r0_co", 1, 2 * DIM),                  # [cn_w1[0] | oh_w1[0]]
    ("pe_r1_co", 1, 2 * DIM),                  # [cn_w1[1] | oh_w1[1]]
    ("pe_b1_co", 1, 2 * DIM),                  # [cn_b1    | oh_b1   ]
    ("pe_r0_nh", 1, DIM),
    ("pe_r1_nh", 1, DIM),
    ("pe_b1_nh", 1, DIM),
    ("pe_b2_cn", 1, DIM),
    ("pe_b2_oh", 1, DIM),
    ("pe_b2_nh", 1, DIM),
    ("pw_b1",    1, PAIRWISE_DIM),
    ("pw_b2",    1, DIM),
)


def _layout(spec):
    off, r = {}, 0
    for name, nr, nc in spec:
        if nr > 1:                 # align multi-row blocks to the sublane tile
            r = (r + 7) & ~7
        off[name] = (r, nr, nc)
        r += nr
    return off, (r + 7) & ~7


W_OFF, W_ROWS = _layout(WEIGHT_SPEC)


# ---------------------------------------------------------------------------
# fused kernel
# ---------------------------------------------------------------------------
def _fused_link_transformer_kernel(ids_ref, graph_ref, w_ref, out_ref, rs_ref):
    f32 = jnp.float32
    BS, N, D = BATCH_SIZE, NUM_NODES, DIM
    bsn = BS * N

    def w(name):                       # static slice of the packed weight slab
        r0, nr, nc = W_OFF[name]
        return w_ref[r0:r0 + nr, 0:nc]

    g = graph_ref[...]                 # (N, 128) = [adj | ppr | dist | x]
    adj = g[:, 0:N]
    x = g[:, 3 * N:3 * N + D]

    # --- propagate(): NodeEncoder stand-in + LayerNorm (gnn_norm) -----------
    h = jnp.dot(adj, x, preferred_element_type=f32)
    h = jnp.dot(h, w("gnn_w"), preferred_element_type=f32) + w("gnn_b")
    h = jnp.maximum(h, 0.0)
    mu = jnp.mean(h, axis=-1, keepdims=True)
    var = jnp.mean((h - mu) ** 2, axis=-1, keepdims=True)
    x_node = (h - mu) * jax.lax.rsqrt(var + 1e-5) * w("ln_g") + w("ln_b")

    # --- batch gathers: stacked one-hots, TWO matmuls total -----------------
    # rows 0:BS = src one-hots, BS:2BS = tgt one-hots (int32 compare).
    col = jax.lax.broadcasted_iota(jnp.int32, (2 * BS, N), 1)
    oh = (col == ids_ref[...]).astype(f32)                       # (2BS, N)
    G = jnp.dot(oh, g, preferred_element_type=f32)               # (2BS, 128)
    Xg = jnp.dot(oh, x_node, preferred_element_type=f32)         # (2BS, D)
    src_adj, tgt_adj = G[0:BS, 0:N],         G[BS:2 * BS, 0:N]
    src_ppr, tgt_ppr = G[0:BS, N:2 * N],     G[BS:2 * BS, N:2 * N]
    src_dis, tgt_dis = G[0:BS, 2 * N:3 * N], G[BS:2 * BS, 2 * N:3 * N]
    x_i, x_j = Xg[0:BS], Xg[BS:2 * BS]

    # --- elementwise_lin: MLP(2, dim, dim, dim) on x_i * x_j ----------------
    ew = jnp.dot(x_i * x_j, w("el_w1"), preferred_element_type=f32) + w("el_b1")
    ew = jnp.maximum(ew, 0.0)
    ew = jnp.dot(ew, w("el_w2"), preferred_element_type=f32) + w("el_b2")

    # --- compute_node_mask() dense, mask='all' -------------------------------
    cn_mask = ((src_adj * tgt_adj > 0.0) & (src_ppr >= THRESH_CN)
               & (tgt_ppr >= THRESH_CN)).astype(f32)
    oh_mask = (((src_adj + tgt_adj) == 1.0) & (src_ppr >= THRESH_1HOP)
               & (tgt_ppr >= THRESH_1HOP)).astype(f32)
    # get_non_1hop_ppr(): the reference takes torch.mean over the coalesced
    # values of the full sparse (BS,N) matrix, i.e. a batch-GLOBAL mean, so we
    # reduce over the whole (BS,N) candidate set here (not per pair).
    cand = (src_dis > 0.0) & (tgt_dis > 0.0)
    candf = cand.astype(f32)
    cnt = jnp.maximum(jnp.sum(candf, keepdims=True), 1.0)           # (1,1)
    mean_s = jnp.sum(src_dis * candf, keepdims=True) / cnt
    mean_t = jnp.sum(tgt_dis * candf, keepdims=True) / cnt
    nh_mask = (cand & (src_dis <= mean_s) & (tgt_dis <= mean_t)).astype(f32)
    all_mask = jnp.minimum(cn_mask + oh_mask + nh_mask, 1.0)

    # --- get_pos_encodings(): enc = g(a,b) + g(b,a), lane-densified ----------
    # cn + oh encoders share (src_ppr, tgt_ppr) -> computed together at 64 lanes.
    sp, tp = src_ppr[:, :, None], tgt_ppr[:, :, None]
    r0c, r1c, b1c = w("pe_r0_co"), w("pe_r1_co"), w("pe_b1_co")     # (1, 64)
    fwd = sp * r0c + tp * r1c + b1c                                 # (BS,N,64)
    rev = tp * r0c + sp * r1c + b1c
    rs_co = jnp.maximum(fwd, 0.0) + jnp.maximum(rev, 0.0)
    # nh encoder consumes (src_dis, tgt_dis), 32 lanes.
    sd, td = src_dis[:, :, None], tgt_dis[:, :, None]
    r0n, r1n, b1n = w("pe_r0_nh"), w("pe_r1_nh"), w("pe_b1_nh")     # (1, 32)
    fwd_n = sd * r0n + td * r1n + b1n
    rev_n = td * r0n + sd * r1n + b1n
    rs_nh = jnp.maximum(fwd_n, 0.0) + jnp.maximum(rev_n, 0.0)
    # masked relu outputs go into a (BS*N, 128) scratch slab at static lane
    # offsets; lanes 96:128 are zeroed (pe_w2 rows 96:128 are zero padding).
    rs_ref[:, 0:D] = (cn_mask[:, :, None] * rs_co[:, :, 0:D]).reshape(bsn, D)
    rs_ref[:, D:2 * D] = (oh_mask[:, :, None] * rs_co[:, :, D:2 * D]).reshape(bsn, D)
    rs_ref[:, 2 * D:3 * D] = (nh_mask[:, :, None] * rs_nh).reshape(bsn, D)
    rs_ref[:, 3 * D:4 * D] = jnp.zeros((bsn, D), f32)
    # single K=128 matmul for all three encoders' 2nd layers
    pes = jnp.dot(rs_ref[...], w("pe_w2"),
                  preferred_element_type=f32).reshape(BS, N, D)
    pes = pes + 2.0 * (cn_mask[:, :, None] * w("pe_b2_cn")
                       + oh_mask[:, :, None] * w("pe_b2_oh")
                       + nh_mask[:, :, None] * w("pe_b2_nh"))

    # --- LinkTransformerLayer stand-in: masked single-head cross attention --
    # kv = X_node + pes is kept SPLIT: the X_node part uses real (8,32)@(32,32)
    # MXU matmuls (batch-invariant RHS), the pes part uses VPU mul + reduce.
    q = (jnp.dot(x_i, w("att_a"), preferred_element_type=f32)
         + jnp.dot(x_j, w("att_b"), preferred_element_type=f32))    # (BS, D), Wk^T folded
    s = jnp.dot(q, x_node.T, preferred_element_type=f32)            # (BS, N)
    s = s + jnp.sum(q[:, None, :] * pes, axis=-1)
    s = s * (1.0 / math.sqrt(D))
    smax = jnp.max(s, axis=-1, keepdims=True)                       # global max shift
    e = jnp.exp(s - smax) * all_mask                                # mask after exp
    # pairs with no selected node get a zero context vector (denom clamped)
    denom = jnp.maximum(jnp.sum(e, axis=-1, keepdims=True), 1e-9)
    p = e * pl.reciprocal(denom, approx=True)
    ctx = jnp.dot(p, x_node, preferred_element_type=f32)            # (BS, D)
    ctx = ctx + jnp.sum(p[:, :, None] * pes, axis=1)
    att_out = jnp.dot(ctx, w("att_vo"), preferred_element_type=f32)  # Wv@Wo folded

    # --- get_structure_cnts() ------------------------------------------------
    num_cns = jnp.sum(cn_mask, axis=-1, keepdims=True)
    num_1hop = jnp.sum(oh_mask, axis=-1, keepdims=True)
    # num_ppr_ones (thresh=0) equals num_1hop: the 1-hop set is pre-filtered
    # by thresh_1hop and ppr is non-negative, matching the reference.
    num_non1hop = jnp.sum(nh_mask, axis=-1, keepdims=True)
    num_neighbors = num_cns + num_1hop

    # --- pairwise_lin: MLP(2, pairwise_dim, pairwise_dim, dim) --------------
    # counts @ W1[32:36] expressed as rank-1 broadcasts (avoids in-kernel concat)
    w1b = w("pw_w1b")                                               # (4, PW_DIM)
    hp = (jnp.dot(att_out, w("pw_w1a"), preferred_element_type=f32)
          + num_cns * w1b[0:1, :] + num_1hop * w1b[1:2, :]
          + num_non1hop * w1b[2:3, :] + num_neighbors * w1b[3:4, :]
          + w("pw_b1"))
    hp = jnp.maximum(hp, 0.0)
    pw = jnp.dot(hp, w("pw_w2"), preferred_element_type=f32) + w("pw_b2")

    # --- combine: [elementwise || pairwise], lane-dense padded store ---------
    pad = jnp.zeros((BS, OUT_PAD - 2 * D), f32)
    out_ref[...] = jnp.concatenate([ew, pw, pad], axis=-1)


# ---------------------------------------------------------------------------
# parameters (deterministic synthetic init)
# ---------------------------------------------------------------------------
def _init(key, shape, scale=0.1):
    return scale * jax.random.normal(key, shape, dtype=jnp.float32)


def make_params(key):
    ks = iter(jax.random.split(key, 64))
    p = {}
    # NodeEncoder stand-in
    p["gnn_w"] = _init(next(ks), (DIM, DIM))
    p["gnn_b"] = jnp.zeros((1, DIM), jnp.float32)
    # gnn_norm (LayerNorm)
    p["ln_g"] = jnp.ones((1, DIM), jnp.float32)
    p["ln_b"] = jnp.zeros((1, DIM), jnp.float32)
    # elementwise_lin: MLP(2, dim, dim, dim)
    p["el_w1"], p["el_b1"] = _init(next(ks), (DIM, DIM)), jnp.zeros((1, DIM), jnp.float32)
    p["el_w2"], p["el_b2"] = _init(next(ks), (DIM, DIM)), jnp.zeros((1, DIM), jnp.float32)
    # ppr/dist encoders: MLP(2, 2, dim, dim)
    for name in ("cn", "oh", "nh"):
        p[f"pe_{name}_w1"] = _init(next(ks), (2, DIM))
        p[f"pe_{name}_b1"] = jnp.zeros((1, DIM), jnp.float32)
        p[f"pe_{name}_w2"] = _init(next(ks), (DIM, DIM))
        p[f"pe_{name}_b2"] = jnp.zeros((1, DIM), jnp.float32)
    # attention layer (LinkTransformerLayer stand-in), out_dim = dim (1 layer)
    p["att_wq"] = _init(next(ks), (2 * DIM, DIM))
    p["att_wk"] = _init(next(ks), (DIM, DIM))
    p["att_wv"] = _init(next(ks), (DIM, DIM))
    p["att_wo"] = _init(next(ks), (DIM, DIM * NUM_HEADS))
    # pairwise_lin: MLP(2, pairwise_dim, pairwise_dim, dim)
    p["pw_w1"] = _init(next(ks), (PAIRWISE_DIM, PAIRWISE_DIM))
    p["pw_b1"] = jnp.zeros((1, PAIRWISE_DIM), jnp.float32)
    p["pw_w2"] = _init(next(ks), (PAIRWISE_DIM, DIM))
    p["pw_b2"] = jnp.zeros((1, DIM), jnp.float32)
    return p


# ---------------------------------------------------------------------------
# host-side packing (done once): lane-dense input slabs
# ---------------------------------------------------------------------------
def pack_weight_slab(params):
    """Pack all weights/biases into one (W_ROWS, 128) f32 slab."""
    D = DIM
    ent = {
        "gnn_w": params["gnn_w"],
        "el_w1": params["el_w1"],
        "el_w2": params["el_w2"],
        # fold Wk^T into the query projections and Wo into Wv (exact)
        "att_a": params["att_wq"][:D] @ params["att_wk"].T,
        "att_b": params["att_wq"][D:] @ params["att_wk"].T,
        "att_vo": params["att_wv"] @ params["att_wo"],
        "pe_w2": jnp.concatenate(
            [params["pe_cn_w2"], params["pe_oh_w2"], params["pe_nh_w2"],
             jnp.zeros((D, D), jnp.float32)], axis=0),              # (128, D)
        "pw_w1a": params["pw_w1"][:D * NUM_HEADS],
        "pw_w1b": params["pw_w1"][D * NUM_HEADS:],
        "pw_w2": params["pw_w2"],
        "gnn_b": params["gnn_b"], "ln_g": params["ln_g"], "ln_b": params["ln_b"],
        "el_b1": params["el_b1"], "el_b2": params["el_b2"],
        "pe_r0_co": jnp.concatenate([params["pe_cn_w1"][0:1], params["pe_oh_w1"][0:1]], axis=1),
        "pe_r1_co": jnp.concatenate([params["pe_cn_w1"][1:2], params["pe_oh_w1"][1:2]], axis=1),
        "pe_b1_co": jnp.concatenate([params["pe_cn_b1"], params["pe_oh_b1"]], axis=1),
        "pe_r0_nh": params["pe_nh_w1"][0:1],
        "pe_r1_nh": params["pe_nh_w1"][1:2],
        "pe_b1_nh": params["pe_nh_b1"],
        "pe_b2_cn": params["pe_cn_b2"], "pe_b2_oh": params["pe_oh_b2"],
        "pe_b2_nh": params["pe_nh_b2"],
        "pw_b1": params["pw_b1"], "pw_b2": params["pw_b2"],
    }
    slab = jnp.zeros((W_ROWS, LANES), jnp.float32)
    for name, (r0, nr, nc) in W_OFF.items():
        slab = slab.at[r0:r0 + nr, 0:nc].set(ent[name].astype(jnp.float32))
    return slab


def pack_graph_slab(data):
    """(N, 128) lane-dense slab [adj | ppr | dist | x]."""
    return jnp.concatenate(
        [data["adj"], data["ppr"], data["dist"], data["x"]], axis=1
    ).astype(jnp.float32)


# ---------------------------------------------------------------------------
# forward: one fused pallas_call (3 input DMAs)
# ---------------------------------------------------------------------------
@jax.jit
def link_transformer_forward(w_slab, graph_slab, batch):
    # int32 ids: rows 0:BS = src, BS:2BS = tgt.  Kept in VMEM as a (2*BS,1)
    # vector so the one-hot build is a single vectorized integer compare
    # (SMEM would force per-row scalar construction of the one-hot).
    ids = batch.astype(jnp.int32).reshape(2 * BATCH_SIZE, 1)

    vmem = pl.BlockSpec(memory_space=pltpu.MemorySpace.VMEM)
    out = pl.pallas_call(
        _fused_link_transformer_kernel,
        out_shape=jax.ShapeDtypeStruct((BATCH_SIZE, OUT_PAD), jnp.float32),
        in_specs=[vmem, vmem, vmem],
        out_specs=vmem,
        scratch_shapes=[
            pltpu.VMEM((BATCH_SIZE * NUM_NODES, 4 * DIM), jnp.float32),  # pe slab
        ],
        # TODO(synk): at production batch sizes, add a grid over the pair axis
        # (parallel dimension_semantics) so v7x's two TensorCores split the
        # batch and DMA/compute pipeline; gridless is optimal at BS=8.
    )(ids, graph_slab, w_slab)
    return out[:, : 2 * DIM]


# ---------------------------------------------------------------------------
# main
# ---------------------------------------------------------------------------
if __name__ == "__main__":
    key = jax.random.PRNGKey(0)
    k_adj, k_ppr, k_dist, k_dmask, k_x, k_batch, k_par = jax.random.split(key, 7)

    N, D, BS = NUM_NODES, DIM, BATCH_SIZE

    # symmetric 0/1 adjacency, no self loops
    a = (jax.random.uniform(k_adj, (N, N)) < 0.3).astype(jnp.float32)
    adj = jnp.clip(a + a.T, 0.0, 1.0) * (1.0 - jnp.eye(N, dtype=jnp.float32))
    # ppr-like scores
    ppr = jax.random.uniform(k_ppr, (N, N), minval=0.0, maxval=0.5).astype(jnp.float32)
    # sparse-ish distance matrix (0 == no entry)
    dmask = (jax.random.uniform(k_dmask, (N, N)) < 0.4).astype(jnp.float32)
    dist = (jnp.floor(jax.random.uniform(k_dist, (N, N), minval=2.0, maxval=6.0))
            * dmask * (1.0 - jnp.eye(N, dtype=jnp.float32))).astype(jnp.float32)
    # node features
    x = jax.random.normal(k_x, (N, D), dtype=jnp.float32)
    # batch of (src, tgt) pairs
    batch = jax.random.randint(k_batch, (2, BS), 0, N, dtype=jnp.int32)

    params = make_params(k_par)
    data = {"adj": adj, "ppr": ppr, "dist": dist, "x": x}

    # host-side, one-time packing of the lane-dense input slabs
    w_slab = pack_weight_slab(params)
    graph_slab = pack_graph_slab(data)

    out = link_transformer_forward(w_slab, graph_slab, batch)
    out = jax.block_until_ready(out)

    assert out.shape == (BS, 2 * D), out.shape
    assert bool(jnp.all(jnp.isfinite(out)))
    print("KERNEL_OK")
</pallas_src>

<mosaic_0001>
module attributes {stable_mosaic.version = 11 : i64} {
  func.func @_fused_link_transformer_kernel(%arg0: memref<16x1xi32, #tpu.memory_space<vmem>>, %arg1: memref<32x128xf32, #tpu.memory_space<vmem>>, %arg2: memref<416x128xf32, #tpu.memory_space<vmem>>, %arg3: memref<8x128xf32, #tpu.memory_space<vmem>>, %arg4: memref<256x128xf32, #tpu.memory_space<vmem>>) attributes {dimension_semantics = [], scalar_prefetch = 0 : i64, scratch_operands = 1 : i64, tpu.core_type = #tpu.core_type<tc>} {
    %c0 = arith.constant 0 : index
    %c0_0 = arith.constant 0 : index
    %0 = vector.load %arg1[%c0, %c0_0] : memref<32x128xf32, #tpu.memory_space<vmem>>, vector<32x128xf32>
    %1 = vector.extract_strided_slice %0 {offsets = [0, 0], sizes = [32, 32], strides = [1, 1]} : vector<32x128xf32> to vector<32x32xf32>
    %2 = vector.extract_strided_slice %0 {offsets = [0, 96], sizes = [32, 32], strides = [1, 1]} : vector<32x128xf32> to vector<32x32xf32>
    %cst = arith.constant dense<0.000000e+00> : vector<32x32xf32>
    %3 = tpu.matmul %1, %2, %cst {dimension_numbers = #tpu.dot_dimension_numbers<[1], [0], [0], [1], [0, 0, 1, 1], [], []>} : vector<32x32xf32>, vector<32x32xf32>, vector<32x32xf32> -> vector<32x32xf32>
    %c0_1 = arith.constant 0 : index
    %c0_2 = arith.constant 0 : index
    %4 = vector.load %arg2[%c0_1, %c0_2] : memref<416x128xf32, #tpu.memory_space<vmem>>, vector<32x32xf32>
    %cst_3 = arith.constant dense<0.000000e+00> : vector<32x32xf32>
    %5 = tpu.matmul %3, %4, %cst_3 {dimension_numbers = #tpu.dot_dimension_numbers<[1], [0], [0], [1], [0, 0, 1, 1], [], []>} : vector<32x32xf32>, vector<32x32xf32>, vector<32x32xf32> -> vector<32x32xf32>
    %c396 = arith.constant 396 : index
    %c0_4 = arith.constant 0 : index
    %6 = vector.load %arg2[%c396, %c0_4] : memref<416x128xf32, #tpu.memory_space<vmem>>, vector<1x32xf32>
    %7 = vector.broadcast %6 : vector<1x32xf32> to vector<32x32xf32>
    %8 = arith.addf %5, %7 : vector<32x32xf32>
    %cst_5 = arith.constant 0.000000e+00 : f32
    %9 = vector.broadcast %cst_5 : f32 to vector<32x32xf32>
    %10 = arith.maximumf %8, %9 : vector<32x32xf32>
    %cst_6 = arith.constant dense<0.000000e+00> : vector<32xf32>
    %11 = vector.multi_reduction <add>, %10, %cst_6 [1] : vector<32x32xf32> to vector<32xf32>
    %12 = vector.shape_cast %11 : vector<32xf32> to vector<32x1xf32>
    %cst_7 = arith.constant 3.200000e+01 : f32
    %13 = vector.broadcast %cst_7 : f32 to vector<32x1xf32>
    %14 = arith.divf %12, %13 : vector<32x1xf32>
    %15 = vector.broadcast %14 : vector<32x1xf32> to vector<32x32xf32>
    %16 = arith.subf %10, %15 : vector<32x32xf32>
    %17 = arith.mulf %16, %16 : vector<32x32xf32>
    %cst_8 = arith.constant dense<0.000000e+00> : vector<32xf32>
    %18 = vector.multi_reduction <add>, %17, %cst_8 [1] : vector<32x32xf32> to vector<32xf32>
    %19 = vector.shape_cast %18 : vector<32xf32> to vector<32x1xf32>
    %cst_9 = arith.constant 3.200000e+01 : f32
    %20 = vector.broadcast %cst_9 : f32 to vector<32x1xf32>
    %21 = arith.divf %19, %20 : vector<32x1xf32>
    %22 = vector.broadcast %14 : vector<32x1xf32> to vector<32x32xf32>
    %23 = arith.subf %10, %22 : vector<32x32xf32>
    %cst_10 = arith.constant 9.99999974E-6 : f32
    %24 = vector.broadcast %cst_10 : f32 to vector<32x1xf32>
    %25 = arith.addf %21, %24 : vector<32x1xf32>
    %26 = math.rsqrt %25 : vector<32x1xf32>
    %27 = vector.broadcast %26 : vector<32x1xf32> to vector<32x32xf32>
    %28 = arith.mulf %23, %27 : vector<32x32xf32>
    %c397 = arith.constant 397 : index
    %c0_11 = arith.constant 0 : index
    %29 = vector.load %arg2[%c397, %c0_11] : memref<416x128xf32, #tpu.memory_space<vmem>>, vector<1x32xf32>
    %30 = vector.broadcast %29 : vector<1x32xf32> to vector<32x32xf32>
    %31 = arith.mulf %28, %30 : vector<32x32xf32>
    %c398 = arith.constant 398 : index
    %c0_12 = arith.constant 0 : index
    %32 = vector.load %arg2[%c398, %c0_12] : memref<416x128xf32, #tpu.memory_space<vmem>>, vector<1x32xf32>
    %33 = vector.broadcast %32 : vector<1x32xf32> to vector<32x32xf32>
    %34 = arith.addf %31, %33 : vector<32x32xf32>
    %35 = tpu.iota {dimensions = array<i32: 1>} : vector<16x32xi32>
    %c0_13 = arith.constant 0 : index
    %c0_14 = arith.constant 0 : index
    %36 = vector.load %arg0[%c0_13, %c0_14] : memref<16x1xi32, #tpu.memory_space<vmem>>, vector<16x1xi32>
    %37 = vector.broadcast %36 : vector<16x1xi32> to vector<16x32xi32>
    %38 = arith.cmpi eq, %35, %37 : vector<16x32xi32>
    %39 = arith.extui %38 : vector<16x32xi1> to vector<16x32xi32>
    %40 = arith.sitofp %39 : vector<16x32xi32> to vector<16x32xf32>
    %cst_15 = arith.constant dense<0.000000e+00> : vector<16x128xf32>
    %41 = tpu.matmul %40, %0, %cst_15 {dimension_numbers = #tpu.dot_dimension_numbers<[1], [0], [0], [1], [0, 0, 1, 1], [], []>} : vector<16x32xf32>, vector<32x128xf32>, vector<16x128xf32> -> vector<16x128xf32>
    %cst_16 = arith.constant dense<0.000000e+00> : vector<16x32xf32>
    %42 = tpu.matmul %40, %34, %cst_16 {dimension_numbers = #tpu.dot_dimension_numbers<[1], [0], [0], [1], [0, 0, 1, 1], [], []>} : vector<16x32xf32>, vector<32x32xf32>, vector<16x32xf32> -> vector<16x32xf32>
    %43 = vector.extract_strided_slice %41 {offsets = [0, 0], sizes = [8, 32], strides = [1, 1]} : vector<16x128xf32> to vector<8x32xf32>
    %44 = vector.extract_strided_slice %41 {offsets = [8, 0], sizes = [8, 32], strides = [1, 1]} : vector<16x128xf32> to vector<8x32xf32>
    %45 = vector.extract_strided_slice %41 {offsets = [0, 32], sizes = [8, 32], strides = [1, 1]} : vector<16x128xf32> to vector<8x32xf32>
    %46 = vector.extract_strided_slice %41 {offsets = [8, 32], sizes = [8, 32], strides = [1, 1]} : vector<16x128xf32> to vector<8x32xf32>
    %47 = vector.extract_strided_slice %41 {offsets = [0, 64], sizes = [8, 32], strides = [1, 1]} : vector<16x128xf32> to vector<8x32xf32>
    %48 = vector.extract_strided_slice %41 {offsets = [8, 64], sizes = [8, 32], strides = [1, 1]} : vector<16x128xf32> to vector<8x32xf32>
    %49 = vector.extract_strided_slice %42 {offsets = [0, 0], sizes = [8, 32], strides = [1, 1]} : vector<16x32xf32> to vector<8x32xf32>
    %50 = vector.extract_strided_slice %42 {offsets = [8, 0], sizes = [8, 32], strides = [1, 1]} : vector<16x32xf32> to vector<8x32xf32>
    %51 = arith.mulf %49, %50 : vector<8x32xf32>
    %c32 = arith.constant 32 : index
    %c0_17 = arith.constant 0 : index
    %52 = vector.load %arg2[%c32, %c0_17] : memref<416x128xf32, #tpu.memory_space<vmem>>, vector<32x32xf32>
    %cst_18 = arith.constant dense<0.000000e+00> : vector<8x32xf32>
    %53 = tpu.matmul %51, %52, %cst_18 {dimension_numbers = #tpu.dot_dimension_numbers<[1], [0], [0], [1], [0, 0, 1, 1], [], []>} : vector<8x32xf32>, vector<32x32xf32>, vector<8x32xf32> -> vector<8x32xf32>
    %c399 = arith.constant 399 : index
    %c0_19 = arith.constant 0 : index
    %54 = vector.load %arg2[%c399, %c0_19] : memref<416x128xf32, #tpu.memory_space<vmem>>, vector<1x32xf32>
    %55 = vector.broadcast %54 : vector<1x32xf32> to vector<8x32xf32>
    %56 = arith.addf %53, %55 : vector<8x32xf32>
    %cst_20 = arith.constant 0.000000e+00 : f32
    %57 = vector.broadcast %cst_20 : f32 to vector<8x32xf32>
    %58 = arith.maximumf %56, %57 : vector<8x32xf32>
    %c64 = arith.constant 64 : index
    %c0_21 = arith.constant 0 : index
    %59 = vector.load %arg2[%c64, %c0_21] : memref<416x128xf32, #tpu.memory_space<vmem>>, vector<32x32xf32>
    %cst_22 = arith.constant dense<0.000000e+00> : vector<8x32xf32>
    %60 = tpu.matmul %58, %59, %cst_22 {dimension_numbers = #tpu.dot_dimension_numbers<[1], [0], [0], [1], [0, 0, 1, 1], [], []>} : vector<8x32xf32>, vector<32x32xf32>, vector<8x32xf32> -> vector<8x32xf32>
    %c400 = arith.constant 400 : index
    %c0_23 = arith.constant 0 : index
    %61 = vector.load %arg2[%c400, %c0_23] : memref<416x128xf32, #tpu.memory_space<vmem>>, vector<1x32xf32>
    %62 = vector.broadcast %61 : vector<1x32xf32> to vector<8x32xf32>
    %63 = arith.addf %60, %62 : vector<8x32xf32>
    %64 = arith.mulf %43, %44 : vector<8x32xf32>
    %cst_24 = arith.constant 0.000000e+00 : f32
    %65 = vector.broadcast %cst_24 : f32 to vector<8x32xf32>
    %66 = arith.cmpf ogt, %64, %65 : vector<8x32xf32>
    %cst_25 = arith.constant 0.00999999977 : f32
    %67 = vector.broadcast %cst_25 : f32 to vector<8x32xf32>
    %68 = arith.cmpf oge, %45, %67 : vector<8x32xf32>
    %69 = arith.andi %66, %68 : vector<8x32xi1>
    %cst_26 = arith.constant 0.00999999977 : f32
    %70 = vector.broadcast %cst_26 : f32 to vector<8x32xf32>
    %71 = arith.cmpf oge, %46, %70 : vector<8x32xf32>
    %72 = arith.andi %69, %71 : vector<8x32xi1>
    %73 = arith.extui %72 : vector<8x32xi1> to vector<8x32xi32>
    %74 = arith.sitofp %73 : vector<8x32xi32> to vector<8x32xf32>
    %75 = arith.addf %43, %44 : vector<8x32xf32>
    %cst_27 = arith.constant 1.000000e+00 : f32
    %76 = vector.broadcast %cst_27 : f32 to vector<8x32xf32>
    %77 = arith.cmpf oeq, %75, %76 : vector<8x32xf32>
    %cst_28 = arith.constant 0.00999999977 : f32
    %78 = vector.broadcast %cst_28 : f32 to vector<8x32xf32>
    %79 = arith.cmpf oge, %45, %78 : vector<8x32xf32>
    %80 = arith.andi %77, %79 : vector<8x32xi1>
    %cst_29 = arith.constant 0.00999999977 : f32
    %81 = vector.broadcast %cst_29 : f32 to vector<8x32xf32>
    %82 = arith.cmpf oge, %46, %81 : vector<8x32xf32>
    %83 = arith.andi %80, %82 : vector<8x32xi1>
    %84 = arith.extui %83 : vector<8x32xi1> to vector<8x32xi32>
    %85 = arith.sitofp %84 : vector<8x32xi32> to vector<8x32xf32>
    %cst_30 = arith.constant 0.000000e+00 : f32
    %86 = vector.broadcast %cst_30 : f32 to vector<8x32xf32>
    %87 = arith.cmpf ogt, %47, %86 : vector<8x32xf32>
    %cst_31 = arith.constant 0.000000e+00 : f32
    %88 = vector.broadcast %cst_31 : f32 to vector<8x32xf32>
    %89 = arith.cmpf ogt, %48, %88 : vector<8x32xf32>
    %90 = arith.andi %87, %89 : vector<8x32xi1>
    %91 = arith.extui %90 : vector<8x32xi1> to vector<8x32xi32>
    %92 = arith.sitofp %91 : vector<8x32xi32> to vector<8x32xf32>
    %93 = vector.shape_cast %92 : vector<8x32xf32> to vector<1x8x32xf32>
    %cst_32 = arith.constant dense<0.000000e+00> : vector<1xf32>
    %94 = vector.multi_reduction <add>, %93, %cst_32 [1, 2] : vector<1x8x32xf32> to vector<1xf32>
    %95 = vector.shape_cast %94 : vector<1xf32> to vector<1x1x1xf32>
    %96 = vector.extract %95[0, 0, 0] : f32 from vector<1x1x1xf32>
    %97 = vector.broadcast %96 : f32 to vector<1x1xf32>
    %cst_33 = arith.constant 1.000000e+00 : f32
    %98 = vector.broadcast %cst_33 : f32 to vector<1x1xf32>
    %99 = arith.maximumf %97, %98 : vector<1x1xf32>
    %100 = arith.mulf %47, %92 : vector<8x32xf32>
    %101 = vector.shape_cast %100 : vector<8x32xf32> to vector<1x8x32xf32>
    %cst_34 = arith.constant dense<0.000000e+00> : vector<1xf32>
    %102 = vector.multi_reduction <add>, %101, %cst_34 [1, 2] : vector<1x8x32xf32> to vector<1xf32>
    %103 = vector.shape_cast %102 : vector<1xf32> to vector<1x1x1xf32>
    %104 = vector.extract %103[0, 0, 0] : f32 from vector<1x1x1xf32>
    %105 = vector.broadcast %104 : f32 to vector<1x1xf32>
    %106 = arith.divf %105, %99 : vector<1x1xf32>
    %107 = arith.mulf %48, %92 : vector<8x32xf32>
    %108 = vector.shape_cast %107 : vector<8x32xf32> to vector<1x8x32xf32>
    %cst_35 = arith.constant dense<0.000000e+00> : vector<1xf32>
    %109 = vector.multi_reduction <add>, %108, %cst_35 [1, 2] : vector<1x8x32xf32> to vector<1xf32>
    %110 = vector.shape_cast %109 : vector<1xf32> to vector<1x1x1xf32>
    %111 = vector.extract %110[0, 0, 0] : f32 from vector<1x1x1xf32>
    %112 = vector.broadcast %111 : f32 to vector<1x1xf32>
    %113 = arith.divf %112, %99 : vector<1x1xf32>
    %114 = vector.broadcast %106 : vector<1x1xf32> to vector<8x32xf32>
    %115 = arith.cmpf ole, %47, %114 : vector<8x32xf32>
    %116 = arith.andi %90, %115 : vector<8x32xi1>
    %117 = vector.broadcast %113 : vector<1x1xf32> to vector<8x32xf32>
    %118 = arith.cmpf ole, %48, %117 : vector<8x32xf32>
    %119 = arith.andi %116, %118 : vector<8x32xi1>
    %120 = arith.extui %119 : vector<8x32xi1> to vector<8x32xi32>
    %121 = arith.sitofp %120 : vector<8x32xi32> to vector<8x32xf32>
    %122 = arith.addf %74, %85 : vector<8x32xf32>
    %123 = arith.addf %122, %121 : vector<8x32xf32>
    %cst_36 = arith.constant 1.000000e+00 : f32
    %124 = vector.broadcast %cst_36 : f32 to vector<8x32xf32>
    %125 = arith.minimumf %123, %124 : vector<8x32xf32>
    %126 = vector.shape_cast %45 : vector<8x32xf32> to vector<8x32x1xf32>
    %127 = vector.shape_cast %46 : vector<8x32xf32> to vector<8x32x1xf32>
    %c401 = arith.constant 401 : index
    %c0_37 = arith.constant 0 : index
    %128 = vector.load %arg2[%c401, %c0_37] : memref<416x128xf32, #tpu.memory_space<vmem>>, vector<1x64xf32>
    %c402 = arith.constant 402 : index
    %c0_38 = arith.constant 0 : index
    %129 = vector.load %arg2[%c402, %c0_38] : memref<416x128xf32, #tpu.memory_space<vmem>>, vector<1x64xf32>
    %c403 = arith.constant 403 : index
    %c0_39 = arith.constant 0 : index
    %130 = vector.load %arg2[%c403, %c0_39] : memref<416x128xf32, #tpu.memory_space<vmem>>, vector<1x64xf32>
    %131 = vector.shape_cast %128 : vector<1x64xf32> to vector<1x1x64xf32>
    %132 = vector.broadcast %126 : vector<8x32x1xf32> to vector<8x32x64xf32>
    %133 = vector.broadcast %131 : vector<1x1x64xf32> to vector<8x32x64xf32>
    %134 = arith.mulf %132, %133 : vector<8x32x64xf32>
    %135 = vector.shape_cast %129 : vector<1x64xf32> to vector<1x1x64xf32>
    %136 = vector.broadcast %127 : vector<8x32x1xf32> to vector<8x32x64xf32>
    %137 = vector.broadcast %135 : vector<1x1x64xf32> to vector<8x32x64xf32>
    %138 = arith.mulf %136, %137 : vector<8x32x64xf32>
    %139 = arith.addf %134, %138 : vector<8x32x64xf32>
    %140 = vector.shape_cast %130 : vector<1x64xf32> to vector<1x1x64xf32>
    %141 = vector.broadcast %140 : vector<1x1x64xf32> to vector<8x32x64xf32>
    %142 = arith.addf %139, %141 : vector<8x32x64xf32>
    %143 = vector.shape_cast %128 : vector<1x64xf32> to vector<1x1x64xf32>
    %144 = vector.broadcast %127 : vector<8x32x1xf32> to vector<8x32x64xf32>
    %145 = vector.broadcast %143 : vector<1x1x64xf32> to vector<8x32x64xf32>
    %146 = arith.mulf %144, %145 : vector<8x32x64xf32>
    %147 = vector.shape_cast %129 : vector<1x64xf32> to vector<1x1x64xf32>
    %148 = vector.broadcast %126 : vector<8x32x1xf32> to vector<8x32x64xf32>
    %149 = vector.broadcast %147 : vector<1x1x64xf32> to vector<8x32x64xf32>
    %150 = arith.mulf %148, %149 : vector<8x32x64xf32>
    %151 = arith.addf %146, %150 : vector<8x32x64xf32>
    %152 = vector.shape_cast %130 : vector<1x64xf32> to vector<1x1x64xf32>
    %153 = vector.broadcast %152 : vector<1x1x64xf32> to vector<8x32x64xf32>
    %154 = arith.addf %151, %153 : vector<8x32x64xf32>
    %cst_40 = arith.constant 0.000000e+00 : f32
    %155 = vector.broadcast %cst_40 : f32 to vector<8x32x64xf32>
    %156 = arith.maximumf %142, %155 : vector<8x32x64xf32>
    %cst_41 = arith.constant 0.000000e+00 : f32
    %157 = vector.broadcast %cst_41 : f32 to vector<8x32x64xf32>
    %158 = arith.maximumf %154, %157 : vector<8x32x64xf32>
    %159 = arith.addf %156, %158 : vector<8x32x64xf32>
    %160 = vector.shape_cast %47 : vector<8x32xf32> to vector<8x32x1xf32>
    %161 = vector.shape_cast %48 : vector<8x32xf32> to vector<8x32x1xf32>
    %c404 = arith.constant 404 : index
    %c0_42 = arith.constant 0 : index
    %162 = vector.load %arg2[%c404, %c0_42] : memref<416x128xf32, #tpu.memory_space<vmem>>, vector<1x32xf32>
    %c405 = arith.constant 405 : index
    %c0_43 = arith.constant 0 : index
    %163 = vector.load %arg2[%c405, %c0_43] : memref<416x128xf32, #tpu.memory_space<vmem>>, vector<1x32xf32>
    %c406 = arith.constant 406 : index
    %c0_44 = arith.constant 0 : index
    %164 = vector.load %arg2[%c406, %c0_44] : memref<416x128xf32, #tpu.memory_space<vmem>>, vector<1x32xf32>
    %165 = vector.shape_cast %162 : vector<1x32xf32> to vector<1x1x32xf32>
    %166 = vector.broadcast %160 : vector<8x32x1xf32> to vector<8x32x32xf32>
    %167 = vector.broadcast %165 : vector<1x1x32xf32> to vector<8x32x32xf32>
    %168 = arith.mulf %166, %167 : vector<8x32x32xf32>
    %169 = vector.shape_cast %163 : vector<1x32xf32> to vector<1x1x32xf32>
    %170 = vector.broadcast %161 : vector<8x32x1xf32> to vector<8x32x32xf32>
    %171 = vector.broadcast %169 : vector<1x1x32xf32> to vector<8x32x32xf32>
    %172 = arith.mulf %170, %171 : vector<8x32x32xf32>
    %173 = arith.addf %168, %172 : vector<8x32x32xf32>
    %174 = vector.shape_cast %164 : vector<1x32xf32> to vector<1x1x32xf32>
    %175 = vector.broadcast %174 : vector<1x1x32xf32> to vector<8x32x32xf32>
    %176 = arith.addf %173, %175 : vector<8x32x32xf32>
    %177 = vector.shape_cast %162 : vector<1x32xf32> to vector<1x1x32xf32>
    %178 = vector.broadcast %161 : vector<8x32x1xf32> to vector<8x32x32xf32>
    %179 = vector.broadcast %177 : vector<1x1x32xf32> to vector<8x32x32xf32>
    %180 = arith.mulf %178, %179 : vector<8x32x32xf32>
    %181 = vector.shape_cast %163 : vector<1x32xf32> to vector<1x1x32xf32>
    %182 = vector.broadcast %160 : vector<8x32x1xf32> to vector<8x32x32xf32>
    %183 = vector.broadcast %181 : vector<1x1x32xf32> to vector<8x32x32xf32>
    %184 = arith.mulf %182, %183 : vector<8x32x32xf32>
    %185 = arith.addf %180, %184 : vector<8x32x32xf32>
    %186 = vector.shape_cast %164 : vector<1x32xf32> to vector<1x1x32xf32>
    %187 = vector.broadcast %186 : vector<1x1x32xf32> to vector<8x32x32xf32>
    %188 = arith.addf %185, %187 : vector<8x32x32xf32>
    %cst_45 = arith.constant 0.000000e+00 : f32
    %189 = vector.broadcast %cst_45 : f32 to vector<8x32x32xf32>
    %190 = arith.maximumf %176, %189 : vector<8x32x32xf32>
    %cst_46 = arith.constant 0.000000e+00 : f32
    %191 = vector.broadcast %cst_46 : f32 to vector<8x32x32xf32>
    %192 = arith.maximumf %188, %191 : vector<8x32x32xf32>
    %193 = arith.addf %190, %192 : vector<8x32x32xf32>
    %194 = vector.shape_cast %74 : vector<8x32xf32> to vector<8x32x1xf32>
    %195 = vector.extract_strided_slice %159 {offsets = [0, 0, 0], sizes = [8, 32, 32], strides = [1, 1, 1]} : vector<8x32x64xf32> to vector<8x32x32xf32>
    %196 = vector.broadcast %194 : vector<8x32x1xf32> to vector<8x32x32xf32>
    %197 = arith.mulf %196, %195 : vector<8x32x32xf32>
    %198 = vector.shape_cast %197 : vector<8x32x32xf32> to vector<256x32xf32>
    %c0_47 = arith.constant 0 : index
    %c0_48 = arith.constant 0 : index
    %199 = vector.load %arg4[%c0_47, %c0_48] : memref<256x128xf32, #tpu.memory_space<vmem>>, vector<256x32xf32>
    tpu.vector_store %arg4[%c0_47, %c0_48], %198 {strides = array<i32>} : memref<256x128xf32, #tpu.memory_space<vmem>>, vector<256x32xf32>,
    %200 = vector.shape_cast %85 : vector<8x32xf32> to vector<8x32x1xf32>
    %201 = vector.extract_strided_slice %159 {offsets = [0, 0, 32], sizes = [8, 32, 32], strides = [1, 1, 1]} : vector<8x32x64xf32> to vector<8x32x32xf32>
    %202 = vector.broadcast %200 : vector<8x32x1xf32> to vector<8x32x32xf32>
    %203 = arith.mulf %202, %201 : vector<8x32x32xf32>
    %204 = vector.shape_cast %203 : vector<8x32x32xf32> to vector<256x32xf32>
    %c0_49 = arith.constant 0 : index
    %c32_50 = arith.constant 32 : index
    %205 = vector.load %arg4[%c0_49, %c32_50] : memref<256x128xf32, #tpu.memory_space<vmem>>, vector<256x32xf32>
    tpu.vector_store %arg4[%c0_49, %c32_50], %204 {strides = array<i32>} : memref<256x128xf32, #tpu.memory_space<vmem>>, vector<256x32xf32>,
    %206 = vector.shape_cast %121 : vector<8x32xf32> to vector<8x32x1xf32>
    %207 = vector.broadcast %206 : vector<8x32x1xf32> to vector<8x32x32xf32>
    %208 = arith.mulf %207, %193 : vector<8x32x32xf32>
    %209 = vector.shape_cast %208 : vector<8x32x32xf32> to vector<256x32xf32>
    %c0_51 = arith.constant 0 : index
    %c64_52 = arith.constant 64 : index
    %210 = vector.load %arg4[%c0_51, %c64_52] : memref<256x128xf32, #tpu.memory_space<vmem>>, vector<256x32xf32>
    tpu.vector_store %arg4[%c0_51, %c64_52], %209 {strides = array<i32>} : memref<256x128xf32, #tpu.memory_space<vmem>>, vector<256x32xf32>,
    %cst_53 = arith.constant 0.000000e+00 : f32
    %211 = vector.broadcast %cst_53 : f32 to vector<256x32xf32>
    %c0_54 = arith.constant 0 : index
    %c96 = arith.constant 96 : index
    %212 = vector.load %arg4[%c0_54, %c96] : memref<256x128xf32, #tpu.memory_space<vmem>>, vector<256x32xf32>
    tpu.vector_store %arg4[%c0_54, %c96], %211 {strides = array<i32>} : memref<256x128xf32, #tpu.memory_space<vmem>>, vector<256x32xf32>,
    %c0_55 = arith.constant 0 : index
    %c0_56 = arith.constant 0 : index
    %213 = vector.load %arg4[%c0_55, %c0_56] : memref<256x128xf32, #tpu.memory_space<vmem>>, vector<256x128xf32>
    %c192 = arith.constant 192 : index
    %c0_57 = arith.constant 0 : index
    %214 = vector.load %arg2[%c192, %c0_57] : memref<416x128xf32, #tpu.memory_space<vmem>>, vector<128x32xf32>
    %cst_58 = arith.constant dense<0.000000e+00> : vector<256x32xf32>
    %215 = tpu.matmul %213, %214, %cst_58 {dimension_numbers = #tpu.dot_dimension_numbers<[1], [0], [0], [1], [0, 0, 1, 1], [], []>} : vector<256x128xf32>, vector<128x32xf32>, vector<256x32xf32> -> vector<256x32xf32>
    %216 = vector.shape_cast %215 : vector<256x32xf32> to vector<8x32x32xf32>
    %217 = vector.shape_cast %74 : vector<8x32xf32> to vector<8x32x1xf32>
    %c407 = arith.constant 407 : index
    %c0_59 = arith.constant 0 : index
    %218 = vector.load %arg2[%c407, %c0_59] : memref<416x128xf32, #tpu.memory_space<vmem>>, vector<1x32xf32>
    %219 = vector.shape_cast %218 : vector<1x32xf32> to vector<1x1x32xf32>
    %220 = vector.broadcast %217 : vector<8x32x1xf32> to vector<8x32x32xf32>
    %221 = vector.broadcast %219 : vector<1x1x32xf32> to vector<8x32x32xf32>
    %222 = arith.mulf %220, %221 : vector<8x32x32xf32>
    %223 = vector.shape_cast %85 : vector<8x32xf32> to vector<8x32x1xf32>
    %c408 = arith.constant 408 : index
    %c0_60 = arith.constant 0 : index
    %224 = vector.load %arg2[%c408, %c0_60] : memref<416x128xf32, #tpu.memory_space<vmem>>, vector<1x32xf32>
    %225 = vector.shape_cast %224 : vector<1x32xf32> to vector<1x1x32xf32>
    %226 = vector.broadcast %223 : vector<8x32x1xf32> to vector<8x32x32xf32>
    %227 = vector.broadcast %225 : vector<1x1x32xf32> to vector<8x32x32xf32>
    %228 = arith.mulf %226, %227 : vector<8x32x32xf32>
    %229 = arith.addf %222, %228 : vector<8x32x32xf32>
    %230 = vector.shape_cast %121 : vector<8x32xf32> to vector<8x32x1xf32>
    %c409 = arith.constant 409 : index
    %c0_61 = arith.constant 0 : index
    %231 = vector.load %arg2[%c409, %c0_61] : memref<416x128xf32, #tpu.memory_space<vmem>>, vector<1x32xf32>
    %232 = vector.shape_cast %231 : vector<1x32xf32> to vector<1x1x32xf32>
    %233 = vector.broadcast %230 : vector<8x32x1xf32> to vector<8x32x32xf32>
    %234 = vector.broadcast %232 : vector<1x1x32xf32> to vector<8x32x32xf32>
    %235 = arith.mulf %233, %234 : vector<8x32x32xf32>
    %236 = arith.addf %229, %235 : vector<8x32x32xf32>
    %cst_62 = arith.constant 2.000000e+00 : f32
    %237 = vector.broadcast %cst_62 : f32 to vector<8x32x32xf32>
    %238 = arith.mulf %237, %236 : vector<8x32x32xf32>
    %239 = arith.addf %216, %238 : vector<8x32x32xf32>
    %c96_63 = arith.constant 96 : index
    %c0_64 = arith.constant 0 : index
    %240 = vector.load %arg2[%c96_63, %c0_64] : memref<416x128xf32, #tpu.memory_space<vmem>>, vector<32x32xf32>
    %cst_65 = arith.constant dense<0.000000e+00> : vector<8x32xf32>
    %241 = tpu.matmul %49, %240, %cst_65 {dimension_numbers = #tpu.dot_dimension_numbers<[1], [0], [0], [1], [0, 0, 1, 1], [], []>} : vector<8x32xf32>, vector<32x32xf32>, vector<8x32xf32> -> vector<8x32xf32>
    %c128 = arith.constant 128 : index
    %c0_66 = arith.constant 0 : index
    %242 = vector.load %arg2[%c128, %c0_66] : memref<416x128xf32, #tpu.memory_space<vmem>>, vector<32x32xf32>
    %cst_67 = arith.constant dense<0.000000e+00> : vector<8x32xf32>
    %243 = tpu.matmul %50, %242, %cst_67 {dimension_numbers = #tpu.dot_dimension_numbers<[1], [0], [0], [1], [0, 0, 1, 1], [], []>} : vector<8x32xf32>, vector<32x32xf32>, vector<8x32xf32> -> vector<8x32xf32>
    %244 = arith.addf %241, %243 : vector<8x32xf32>
    %245 = tpu.transpose %34, [1, 0] : vector<32x32xf32> -> vector<32x32xf32>
    %cst_68 = arith.constant dense<0.000000e+00> : vector<8x32xf32>
    %246 = tpu.matmul %244, %245, %cst_68 {dimension_numbers = #tpu.dot_dimension_numbers<[1], [0], [0], [1], [0, 0, 1, 1], [], []>} : vector<8x32xf32>, vector<32x32xf32>, vector<8x32xf32> -> vector<8x32xf32>
    %247 = vector.shape_cast %244 : vector<8x32xf32> to vector<8x1x32xf32>
    %248 = vector.broadcast %247 : vector<8x1x32xf32> to vector<8x32x32xf32>
    %249 = arith.mulf %248, %239 : vector<8x32x32xf32>
    %cst_69 = arith.constant dense<0.000000e+00> : vector<8x32xf32>
    %250 = vector.multi_reduction <add>, %249, %cst_69 [2] : vector<8x32x32xf32> to vector<8x32xf32>
    %251 = arith.addf %246, %250 : vector<8x32xf32>
    %cst_70 = arith.constant 0.176776692 : f32
    %252 = vector.broadcast %cst_70 : f32 to vector<8x32xf32>
    %253 = arith.mulf %251, %252 : vector<8x32xf32>
    %cst_71 = arith.constant dense<0xFF800000> : vector<8xf32>
    %254 = vector.multi_reduction <maximumf>, %253, %cst_71 [1] : vector<8x32xf32> to vector<8xf32>
    %255 = vector.shape_cast %254 : vector<8xf32> to vector<8x1xf32>
    %256 = vector.broadcast %255 : vector<8x1xf32> to vector<8x32xf32>
    %257 = arith.subf %253, %256 : vector<8x32xf32>
    %258 = math.exp %257 : vector<8x32xf32>
    %259 = arith.mulf %258, %125 : vector<8x32xf32>
    %cst_72 = arith.constant dense<0.000000e+00> : vector<8xf32>
    %260 = vector.multi_reduction <add>, %259, %cst_72 [1] : vector<8x32xf32> to vector<8xf32>
    %261 = vector.shape_cast %260 : vector<8xf32> to vector<8x1xf32>
    %cst_73 = arith.constant 9.99999971E-10 : f32
    %262 = vector.broadcast %cst_73 : f32 to vector<8x1xf32>
    %263 = arith.maximumf %261, %262 : vector<8x1xf32>
    %264 = tpu.reciprocal %263 {approx = true} : vector<8x1xf32> -> vector<8x1xf32>
    %265 = vector.broadcast %264 : vector<8x1xf32> to vector<8x32xf32>
    %266 = arith.mulf %259, %265 : vector<8x32xf32>
    %cst_74 = arith.constant dense<0.000000e+00> : vector<8x32xf32>
    %267 = tpu.matmul %266, %34, %cst_74 {dimension_numbers = #tpu.dot_dimension_numbers<[1], [0], [0], [1], [0, 0, 1, 1], [], []>} : vector<8x32xf32>, vector<32x32xf32>, vector<8x32xf32> -> vector<8x32xf32>
    %268 = vector.shape_cast %266 : vector<8x32xf32> to vector<8x32x1xf32>
    %269 = vector.broadcast %268 : vector<8x32x1xf32> to vector<8x32x32xf32>
    %270 = arith.mulf %269, %239 : vector<8x32x32xf32>
    %cst_75 = arith.constant dense<0.000000e+00> : vector<8x32xf32>
    %271 = vector.multi_reduction <add>, %270, %cst_75 [1] : vector<8x32x32xf32> to vector<8x32xf32>
    %272 = arith.addf %267, %271 : vector<8x32xf32>
    %c160 = arith.constant 160 : index
    %c0_76 = arith.constant 0 : index
    %273 = vector.load %arg2[%c160, %c0_76] : memref<416x128xf32, #tpu.memory_space<vmem>>, vector<32x32xf32>
    %cst_77 = arith.constant dense<0.000000e+00> : vector<8x32xf32>
    %274 = tpu.matmul %272, %273, %cst_77 {dimension_numbers = #tpu.dot_dimension_numbers<[1], [0], [0], [1], [0, 0, 1, 1], [], []>} : vector<8x32xf32>, vector<32x32xf32>, vector<8x32xf32> -> vector<8x32xf32>
    %cst_78 = arith.constant dense<0.000000e+00> : vector<8xf32>
    %275 = vector.multi_reduction <add>, %74, %cst_78 [1] : vector<8x32xf32> to vector<8xf32>
    %276 = vector.shape_cast %275 : vector<8xf32> to vector<8x1xf32>
    %cst_79 = arith.constant dense<0.000000e+00> : vector<8xf32>
    %277 = vector.multi_reduction <add>, %85, %cst_79 [1] : vector<8x32xf32> to vector<8xf32>
    %278 = vector.shape_cast %277 : vector<8xf32> to vector<8x1xf32>
    %cst_80 = arith.constant dense<0.000000e+00> : vector<8xf32>
    %279 = vector.multi_reduction <add>, %121, %cst_80 [1] : vector<8x32xf32> to vector<8xf32>
    %280 = vector.shape_cast %279 : vector<8xf32> to vector<8x1xf32>
    %281 = arith.addf %276, %278 : vector<8x1xf32>
    %c352 = arith.constant 352 : index
    %c0_81 = arith.constant 0 : index
    %282 = vector.load %arg2[%c352, %c0_81] : memref<416x128xf32, #tpu.memory_space<vmem>>, vector<4x36xf32>
    %c320 = arith.constant 320 : index
    %c0_82 = arith.constant 0 : index
    %283 = vector.load %arg2[%c320, %c0_82] : memref<416x128xf32, #tpu.memory_space<vmem>>, vector<32x36xf32>
    %cst_83 = arith.constant dense<0.000000e+00> : vector<8x36xf32>
    %284 = tpu.matmul %274, %283, %cst_83 {dimension_numbers = #tpu.dot_dimension_numbers<[1], [0], [0], [1], [0, 0, 1, 1], [], []>} : vector<8x32xf32>, vector<32x36xf32>, vector<8x36xf32> -> vector<8x36xf32>
    %285 = vector.extract_strided_slice %282 {offsets = [0, 0], sizes = [1, 36], strides = [1, 1]} : vector<4x36xf32> to vector<1x36xf32>
    %286 = vector.broadcast %276 : vector<8x1xf32> to vector<8x36xf32>
    %287 = vector.broadcast %285 : vector<1x36xf32> to vector<8x36xf32>
    %288 = arith.mulf %286, %287 : vector<8x36xf32>
    %289 = arith.addf %284, %288 : vector<8x36xf32>
    %290 = vector.extract_strided_slice %282 {offsets = [1, 0], sizes = [1, 36], strides = [1, 1]} : vector<4x36xf32> to vector<1x36xf32>
    %291 = vector.broadcast %278 : vector<8x1xf32> to vector<8x36xf32>
    %292 = vector.broadcast %290 : vector<1x36xf32> to vector<8x36xf32>
    %293 = arith.mulf %291, %292 : vector<8x36xf32>
    %294 = arith.addf %289, %293 : vector<8x36xf32>
    %295 = vector.extract_strided_slice %282 {offsets = [2, 0], sizes = [1, 36], strides = [1, 1]} : vector<4x36xf32> to vector<1x36xf32>
    %296 = vector.broadcast %280 : vector<8x1xf32> to vector<8x36xf32>
    %297 = vector.broadcast %295 : vector<1x36xf32> to vector<8x36xf32>
    %298 = arith.mulf %296, %297 : vector<8x36xf32>
    %299 = arith.addf %294, %298 : vector<8x36xf32>
    %300 = vector.extract_strided_slice %282 {offsets = [3, 0], sizes = [1, 36], strides = [1, 1]} : vector<4x36xf32> to vector<1x36xf32>
    %301 = vector.broadcast %281 : vector<8x1xf32> to vector<8x36xf32>
    %302 = vector.broadcast %300 : vector<1x36xf32> to vector<8x36xf32>
    %303 = arith.mulf %301, %302 : vector<8x36xf32>
    %304 = arith.addf %299, %303 : vector<8x36xf32>
    %c410 = arith.constant 410 : index
    %c0_84 = arith.constant 0 : index
    %305 = vector.load %arg2[%c410, %c0_84] : memref<416x128xf32, #tpu.memory_space<vmem>>, vector<1x36xf32>
    %306 = vector.broadcast %305 : vector<1x36xf32> to vector<8x36xf32>
    %307 = arith.addf %304, %306 : vector<8x36xf32>
    %cst_85 = arith.constant 0.000000e+00 : f32
    %308 = vector.broadcast %cst_85 : f32 to vector<8x36xf32>
    %309 = arith.maximumf %307, %308 : vector<8x36xf32>
    %c360 = arith.constant 360 : index
    %c0_86 = arith.constant 0 : index
    %310 = vector.load %arg2[%c360, %c0_86] : memref<416x128xf32, #tpu.memory_space<vmem>>, vector<36x32xf32>
    %cst_87 = arith.constant dense<0.000000e+00> : vector<8x32xf32>
    %311 = tpu.matmul %309, %310, %cst_87 {dimension_numbers = #tpu.dot_dimension_numbers<[1], [0], [0], [1], [0, 0, 1, 1], [], []>} : vector<8x36xf32>, vector<36x32xf32>, vector<8x32xf32> -> vector<8x32xf32>
    %c411 = arith.constant 411 : index
    %c0_88 = arith.constant 0 : index
    %312 = vector.load %arg2[%c411, %c0_88] : memref<416x128xf32, #tpu.memory_space<vmem>>, vector<1x32xf32>
    %313 = vector.broadcast %312 : vector<1x32xf32> to vector<8x32xf32>
    %314 = arith.addf %311, %313 : vector<8x32xf32>
    %cst_89 = arith.constant 0.000000e+00 : f32
    %315 = vector.broadcast %cst_89 : f32 to vector<8x64xf32>
    %316 = tpu.concatenate %63, %314, %315 in 1 : vector<8x32xf32>, vector<8x32xf32>, vector<8x64xf32> -> vector<8x128xf32>
    %c0_90 = arith.constant 0 : index
    %c0_91 = arith.constant 0 : index
    %317 = vector.load %arg3[%c0_90, %c0_91] : memref<8x128xf32, #tpu.memory_space<vmem>>, vector<8x128xf32>
    tpu.vector_store %arg3[%c0_90, %c0_91], %316 {strides = array<i32>} : memref<8x128xf32, #tpu.memory_space<vmem>>, vector<8x128xf32>,
    return
  }
}

</mosaic_0001>

<llo_original>
// kernel: link_transformer_forward.1
$region0: #{link_transformer_forward.1}
  #allocation0 [shape = 'u32[]', space=smem, size = 0x4, offset = 0x4, fixed_abs, tag = 'smem constant byte address 0x4 - core index']
  #allocation1 [shape = 'u32[144,128]{1,0:T(1,128)}', space=vmem, size = 0x12000, scoped, tag = 'internal scratch']
  #allocation2 [shape = 'f32[256,128]{1,0:T(8,128)}', space=vmem, size = 0x20000, scoped, tag = 'scratch operand']
  %s0 = inlined_call_operand.vmem [shape: s32[16,1], index: 0, kind: input, shape index: {}]
  %s1 = inlined_call_operand.hbm [shape: f32[32,128], index: 1, kind: input, shape index: {}]
  %s2 = inlined_call_operand.hbm [shape: f32[416,128], index: 2, kind: input, shape index: {}]
  %s3 = inlined_call_operand.hbm [shape: f32[8,128], index: 3, kind: output, shape index: {}]
  %s4 = sld [smem:[#allocation0]]
  $region30: #{link_transformer_forward.1} parent=0
    _
  %s6 = ssub.s32 1, %s4
  %s7 = scalar_select 0, %s6, %s4
  $region1: #{link_transformer_forward.1} parent=0
    #allocation3 [shape = 'u8[16384]{0}', space=vmem, size = 0x4000, scoped, tag = 'input window, operand 1, single buffered']
    #allocation4 [shape = 's32[1]{0}', space=sflag, size = 0x4, scoped, tag = 'scoped memory for link_transformer_forward.1']
    #allocation5 [shape = 's32[1]{0}', space=sflag, size = 0x4, scoped, tag = 'scoped memory for link_transformer_forward.1']
    #allocation6 [shape = 'u8[212992]{0}', space=vmem, size = 0x34000, scoped, tag = 'input window, operand 2, single buffered']
    #allocation7 [shape = 's32[1]{0}', space=sflag, size = 0x4, scoped, tag = 'scoped memory for link_transformer_forward.1']
    #allocation8 [shape = 'u8[4096]{0}', space=vmem, size = 0x1000, scoped, tag = 'output window, operand 0, single buffered']
    %8 = vsyncpa [#allocation4], 0
    %9 = vsyncpa [#allocation7], 0
    %10 = vsyncpa [#allocation5], 0
    // Predicated region
    $region2: #{link_transformer_forward.1} parent=1 // pred_check
      _
    $region3: #{link_transformer_forward.1} parent=1 // pred_check_branch
      %12 = sbr.rel (0) target = $region5
    $region4: #{link_transformer_forward.1} parent=1 // pred_region
      _
    $region5: #{link_transformer_forward.1} parent=1 // pred_fallthru
      _
    // Predicated region
    $region6: #{link_transformer_forward.1} parent=1 // pred_check
      _
    $region7: #{link_transformer_forward.1} parent=1 // pred_check_branch
      %14 = sbr.rel (0) target = $region9
    $region8: #{link_transformer_forward.1} parent=1 // pred_region
      %s16 = ssub.s32 512, 512
      %17 = vsyncadd [#allocation4], %s16
      %s18 = sshll.u32 [#allocation3], 4
      %s19 = int_to_ptr.vmem [resolvable:$true] %s18
      %24 = dma.hbm_to_vmem [thread:$0]  %s1, 512, %s19, [#allocation4], 128, 128, 8
    $region9: #{link_transformer_forward.1} parent=1 // pred_fallthru
      _
    // Predicated region
    $region10: #{link_transformer_forward.1} parent=1 // pred_check
      _
    $region11: #{link_transformer_forward.1} parent=1 // pred_check_branch
      %26 = sbr.rel (0) target = $region13
    $region12: #{link_transformer_forward.1} parent=1 // pred_region
      %s28 = ssub.s32 6656, 6656
      %29 = vsyncadd [#allocation7], %s28
      %s30 = sshll.u32 [#allocation6], 4
      %s31 = int_to_ptr.vmem [resolvable:$true] %s30
      %36 = dma.hbm_to_vmem [thread:$0]  %s2, 6656, %s31, [#allocation7], 128, 128, 8
    $region13: #{link_transformer_forward.1} parent=1 // pred_fallthru
      _
    // Predicated region
    $region14: #{link_transformer_forward.1} parent=1 // pred_check
      _
    $region15: #{link_transformer_forward.1} parent=1 // pred_check_branch
      %38 = sbr.rel (0) target = $region17
    $region16: #{link_transformer_forward.1} parent=1 // pred_region
      %39 = dma.done [#allocation4], 512
    $region17: #{link_transformer_forward.1} parent=1 // pred_fallthru
      _
    // Predicated region
    $region18: #{link_transformer_forward.1} parent=1 // pred_check
      _
    $region19: #{link_transformer_forward.1} parent=1 // pred_check_branch
      %41 = sbr.rel (0) target = $region21
    $region20: #{link_transformer_forward.1} parent=1 // pred_region
      %42 = dma.done [#allocation7], 6656
    $region21: #{link_transformer_forward.1} parent=1 // pred_fallthru
      _
    %v43 = vld [vmem:[#allocation3] sm:$0xff]
    %v44 = vld [vmem:[#allocation3 + $0x8] sm:$0xff]
    %v45 = vld [vmem:[#allocation3 + $0x10] sm:$0xff]
    %v46 = vld [vmem:[#allocation3 + $0x18] sm:$0xff]
    %51 = vrot.lane.b32.xlu0 %v43, 32
    %v52 = vpop.permute.xlu0 %51
    %53 = vrot.lane.b32.xlu0 %v44, 32
    %v54 = vpop.permute.xlu0 %53
    %55 = vrot.lane.b32.xlu0 %v45, 32
    %v56 = vpop.permute.xlu0 %55
    %57 = vrot.lane.b32.xlu0 %v46, 32
    %v58 = vpop.permute.xlu0 %57
    %vm63 = vcmask 261120
    %v64 = vsel %vm63, %v43, 0
    %v66 = vsel %vm63, %v44, 0
    %v68 = vsel %vm63, %v45, 0
    %v70 = vsel %vm63, %v46, 0
    %72 = vmatprep.subr.mxu0 0.0
    %73 = vmatpush1.msra.mxu0 0.0
    %74 = vmatprep.subr.mxu0 0.0
    %75 = vmatpush1.msra.mxu0 0.0
    %76 = vmatprep.subr.mxu0 0.0
    %77 = vmatpush1.msra.mxu0 0.0
    %78 = vmatprep.subr.mxu0 0.0
    %79 = vmatpush1.msra.mxu0 0.0
    %80 = vmatprep.subr.mxu0 0.0
    %81 = vmatpush1.msra.mxu0 0.0
    %82 = vmatprep.subr.mxu0 0.0
    %83 = vmatpush1.msra.mxu0 0.0
    %84 = vmatprep.subr.mxu0 0.0
    %85 = vmatpush1.msra.mxu0 0.0
    %86 = vmatprep.subr.mxu0 0.0
    %87 = vmatpush1.msra.mxu0 0.0
    %88 = vmatprep.subr.mxu0 0.0
    %89 = vmatpush1.msra.mxu0 0.0
    %90 = vmatprep.subr.mxu0 0.0
    %91 = vmatpush1.msra.mxu0 0.0
    %92 = vmatprep.subr.mxu0 0.0
    %93 = vmatpush1.msra.mxu0 0.0
    %94 = vmatprep.subr.mxu0 0.0
    %95 = vmatpush1.msra.mxu0 0.0
    %96 = vmatprep.subr.mxu0 0.0
    %97 = vmatpush1.msra.mxu0 %v58
    %98 = vmatprep.subr.mxu0 0.0
    %99 = vmatpush1.msra.mxu0 %v56
    %100 = vmatprep.subr.mxu0 0.0
    %101 = vmatpush1.msra.mxu0 %v54
    %102 = vmatprep.subr.mxu0 0.0
    %103 = vmatpush1.msra.mxu0 %v52
    %104 = vmatprep.subr.mxu0 0.0
    %105 = vmatpush2.msra.mxu0 0.0
    %106 = vmatprep.subr.mxu0 0.0
    %107 = vmatpush2.msra.mxu0 0.0
    %108 = vmatprep.subr.mxu0 0.0
    %109 = vmatpush2.msra.mxu0 0.0
    %110 = vmatprep.subr.mxu0 0.0
    %111 = vmatpush2.msra.mxu0 0.0
    %112 = vmatprep.subr.mxu0 0.0
    %113 = vmatpush2.msra.mxu0 0.0
    %114 = vmatprep.subr.mxu0 0.0
    %115 = vmatpush2.msra.mxu0 0.0
    %116 = vmatprep.subr.mxu0 0.0
    %117 = vmatpush2.msra.mxu0 0.0
    %118 = vmatprep.subr.mxu0 0.0
    %119 = vmatpush2.msra.mxu0 0.0
    %120 = vmatprep.subr.mxu0 0.0
    %121 = vmatpush2.msra.mxu0 0.0
    %122 = vmatprep.subr.mxu0 0.0
    %123 = vmatpush2.msra.mxu0 0.0
    %124 = vmatprep.subr.mxu0 0.0
    %125 = vmatpush2.msra.mxu0 0.0
    %126 = vmatprep.subr.mxu0 0.0
    %127 = vmatpush2.msra.mxu0 0.0
    %128 = vmatprep.subr.mxu0 0.0
    %129 = vmatpush2.msra.mxu0 0.0
    %130 = vmatprep.subr.mxu0 0.0
    %131 = vmatpush2.msra.mxu0 0.0
    %132 = vmatprep.subr.mxu0 0.0
    %133 = vmatpush2.msra.mxu0 0.0
    %134 = vmatprep.subr.mxu0 0.0
    %135 = vmatpush2.msra.mxu0 0.0
    %136 = vmatprep.mubr.f32.mxu0 0.0
    %137 = vmatmul.mubr.f32.gmra.mxu0 %v64
    %v138 = vpop.f32.mrf.mxu0
    %v139 = vadd.f32 0.0, %v138
    %v140 = vpop.f32.mrf.mxu0
    %141 = vmatprep.mubr.f32.mxu0 0.0
    %142 = vmatmul.mubr.f32.gmra.mxu0 %v66
    %v143 = vpop.f32.mrf.mxu0
    %v144 = vadd.f32 0.0, %v143
    %v145 = vpop.f32.mrf.mxu0
    %146 = vmatprep.mubr.f32.mxu0 0.0
    %147 = vmatmul.mubr.f32.gmra.mxu0 %v68
    %v148 = vpop.f32.mrf.mxu0
    %v149 = vadd.f32 0.0, %v148
    %v150 = vpop.f32.mrf.mxu0
    %151 = vmatprep.mubr.f32.mxu0 0.0
    %152 = vmatmul.mubr.f32.gmra.mxu0 %v70
    %v153 = vpop.f32.mrf.mxu0
    %v154 = vadd.f32 0.0, %v153
    %v155 = vpop.f32.mrf.mxu0
    %156 = vdwg.mxu0
    %v157 = vld [vmem:[#allocation6] sm:$0xff]
    %v158 = vld [vmem:[#allocation6 + $0x8] sm:$0xff]
    %v159 = vld [vmem:[#allocation6 + $0x10] sm:$0xff]
    %v160 = vld [vmem:[#allocation6 + $0x18] sm:$0xff]
    %v161 = vld [vmem:[#allocation6 + $0x18c] sm:$0x1]
    %v162 = vlaneseq
    %v163 = vshrl.u32 %v162, 7
    %v164 = vsub.s32 0, %v163
    %v165 = vrot.slane %v161, %v164
    %v167 = vsel %vm63, %v139, 0
    %v170 = vsel %vm63, %v144, 0
    %v173 = vsel %vm63, %v149, 0
    %v176 = vsel %vm63, %v154, 0
    %178 = vmatprep.subr.mxu0 0.0
    %179 = vmatpush1.msra.mxu0 0.0
    %180 = vmatprep.subr.mxu0 0.0
    %181 = vmatpush1.msra.mxu0 0.0
    %182 = vmatprep.subr.mxu0 0.0
    %183 = vmatpush1.msra.mxu0 0.0
    %184 = vmatprep.subr.mxu0 0.0
    %185 = vmatpush1.msra.mxu0 0.0
    %186 = vmatprep.subr.mxu0 0.0
    %187 = vmatpush1.msra.mxu0 0.0
    %188 = vmatprep.subr.mxu0 0.0
    %189 = vmatpush1.msra.mxu0 0.0
    %190 = vmatprep.subr.mxu0 0.0
    %191 = vmatpush1.msra.mxu0 0.0
    %192 = vmatprep.subr.mxu0 0.0
    %193 = vmatpush1.msra.mxu0 0.0
    %194 = vmatprep.subr.mxu0 0.0
    %195 = vmatpush1.msra.mxu0 0.0
    %196 = vmatprep.subr.mxu0 0.0
    %197 = vmatpush1.msra.mxu0 0.0
    %198 = vmatprep.subr.mxu0 0.0
    %199 = vmatpush1.msra.mxu0 0.0
    %200 = vmatprep.subr.mxu0 0.0
    %201 = vmatpush1.msra.mxu0 0.0
    %202 = vmatprep.subr.mxu0 0.0
    %203 = vmatpush1.msra.mxu0 %v160
    %204 = vmatprep.subr.mxu0 0.0
    %205 = vmatpush1.msra.mxu0 %v159
    %206 = vmatprep.subr.mxu0 0.0
    %207 = vmatpush1.msra.mxu0 %v158
    %208 = vmatprep.subr.mxu0 0.0
    %209 = vmatpush1.msra.mxu0 %v157
    %210 = vmatprep.subr.mxu0 0.0
    %211 = vmatpush2.msra.mxu0 0.0
    %212 = vmatprep.subr.mxu0 0.0
    %213 = vmatpush2.msra.mxu0 0.0
    %214 = vmatprep.subr.mxu0 0.0
    %215 = vmatpush2.msra.mxu0 0.0
    %216 = vmatprep.subr.mxu0 0.0
    %217 = vmatpush2.msra.mxu0 0.0
    %218 = vmatprep.subr.mxu0 0.0
    %219 = vmatpush2.msra.mxu0 0.0
    %220 = vmatprep.subr.mxu0 0.0
    %221 = vmatpush2.msra.mxu0 0.0
    %222 = vmatprep.subr.mxu0 0.0
    %223 = vmatpush2.msra.mxu0 0.0
    %224 = vmatprep.subr.mxu0 0.0
    %225 = vmatpush2.msra.mxu0 0.0
    %226 = vmatprep.subr.mxu0 0.0
    %227 = vmatpush2.msra.mxu0 0.0
    %228 = vmatprep.subr.mxu0 0.0
    %229 = vmatpush2.msra.mxu0 0.0
    %230 = vmatprep.subr.mxu0 0.0
    %231 = vmatpush2.msra.mxu0 0.0
    %232 = vmatprep.subr.mxu0 0.0
    %233 = vmatpush2.msra.mxu0 0.0
    %234 = vmatprep.subr.mxu0 0.0
    %235 = vmatpush2.msra.mxu0 0.0
    %236 = vmatprep.subr.mxu0 0.0
    %237 = vmatpush2.msra.mxu0 0.0
    %238 = vmatprep.subr.mxu0 0.0
    %239 = vmatpush2.msra.mxu0 0.0
    %240 = vmatprep.subr.mxu0 0.0
    %241 = vmatpush2.msra.mxu0 0.0
    %242 = vmatprep.mubr.f32.mxu0 0.0
    %243 = vmatmul.mubr.f32.gmra.mxu0 %v167
    %v244 = vpop.f32.mrf.mxu0
    %v245 = vadd.f32 %v165, %v244
    %v246 = vpop.f32.mrf.mxu0
    %247 = vmatprep.mubr.f32.mxu0 0.0
    %248 = vmatmul.mubr.f32.gmra.mxu0 %v170
    %v249 = vpop.f32.mrf.mxu0
    %v250 = vadd.f32 %v165, %v249
    %v251 = vpop.f32.mrf.mxu0
    %252 = vmatprep.mubr.f32.mxu0 0.0
    %253 = vmatmul.mubr.f32.gmra.mxu0 %v173
    %v254 = vpop.f32.mrf.mxu0
    %v255 = vadd.f32 %v165, %v254
    %v256 = vpop.f32.mrf.mxu0
    %257 = vmatprep.mubr.f32.mxu0 0.0
    %258 = vmatmul.mubr.f32.gmra.mxu0 %v176
    %v259 = vpop.f32.mrf.mxu0
    %v260 = vadd.f32 %v165, %v259
    %v261 = vpop.f32.mrf.mxu0
    %262 = vdwg.mxu0
    %v263 = vmax.f32 %v245, 0.0
    %v264 = vmax.f32 %v250, 0.0
    %v265 = vmax.f32 %v255, 0.0
    %v266 = vmax.f32 %v260, 0.0
    %v267 = vsel %vm63, %v263, 0.0
    %268 = vadd.xlane.f32.xlu0 %v267
    %v269 = vpop.xlane.xlu0 %268
    %v270 = vsel %vm63, %v264, 0.0
    %271 = vadd.xlane.f32.xlu0 %v270
    %v272 = vpop.xlane.xlu0 %271
    %v273 = vsel %vm63, %v265, 0.0
    %274 = vadd.xlane.f32.xlu0 %v273
    %v275 = vpop.xlane.xlu0 %274
    %v276 = vsel %vm63, %v266, 0.0
    %277 = vadd.xlane.f32.xlu0 %v276
    %v278 = vpop.xlane.xlu0 %277
    %v279 = vrcp.pop 32.0
    %v280 = vmul.f32 %v269, %v279
    %v281 = vmul.f32 %v272, %v279
    %v282 = vmul.f32 %v275, %v279
    %v283 = vmul.f32 %v278, %v279
    %v284 = vsub.f32 %v263, %v280
    %v285 = vsub.f32 %v264, %v281
    %v286 = vsub.f32 %v265, %v282
    %v287 = vsub.f32 %v266, %v283
    %v288 = vmul.f32 %v284, %v284
    %v289 = vmul.f32 %v285, %v285
    %v290 = vmul.f32 %v286, %v286
    %v291 = vmul.f32 %v287, %v287
    %v292 = vsel %vm63, %v288, 0.0
    %293 = vadd.xlane.f32.xlu0 %v292
    %v294 = vpop.xlane.xlu0 %293
    %v295 = vsel %vm63, %v289, 0.0
    %296 = vadd.xlane.f32.xlu0 %v295
    %v297 = vpop.xlane.xlu0 %296
    %v298 = vsel %vm63, %v290, 0.0
    %299 = vadd.xlane.f32.xlu0 %v298
    %v300 = vpop.xlane.xlu0 %299
    %v301 = vsel %vm63, %v291, 0.0
    %302 = vadd.xlane.f32.xlu0 %v301
    %v303 = vpop.xlane.xlu0 %302
    %v304 = vmul.f32 %v294, %v279
    %v305 = vmul.f32 %v297, %v279
    %v306 = vmul.f32 %v300, %v279
    %v307 = vmul.f32 %v303, %v279
    %v308 = vadd.f32 %v304, 1e-05
    %v309 = vadd.f32 %v305, 1e-05
    %v310 = vadd.f32 %v306, 1e-05
    %v311 = vadd.f32 %v307, 1e-05
    %v312 = vrsqrt.pop %v308
    %v313 = vrsqrt.pop %v309
    %v314 = vrsqrt.pop %v310
    %v315 = vrsqrt.pop %v311
    %v316 = vmul.f32 %v284, %v312
    %v317 = vmul.f32 %v285, %v313
    %v318 = vmul.f32 %v286, %v314
    %v319 = vmul.f32 %v287, %v315
    %v320 = vld [vmem:[#allocation6 + $0x18d] sm:$0x1]
    %v321 = vlaneseq
    %v322 = vshrl.u32 %v321, 7
    %v323 = vsub.s32 0, %v322
    %v324 = vrot.slane %v320, %v323
    %v325 = vmul.f32 %v316, %v324
    %v326 = vmul.f32 %v317, %v324
    %v327 = vmul.f32 %v318, %v324
    %v328 = vmul.f32 %v319, %v324
    %v329 = vld [vmem:[#allocation6 + $0x18e] sm:$0x1]
    %v330 = vlaneseq
    %v331 = vshrl.u32 %v330, 7
    %v332 = vsub.s32 0, %v331
    %v333 = vrot.slane %v329, %v332
    %v334 = vadd.f32 %v325, %v333
    %v335 = vadd.f32 %v326, %v333
    %v336 = vadd.f32 %v327, %v333
    %v337 = vadd.f32 %v328, %v333
    %v338 = vlaneseq
    %v339 = vand.u32 %v338, 127
    %v340 = vld [vmem:[%s0] sm:$0xff]
    %v341 = vld [vmem:[%s0 + $0x8] sm:$0xff]
    %342 = vset.pattern.permute.xlu0 0
    %343 = vperm.xlu0 %342, %v340
    %v344 = vpop.permute.xlu0 %343
    %345 = vset.pattern.permute.xlu0 0
    %346 = vperm.xlu0 %345, %v341
    %v347 = vpop.permute.xlu0 %346
    %vm348 = vcmp.eq.s32.totalorder %v339, %v344
    %vm349 = vcmp.eq.s32.totalorder %v339, %v347
    %v350 = vsel %vm348, 1, 0
    %v351 = vsel %vm349, 1, 0
    %v352 = vcvt.s32.f32 %v350
    %v353 = vcvt.s32.f32 %v351
    %v355 = vsel %vm63, %v352, 0
    %v358 = vsel %vm63, %v353, 0
    %360 = vmatprep.subr.mxu0 0.0
    %361 = vmatpush1.msra.mxu0 0.0
    %362 = vmatprep.subr.mxu0 0.0
    %363 = vmatpush1.msra.mxu0 0.0
    %364 = vmatprep.subr.mxu0 0.0
    %365 = vmatpush1.msra.mxu0 0.0
    %366 = vmatprep.subr.mxu0 0.0
    %367 = vmatpush1.msra.mxu0 0.0
    %368 = vmatprep.subr.mxu0 0.0
    %369 = vmatpush1.msra.mxu0 0.0
    %370 = vmatprep.subr.mxu0 0.0
    %371 = vmatpush1.msra.mxu0 0.0
    %372 = vmatprep.subr.mxu0 0.0
    %373 = vmatpush1.msra.mxu0 0.0
    %374 = vmatprep.subr.mxu0 0.0
    %375 = vmatpush1.msra.mxu0 0.0
    %376 = vmatprep.subr.mxu0 0.0
    %377 = vmatpush1.msra.mxu0 0.0
    %378 = vmatprep.subr.mxu0 0.0
    %379 = vmatpush1.msra.mxu0 0.0
    %380 = vmatprep.subr.mxu0 0.0
    %381 = vmatpush1.msra.mxu0 0.0
    %382 = vmatprep.subr.mxu0 0.0
    %383 = vmatpush1.msra.mxu0 0.0
    %384 = vmatprep.subr.mxu0 0.0
    %385 = vmatpush1.msra.mxu0 %v46
    %386 = vmatprep.subr.mxu0 0.0
    %387 = vmatpush1.msra.mxu0 %v45
    %388 = vmatprep.subr.mxu0 0.0
    %389 = vmatpush1.msra.mxu0 %v44
    %390 = vmatprep.subr.mxu0 0.0
    %391 = vmatpush1.msra.mxu0 %v43
    %392 = vmatprep.subr.mxu0 0.0
    %393 = vmatpush2.msra.mxu0 0.0
    %394 = vmatprep.subr.mxu0 0.0
    %395 = vmatpush2.msra.mxu0 0.0
    %396 = vmatprep.subr.mxu0 0.0
    %397 = vmatpush2.msra.mxu0 0.0
    %398 = vmatprep.subr.mxu0 0.0
    %399 = vmatpush2.msra.mxu0 0.0
    %400 = vmatprep.subr.mxu0 0.0
    %401 = vmatpush2.msra.mxu0 0.0
    %402 = vmatprep.subr.mxu0 0.0
    %403 = vmatpush2.msra.mxu0 0.0
    %404 = vmatprep.subr.mxu0 0.0
    %405 = vmatpush2.msra.mxu0 0.0
    %406 = vmatprep.subr.mxu0 0.0
    %407 = vmatpush2.msra.mxu0 0.0
    %408 = vmatprep.subr.mxu0 0.0
    %409 = vmatpush2.msra.mxu0 0.0
    %410 = vmatprep.subr.mxu0 0.0
    %411 = vmatpush2.msra.mxu0 0.0
    %412 = vmatprep.subr.mxu0 0.0
    %413 = vmatpush2.msra.mxu0 0.0
    %414 = vmatprep.subr.mxu0 0.0
    %415 = vmatpush2.msra.mxu0 0.0
    %416 = vmatprep.subr.mxu0 0.0
    %417 = vmatpush2.msra.mxu0 0.0
    %418 = vmatprep.subr.mxu0 0.0
    %419 = vmatpush2.msra.mxu0 0.0
    %420 = vmatprep.subr.mxu0 0.0
    %421 = vmatpush2.msra.mxu0 0.0
    %422 = vmatprep.subr.mxu0 0.0
    %423 = vmatpush2.msra.mxu0 0.0
    %424 = vmatprep.mubr.f32.mxu0 0.0
    %425 = vmatmul.mubr.f32.gmra.mxu0 %v355
    %v426 = vpop.f32.mrf.mxu0
    %v427 = vadd.f32 0.0, %v426
    %v428 = vpop.f32.mrf.mxu0
    %429 = vmatprep.mubr.f32.mxu0 0.0
    %430 = vmatmul.mubr.f32.gmra.mxu0 %v358
    %v431 = vpop.f32.mrf.mxu0
    %v432 = vadd.f32 0.0, %v431
    %v433 = vpop.f32.mrf.mxu0
    %434 = vdwg.mxu0
    %435 = vmatprep.subr.mxu0 0.0
    %436 = vmatpush1.msra.mxu0 0.0
    %437 = vmatprep.subr.mxu0 0.0
    %438 = vmatpush1.msra.mxu0 0.0
    %439 = vmatprep.subr.mxu0 0.0
    %440 = vmatpush1.msra.mxu0 0.0
    %441 = vmatprep.subr.mxu0 0.0
    %442 = vmatpush1.msra.mxu0 0.0
    %443 = vmatprep.subr.mxu0 0.0
    %444 = vmatpush1.msra.mxu0 0.0
    %445 = vmatprep.subr.mxu0 0.0
    %446 = vmatpush1.msra.mxu0 0.0
    %447 = vmatprep.subr.mxu0 0.0
    %448 = vmatpush1.msra.mxu0 0.0
    %449 = vmatprep.subr.mxu0 0.0
    %450 = vmatpush1.msra.mxu0 0.0
    %451 = vmatprep.subr.mxu0 0.0
    %452 = vmatpush1.msra.mxu0 0.0
    %453 = vmatprep.subr.mxu0 0.0
    %454 = vmatpush1.msra.mxu0 0.0
    %455 = vmatprep.subr.mxu0 0.0
    %456 = vmatpush1.msra.mxu0 0.0
    %457 = vmatprep.subr.mxu0 0.0
    %458 = vmatpush1.msra.mxu0 0.0
    %459 = vmatprep.subr.mxu0 0.0
    %460 = vmatpush1.msra.mxu0 %v337
    %461 = vmatprep.subr.mxu0 0.0
    %462 = vmatpush1.msra.mxu0 %v336
    %463 = vmatprep.subr.mxu0 0.0
    %464 = vmatpush1.msra.mxu0 %v335
    %465 = vmatprep.subr.mxu0 0.0
    %466 = vmatpush1.msra.mxu0 %v334
    %467 = vmatprep.subr.mxu0 0.0
    %468 = vmatpush2.msra.mxu0 0.0
    %469 = vmatprep.subr.mxu0 0.0
    %470 = vmatpush2.msra.mxu0 0.0
    %471 = vmatprep.subr.mxu0 0.0
    %472 = vmatpush2.msra.mxu0 0.0
    %473 = vmatprep.subr.mxu0 0.0
    %474 = vmatpush2.msra.mxu0 0.0
    %475 = vmatprep.subr.mxu0 0.0
    %476 = vmatpush2.msra.mxu0 0.0
    %477 = vmatprep.subr.mxu0 0.0
    %478 = vmatpush2.msra.mxu0 0.0
    %479 = vmatprep.subr.mxu0 0.0
    %480 = vmatpush2.msra.mxu0 0.0
    %481 = vmatprep.subr.mxu0 0.0
    %482 = vmatpush2.msra.mxu0 0.0
    %483 = vmatprep.subr.mxu0 0.0
    %484 = vmatpush2.msra.mxu0 0.0
    %485 = vmatprep.subr.mxu0 0.0
    %486 = vmatpush2.msra.mxu0 0.0
    %487 = vmatprep.subr.mxu0 0.0
    %488 = vmatpush2.msra.mxu0 0.0
    %489 = vmatprep.subr.mxu0 0.0
    %490 = vmatpush2.msra.mxu0 0.0
    %491 = vmatprep.subr.mxu0 0.0
    %492 = vmatpush2.msra.mxu0 0.0
    %493 = vmatprep.subr.mxu0 0.0
    %494 = vmatpush2.msra.mxu0 0.0
    %495 = vmatprep.subr.mxu0 0.0
    %496 = vmatpush2.msra.mxu0 0.0
    %497 = vmatprep.subr.mxu0 0.0
    %498 = vmatpush2.msra.mxu0 0.0
    %499 = vmatprep.mubr.f32.mxu0 0.0
    %500 = vmatmul.mubr.f32.gmra.mxu0 %v355
    %v501 = vpop.f32.mrf.mxu0
    %v502 = vadd.f32 0.0, %v501
    %v503 = vpop.f32.mrf.mxu0
    %504 = vmatprep.mubr.f32.mxu0 0.0
    %505 = vmatmul.mubr.f32.gmra.mxu0 %v358
    %v506 = vpop.f32.mrf.mxu0
    %v507 = vadd.f32 0.0, %v506
    %v508 = vpop.f32.mrf.mxu0
    %509 = vdwg.mxu0
    %v510 = vmul.f32 %v502, %v507
    %v511 = vld [vmem:[#allocation6 + $0x20] sm:$0xff]
    %v512 = vld [vmem:[#allocation6 + $0x28] sm:$0xff]
    %v513 = vld [vmem:[#allocation6 + $0x30] sm:$0xff]
    %v514 = vld [vmem:[#allocation6 + $0x38] sm:$0xff]
    %v515 = vld [vmem:[#allocation6 + $0x18f] sm:$0x1]
    %v516 = vlaneseq
    %v517 = vshrl.u32 %v516, 7
    %v518 = vsub.s32 0, %v517
    %v519 = vrot.slane %v515, %v518
    %v521 = vsel %vm63, %v510, 0
    %523 = vmatprep.subr.mxu0 0.0
    %524 = vmatpush1.msra.mxu0 0.0
    %525 = vmatprep.subr.mxu0 0.0
    %526 = vmatpush1.msra.mxu0 0.0
    %527 = vmatprep.subr.mxu0 0.0
    %528 = vmatpush1.msra.mxu0 0.0
    %529 = vmatprep.subr.mxu0 0.0
    %530 = vmatpush1.msra.mxu0 0.0
    %531 = vmatprep.subr.mxu0 0.0
    %532 = vmatpush1.msra.mxu0 0.0
    %533 = vmatprep.subr.mxu0 0.0
    %534 = vmatpush1.msra.mxu0 0.0
    %535 = vmatprep.subr.mxu0 0.0
    %536 = vmatpush1.msra.mxu0 0.0
    %537 = vmatprep.subr.mxu0 0.0
    %538 = vmatpush1.msra.mxu0 0.0
    %539 = vmatprep.subr.mxu0 0.0
    %540 = vmatpush1.msra.mxu0 0.0
    %541 = vmatprep.subr.mxu0 0.0
    %542 = vmatpush1.msra.mxu0 0.0
    %543 = vmatprep.subr.mxu0 0.0
    %544 = vmatpush1.msra.mxu0 0.0
    %545 = vmatprep.subr.mxu0 0.0
    %546 = vmatpush1.msra.mxu0 0.0
    %547 = vmatprep.subr.mxu0 0.0
    %548 = vmatpush1.msra.mxu0 %v514
    %549 = vmatprep.subr.mxu0 0.0
    %550 = vmatpush1.msra.mxu0 %v513
    %551 = vmatprep.subr.mxu0 0.0
    %552 = vmatpush1.msra.mxu0 %v512
    %553 = vmatprep.subr.mxu0 0.0
    %554 = vmatpush1.msra.mxu0 %v511
    %555 = vmatprep.subr.mxu0 0.0
    %556 = vmatpush2.msra.mxu0 0.0
    %557 = vmatprep.subr.mxu0 0.0
    %558 = vmatpush2.msra.mxu0 0.0
    %559 = vmatprep.subr.mxu0 0.0
    %560 = vmatpush2.msra.mxu0 0.0
    %561 = vmatprep.subr.mxu0 0.0
    %562 = vmatpush2.msra.mxu0 0.0
    %563 = vmatprep.subr.mxu0 0.0
    %564 = vmatpush2.msra.mxu0 0.0
    %565 = vmatprep.subr.mxu0 0.0
    %566 = vmatpush2.msra.mxu0 0.0
    %567 = vmatprep.subr.mxu0 0.0
    %568 = vmatpush2.msra.mxu0 0.0
    %569 = vmatprep.subr.mxu0 0.0
    %570 = vmatpush2.msra.mxu0 0.0
    %571 = vmatprep.subr.mxu0 0.0
    %572 = vmatpush2.msra.mxu0 0.0
    %573 = vmatprep.subr.mxu0 0.0
    %574 = vmatpush2.msra.mxu0 0.0
    %575 = vmatprep.subr.mxu0 0.0
    %576 = vmatpush2.msra.mxu0 0.0
    %577 = vmatprep.subr.mxu0 0.0
    %578 = vmatpush2.msra.mxu0 0.0
    %579 = vmatprep.subr.mxu0 0.0
    %580 = vmatpush2.msra.mxu0 0.0
    %581 = vmatprep.subr.mxu0 0.0
    %582 = vmatpush2.msra.mxu0 0.0
    %583 = vmatprep.subr.mxu0 0.0
    %584 = vmatpush2.msra.mxu0 0.0
    %585 = vmatprep.subr.mxu0 0.0
    %586 = vmatpush2.msra.mxu0 0.0
    %587 = vmatprep.mubr.f32.mxu0 0.0
    %588 = vmatmul.mubr.f32.gmra.mxu0 %v521
    %v589 = vpop.f32.mrf.mxu0
    %v590 = vadd.f32 %v519, %v589
    %v591 = vpop.f32.mrf.mxu0
    %592 = vdwg.mxu0
    %v593 = vmax.f32 %v590, 0.0
    %v594 = vld [vmem:[#allocation6 + $0x40] sm:$0xff]
    %v595 = vld [vmem:[#allocation6 + $0x48] sm:$0xff]
    %v596 = vld [vmem:[#allocation6 + $0x50] sm:$0xff]
    %v597 = vld [vmem:[#allocation6 + $0x58] sm:$0xff]
    %v598 = vld [vmem:[#allocation6 + $0x190] sm:$0x1]
    %v599 = vlaneseq
    %v600 = vshrl.u32 %v599, 7
    %v601 = vsub.s32 0, %v600
    %v602 = vrot.slane %v598, %v601
    %v604 = vsel %vm63, %v593, 0
    %606 = vmatprep.subr.mxu0 0.0
    %607 = vmatpush1.msra.mxu0 0.0
    %608 = vmatprep.subr.mxu0 0.0
    %609 = vmatpush1.msra.mxu0 0.0
    %610 = vmatprep.subr.mxu0 0.0
    %611 = vmatpush1.msra.mxu0 0.0
    %612 = vmatprep.subr.mxu0 0.0
    %613 = vmatpush1.msra.mxu0 0.0
    %614 = vmatprep.subr.mxu0 0.0
    %615 = vmatpush1.msra.mxu0 0.0
    %616 = vmatprep.subr.mxu0 0.0
    %617 = vmatpush1.msra.mxu0 0.0
    %618 = vmatprep.subr.mxu0 0.0
    %619 = vmatpush1.msra.mxu0 0.0
    %620 = vmatprep.subr.mxu0 0.0
    %621 = vmatpush1.msra.mxu0 0.0
    %622 = vmatprep.subr.mxu0 0.0
    %623 = vmatpush1.msra.mxu0 0.0
    %624 = vmatprep.subr.mxu0 0.0
    %625 = vmatpush1.msra.mxu0 0.0
    %626 = vmatprep.subr.mxu0 0.0
    %627 = vmatpush1.msra.mxu0 0.0
    %628 = vmatprep.subr.mxu0 0.0
    %629 = vmatpush1.msra.mxu0 0.0
    %630 = vmatprep.subr.mxu0 0.0
    %631 = vmatpush1.msra.mxu0 %v597
    %632 = vmatprep.subr.mxu0 0.0
    %633 = vmatpush1.msra.mxu0 %v596
    %634 = vmatprep.subr.mxu0 0.0
    %635 = vmatpush1.msra.mxu0 %v595
    %636 = vmatprep.subr.mxu0 0.0
    %637 = vmatpush1.msra.mxu0 %v594
    %638 = vmatprep.subr.mxu0 0.0
    %639 = vmatpush2.msra.mxu0 0.0
    %640 = vmatprep.subr.mxu0 0.0
    %641 = vmatpush2.msra.mxu0 0.0
    %642 = vmatprep.subr.mxu0 0.0
    %643 = vmatpush2.msra.mxu0 0.0
    %644 = vmatprep.subr.mxu0 0.0
    %645 = vmatpush2.msra.mxu0 0.0
    %646 = vmatprep.subr.mxu0 0.0
    %647 = vmatpush2.msra.mxu0 0.0
    %648 = vmatprep.subr.mxu0 0.0
    %649 = vmatpush2.msra.mxu0 0.0
    %650 = vmatprep.subr.mxu0 0.0
    %651 = vmatpush2.msra.mxu0 0.0
    %652 = vmatprep.subr.mxu0 0.0
    %653 = vmatpush2.msra.mxu0 0.0
    %654 = vmatprep.subr.mxu0 0.0
    %655 = vmatpush2.msra.mxu0 0.0
    %656 = vmatprep.subr.mxu0 0.0
    %657 = vmatpush2.msra.mxu0 0.0
    %658 = vmatprep.subr.mxu0 0.0
    %659 = vmatpush2.msra.mxu0 0.0
    %660 = vmatprep.subr.mxu0 0.0
    %661 = vmatpush2.msra.mxu0 0.0
    %662 = vmatprep.subr.mxu0 0.0
    %663 = vmatpush2.msra.mxu0 0.0
    %664 = vmatprep.subr.mxu0 0.0
    %665 = vmatpush2.msra.mxu0 0.0
    %666 = vmatprep.subr.mxu0 0.0
    %667 = vmatpush2.msra.mxu0 0.0
    %668 = vmatprep.subr.mxu0 0.0
    %669 = vmatpush2.msra.mxu0 0.0
    %670 = vmatprep.mubr.f32.mxu0 0.0
    %671 = vmatmul.mubr.f32.gmra.mxu0 %v604
    %v672 = vpop.f32.mrf.mxu0
    %v673 = vadd.f32 %v602, %v672
    %v674 = vpop.f32.mrf.mxu0
    %675 = vdwg.mxu0
    %v676 = vmul.f32 %v427, %v432
    %vm677 = vcmp.gt.f32.partialorder %v676, 0.0
    %vm678 = vcmp.ge.f32.partialorder %v427, 0.01
    %v679 = vsel %vm678, 1, 0
    %680 = vrot.lane.b32.xlu0 %v679, 96
    %v681 = vpop.permute.xlu0 %680
    %vm682 = vcmp.ne.s32.totalorder %v681, 0
    %vm683 = vmand %vm677, %vm682
    %vm684 = vcmp.ge.f32.partialorder %v432, 0.01
    %v685 = vsel %vm684, 1, 0
    %686 = vrot.lane.b32.xlu0 %v685, 96
    %v687 = vpop.permute.xlu0 %686
    %vm688 = vcmp.ne.s32.totalorder %v687, 0
    %vm689 = vmand %vm683, %vm688
    %v690 = vsel %vm689, 1, 0
    %v691 = vcvt.s32.f32 %v690
    %v692 = vadd.f32 %v427, %v432
    %vm693 = vcmp.eq.f32.partialorder %v692, 1.0
    %vm694 = vmand %vm693, %vm682
    %vm695 = vmand %vm694, %vm688
    %v696 = vsel %vm695, 1, 0
    %v697 = vcvt.s32.f32 %v696
    %vm698 = vcmp.gt.f32.partialorder %v427, 0.0
    %vm699 = vcmp.gt.f32.partialorder %v432, 0.0
    %vm700 = vmand %vm698, %vm699
    %v701 = vsel %vm700, 1, 0
    %v702 = vcvt.s32.f32 %v701
    %704 = vrot.lane.b32.xlu0 %v702, 64
    %v705 = vpop.permute.xlu0 %704
    %v707 = vsel %vm63, %v705, 0.0
    %708 = vadd.xlane.f32.xlu0 %v707
    %v709 = vpop.xlane.xlu0 %708
    %v710 = vrot.slane %v709, 4
    %v711 = vadd.f32 %v709, %v710
    %v712 = vrot.slane %v711, 2
    %v713 = vadd.f32 %v711, %v712
    %v714 = vrot.slane %v713, 1
    %v715 = vadd.f32 %v713, %v714
    %s716 = vtos %v715
    %v717 = vstv %s716
    %v718 = vmax.f32 %v717, 1.0
    %v719 = vmul.f32 %v427, %v702
    %721 = vrot.lane.b32.xlu0 %v719, 64
    %v722 = vpop.permute.xlu0 %721
    %v724 = vsel %vm63, %v722, 0.0
    %725 = vadd.xlane.f32.xlu0 %v724
    %v726 = vpop.xlane.xlu0 %725
    %v727 = vrot.slane %v726, 4
    %v728 = vadd.f32 %v726, %v727
    %v729 = vrot.slane %v728, 2
    %v730 = vadd.f32 %v728, %v729
    %v731 = vrot.slane %v730, 1
    %v732 = vadd.f32 %v730, %v731
    %s733 = vtos %v732
    %v734 = vstv %s733
    %v735 = vrcp.pop %v718
    %v736 = vmul.f32 %v734, %v735
    %v737 = vmul.f32 %v432, %v702
    %739 = vrot.lane.b32.xlu0 %v737, 64
    %v740 = vpop.permute.xlu0 %739
    %v742 = vsel %vm63, %v740, 0.0
    %743 = vadd.xlane.f32.xlu0 %v742
    %v744 = vpop.xlane.xlu0 %743
    %v745 = vrot.slane %v744, 4
    %v746 = vadd.f32 %v744, %v745
    %v747 = vrot.slane %v746, 2
    %v748 = vadd.f32 %v746, %v747
    %v749 = vrot.slane %v748, 1
    %v750 = vadd.f32 %v748, %v749
    %s751 = vtos %v750
    %v752 = vstv %s751
    %v753 = vmul.f32 %v752, %v735
    %vm754 = vcmp.le.f32.partialorder %v427, %v736
    %vm755 = vmand %vm700, %vm754
    %vm756 = vcmp.le.f32.partialorder %v432, %v753
    %vm757 = vmand %vm755, %vm756
    %v758 = vsel %vm757, 1, 0
    %v759 = vcvt.s32.f32 %v758
    %v760 = vadd.f32 %v691, %v697
    %762 = vrot.lane.b32.xlu0 %v759, 64
    %v763 = vpop.permute.xlu0 %762
    %v765 = vadd.f32 %v760, %v763
    %v766 = vmin.f32 %v765, 1.0
    %v767 = vlaneseq
    %v768 = vshrl.u32 %v767, 7
    %v769 = vsub.s32 0, %v768
    %v770 = vrot.slane %v427, %v769
    %s772 = sor.u32 256, 32
    %773 = vbcast.lane.b32.xlu0 %v770, %s772
    %v774 = vpop.permute.xlu0 %773
    %s776 = sor.u32 256, 40
    %777 = vbcast.lane.b32.xlu0 %v770, %s776
    %v778 = vpop.permute.xlu0 %777
    %s780 = sor.u32 256, 48
    %781 = vbcast.lane.b32.xlu0 %v770, %s780
    %v782 = vpop.permute.xlu0 %781
    %s784 = sor.u32 256, 56
    %785 = vbcast.lane.b32.xlu0 %v770, %s784
    %v786 = vpop.permute.xlu0 %785
    %v787 = vlaneseq
    %v788 = vshrl.u32 %v787, 7
    %v789 = vsub.s32 1, %v788
    %v790 = vrot.slane %v427, %v789
    %s792 = sor.u32 256, 32
    %793 = vbcast.lane.b32.xlu0 %v790, %s792
    %v794 = vpop.permute.xlu0 %793
    %s796 = sor.u32 256, 40
    %797 = vbcast.lane.b32.xlu0 %v790, %s796
    %v798 = vpop.permute.xlu0 %797
    %s800 = sor.u32 256, 48
    %801 = vbcast.lane.b32.xlu0 %v790, %s800
    %v802 = vpop.permute.xlu0 %801
    %s804 = sor.u32 256, 56
    %805 = vbcast.lane.b32.xlu0 %v790, %s804
    %v806 = vpop.permute.xlu0 %805
    %v807 = vlaneseq
    %v808 = vshrl.u32 %v807, 7
    %v809 = vsub.s32 2, %v808
    %v810 = vrot.slane %v427, %v809
    %s812 = sor.u32 256, 32
    %813 = vbcast.lane.b32.xlu0 %v810, %s812
    %v814 = vpop.permute.xlu0 %813
    %s816 = sor.u32 256, 40
    %817 = vbcast.lane.b32.xlu0 %v810, %s816
    %v818 = vpop.permute.xlu0 %817
    %s820 = sor.u32 256, 48
    %821 = vbcast.lane.b32.xlu0 %v810, %s820
    %v822 = vpop.permute.xlu0 %821
    %s824 = sor.u32 256, 56
    %825 = vbcast.lane.b32.xlu0 %v810, %s824
    %v826 = vpop.permute.xlu0 %825
    %v827 = vlaneseq
    %v828 = vshrl.u32 %v827, 7
    %v829 = vsub.s32 3, %v828
    %v830 = vrot.slane %v427, %v829
    %s832 = sor.u32 256, 32
    %833 = vbcast.lane.b32.xlu0 %v830, %s832
    %v834 = vpop.permute.xlu0 %833
    %s836 = sor.u32 256, 40
    %837 = vbcast.lane.b32.xlu0 %v830, %s836
    %v838 = vpop.permute.xlu0 %837
    %s840 = sor.u32 256, 48
    %841 = vbcast.lane.b32.xlu0 %v830, %s840
    %v842 = vpop.permute.xlu0 %841
    %s844 = sor.u32 256, 56
    %845 = vbcast.lane.b32.xlu0 %v830, %s844
    %v846 = vpop.permute.xlu0 %845
    %v847 = vlaneseq
    %v848 = vshrl.u32 %v847, 7
    %v849 = vsub.s32 4, %v848
    %v850 = vrot.slane %v427, %v849
    %s852 = sor.u32 256, 32
    %853 = vbcast.lane.b32.xlu0 %v850, %s852
    %v854 = vpop.permute.xlu0 %853
    %s856 = sor.u32 256, 40
    %857 = vbcast.lane.b32.xlu0 %v850, %s856
    %v858 = vpop.permute.xlu0 %857
    %s860 = sor.u32 256, 48
    %861 = vbcast.lane.b32.xlu0 %v850, %s860
    %v862 = vpop.permute.xlu0 %861
    %s864 = sor.u32 256, 56
    %865 = vbcast.lane.b32.xlu0 %v850, %s864
    %v866 = vpop.permute.xlu0 %865
    %v867 = vlaneseq
    %v868 = vshrl.u32 %v867, 7
    %v869 = vsub.s32 5, %v868
    %v870 = vrot.slane %v427, %v869
    %s872 = sor.u32 256, 32
    %873 = vbcast.lane.b32.xlu0 %v870, %s872
    %v874 = vpop.permute.xlu0 %873
    %s876 = sor.u32 256, 40
    %877 = vbcast.lane.b32.xlu0 %v870, %s876
    %v878 = vpop.permute.xlu0 %877
    %s880 = sor.u32 256, 48
    %881 = vbcast.lane.b32.xlu0 %v870, %s880
    %v882 = vpop.permute.xlu0 %881
    %s884 = sor.u32 256, 56
    %885 = vbcast.lane.b32.xlu0 %v870, %s884
    %v886 = vpop.permute.xlu0 %885
    %v887 = vlaneseq
    %v888 = vshrl.u32 %v887, 7
    %v889 = vsub.s32 6, %v888
    %v890 = vrot.slane %v427, %v889
    %s892 = sor.u32 256, 32
    %893 = vbcast.lane.b32.xlu0 %v890, %s892
    %v894 = vpop.permute.xlu0 %893
    %s896 = sor.u32 256, 40
    %897 = vbcast.lane.b32.xlu0 %v890, %s896
    %v898 = vpop.permute.xlu0 %897
    %s900 = sor.u32 256, 48
    %901 = vbcast.lane.b32.xlu0 %v890, %s900
    %v902 = vpop.permute.xlu0 %901
    %s904 = sor.u32 256, 56
    %905 = vbcast.lane.b32.xlu0 %v890, %s904
    %v906 = vpop.permute.xlu0 %905
    %v907 = vlaneseq
    %v908 = vshrl.u32 %v907, 7
    %v909 = vsub.s32 7, %v908
    %v910 = vrot.slane %v427, %v909
    %s912 = sor.u32 256, 32
    %913 = vbcast.lane.b32.xlu0 %v910, %s912
    %v914 = vpop.permute.xlu0 %913
    %s916 = sor.u32 256, 40
    %917 = vbcast.lane.b32.xlu0 %v910, %s916
    %v918 = vpop.permute.xlu0 %917
    %s920 = sor.u32 256, 48
    %921 = vbcast.lane.b32.xlu0 %v910, %s920
    %v922 = vpop.permute.xlu0 %921
    %s924 = sor.u32 256, 56
    %925 = vbcast.lane.b32.xlu0 %v910, %s924
    %v926 = vpop.permute.xlu0 %925
    %v927 = vlaneseq
    %v928 = vshrl.u32 %v927, 7
    %v929 = vsub.s32 0, %v928
    %v930 = vrot.slane %v432, %v929
    %s932 = sor.u32 256, 32
    %933 = vbcast.lane.b32.xlu0 %v930, %s932
    %v934 = vpop.permute.xlu0 %933
    %s936 = sor.u32 256, 40
    %937 = vbcast.lane.b32.xlu0 %v930, %s936
    %v938 = vpop.permute.xlu0 %937
    %s940 = sor.u32 256, 48
    %941 = vbcast.lane.b32.xlu0 %v930, %s940
    %v942 = vpop.permute.xlu0 %941
    %s944 = sor.u32 256, 56
    %945 = vbcast.lane.b32.xlu0 %v930, %s944
    %v946 = vpop.permute.xlu0 %945
    %v947 = vlaneseq
    %v948 = vshrl.u32 %v947, 7
    %v949 = vsub.s32 1, %v948
    %v950 = vrot.slane %v432, %v949
    %s952 = sor.u32 256, 32
    %953 = vbcast.lane.b32.xlu0 %v950, %s952
    %v954 = vpop.permute.xlu0 %953
    %s956 = sor.u32 256, 40
    %957 = vbcast.lane.b32.xlu0 %v950, %s956
    %v958 = vpop.permute.xlu0 %957
    %s960 = sor.u32 256, 48
    %961 = vbcast.lane.b32.xlu0 %v950, %s960
    %v962 = vpop.permute.xlu0 %961
    %s964 = sor.u32 256, 56
    %965 = vbcast.lane.b32.xlu0 %v950, %s964
    %v966 = vpop.permute.xlu0 %965
    %v967 = vlaneseq
    %v968 = vshrl.u32 %v967, 7
    %v969 = vsub.s32 2, %v968
    %v970 = vrot.slane %v432, %v969
    %s972 = sor.u32 256, 32
    %973 = vbcast.lane.b32.xlu0 %v970, %s972
    %v974 = vpop.permute.xlu0 %973
    %s976 = sor.u32 256, 40
    %977 = vbcast.lane.b32.xlu0 %v970, %s976
    %v978 = vpop.permute.xlu0 %977
    %s980 = sor.u32 256, 48
    %981 = vbcast.lane.b32.xlu0 %v970, %s980
    %v982 = vpop.permute.xlu0 %981
    %s984 = sor.u32 256, 56
    %985 = vbcast.lane.b32.xlu0 %v970, %s984
    %v986 = vpop.permute.xlu0 %985
    %v987 = vlaneseq
    %v988 = vshrl.u32 %v987, 7
    %v989 = vsub.s32 3, %v988
    %v990 = vrot.slane %v432, %v989
    %s992 = sor.u32 256, 32
    %993 = vbcast.lane.b32.xlu0 %v990, %s992
    %v994 = vpop.permute.xlu0 %993
    %s996 = sor.u32 256, 40
    %997 = vbcast.lane.b32.xlu0 %v990, %s996
    %v998 = vpop.permute.xlu0 %997
    %s1000 = sor.u32 256, 48
    %1001 = vbcast.lane.b32.xlu0 %v990, %s1000
    %v1002 = vpop.permute.xlu0 %1001
    %s1004 = sor.u32 256, 56
    %1005 = vbcast.lane.b32.xlu0 %v990, %s1004
    %v1006 = vpop.permute.xlu0 %1005
    %v1007 = vlaneseq
    %v1008 = vshrl.u32 %v1007, 7
    %v1009 = vsub.s32 4, %v1008
    %v1010 = vrot.slane %v432, %v1009
    %s1012 = sor.u32 256, 32
    %1013 = vbcast.lane.b32.xlu0 %v1010, %s1012
    %v1014 = vpop.permute.xlu0 %1013
    %s1016 = sor.u32 256, 40
    %1017 = vbcast.lane.b32.xlu0 %v1010, %s1016
    %v1018 = vpop.permute.xlu0 %1017
    %s1020 = sor.u32 256, 48
    %1021 = vbcast.lane.b32.xlu0 %v1010, %s1020
    %v1022 = vpop.permute.xlu0 %1021
    %s1024 = sor.u32 256, 56
    %1025 = vbcast.lane.b32.xlu0 %v1010, %s1024
    %v1026 = vpop.permute.xlu0 %1025
    %v1027 = vlaneseq
    %v1028 = vshrl.u32 %v1027, 7
    %v1029 = vsub.s32 5, %v1028
    %v1030 = vrot.slane %v432, %v1029
    %s1032 = sor.u32 256, 32
    %1033 = vbcast.lane.b32.xlu0 %v1030, %s1032
    %v1034 = vpop.permute.xlu0 %1033
    %s1036 = sor.u32 256, 40
    %1037 = vbcast.lane.b32.xlu0 %v1030, %s1036
    %v1038 = vpop.permute.xlu0 %1037
    %s1040 = sor.u32 256, 48
    %1041 = vbcast.lane.b32.xlu0 %v1030, %s1040
    %v1042 = vpop.permute.xlu0 %1041
    %s1044 = sor.u32 256, 56
    %1045 = vbcast.lane.b32.xlu0 %v1030, %s1044
    %v1046 = vpop.permute.xlu0 %1045
    %v1047 = vlaneseq
    %v1048 = vshrl.u32 %v1047, 7
    %v1049 = vsub.s32 6, %v1048
    %v1050 = vrot.slane %v432, %v1049
    %s1052 = sor.u32 256, 32
    %1053 = vbcast.lane.b32.xlu0 %v1050, %s1052
    %v1054 = vpop.permute.xlu0 %1053
    %s1056 = sor.u32 256, 40
    %1057 = vbcast.lane.b32.xlu0 %v1050, %s1056
    %v1058 = vpop.permute.xlu0 %1057
    %s1060 = sor.u32 256, 48
    %1061 = vbcast.lane.b32.xlu0 %v1050, %s1060
    %v1062 = vpop.permute.xlu0 %1061
    %s1064 = sor.u32 256, 56
    %1065 = vbcast.lane.b32.xlu0 %v1050, %s1064
    %v1066 = vpop.permute.xlu0 %1065
    %v1067 = vlaneseq
    %v1068 = vshrl.u32 %v1067, 7
    %v1069 = vsub.s32 7, %v1068
    %v1070 = vrot.slane %v432, %v1069
    %s1072 = sor.u32 256, 32
    %1073 = vbcast.lane.b32.xlu0 %v1070, %s1072
    %v1074 = vpop.permute.xlu0 %1073
    %s1076 = sor.u32 256, 40
    %1077 = vbcast.lane.b32.xlu0 %v1070, %s1076
    %v1078 = vpop.permute.xlu0 %1077
    %s1080 = sor.u32 256, 48
    %1081 = vbcast.lane.b32.xlu0 %v1070, %s1080
    %v1082 = vpop.permute.xlu0 %1081
    %s1084 = sor.u32 256, 56
    %1085 = vbcast.lane.b32.xlu0 %v1070, %s1084
    %v1086 = vpop.permute.xlu0 %1085
    %v1087 = vld [vmem:[#allocation6 + $0x191] sm:$0x1]
    %v1088 = vld [vmem:[#allocation6 + $0x192] sm:$0x1]
    %v1089 = vld [vmem:[#allocation6 + $0x193] sm:$0x1]
    %v1090 = vlaneseq
    %v1091 = vshrl.u32 %v1090, 7
    %v1092 = vsub.s32 0, %v1091
    %v1093 = vrot.slane %v1087, %v1092
    %v1094 = vmul.f32 %v774, %v1093
    %v1095 = vmul.f32 %v778, %v1093
    %v1096 = vmul.f32 %v782, %v1093
    %v1097 = vmul.f32 %v786, %v1093
    %v1098 = vmul.f32 %v794, %v1093
    %v1099 = vmul.f32 %v798, %v1093
    %v1100 = vmul.f32 %v802, %v1093
    %v1101 = vmul.f32 %v806, %v1093
    %v1102 = vmul.f32 %v814, %v1093
    %v1103 = vmul.f32 %v818, %v1093
    %v1104 = vmul.f32 %v822, %v1093
    %v1105 = vmul.f32 %v826, %v1093
    %v1106 = vmul.f32 %v834, %v1093
    %v1107 = vmul.f32 %v838, %v1093
    %v1108 = vmul.f32 %v842, %v1093
    %v1109 = vmul.f32 %v846, %v1093
    %v1110 = vmul.f32 %v854, %v1093
    %v1111 = vmul.f32 %v858, %v1093
    %v1112 = vmul.f32 %v862, %v1093
    %v1113 = vmul.f32 %v866, %v1093
    %v1114 = vmul.f32 %v874, %v1093
    %v1115 = vmul.f32 %v878, %v1093
    %v1116 = vmul.f32 %v882, %v1093
    %v1117 = vmul.f32 %v886, %v1093
    %v1118 = vmul.f32 %v894, %v1093
    %v1119 = vmul.f32 %v898, %v1093
    %v1120 = vmul.f32 %v902, %v1093
    %v1121 = vmul.f32 %v906, %v1093
    %v1122 = vmul.f32 %v914, %v1093
    %v1123 = vmul.f32 %v918, %v1093
    %v1124 = vmul.f32 %v922, %v1093
    %v1125 = vmul.f32 %v926, %v1093
    %v1126 = vlaneseq
    %v1127 = vshrl.u32 %v1126, 7
    %v1128 = vsub.s32 0, %v1127
    %v1129 = vrot.slane %v1088, %v1128
    %v1130 = vmul.f32 %v934, %v1129
    %v1131 = vmul.f32 %v938, %v1129
    %v1132 = vmul.f32 %v942, %v1129
    %v1133 = vmul.f32 %v946, %v1129
    %v1134 = vmul.f32 %v954, %v1129
    %v1135 = vmul.f32 %v958, %v1129
    %v1136 = vmul.f32 %v962, %v1129
    %v1137 = vmul.f32 %v966, %v1129
    %v1138 = vmul.f32 %v974, %v1129
    %v1139 = vmul.f32 %v978, %v1129
    %v1140 = vmul.f32 %v982, %v1129
    %v1141 = vmul.f32 %v986, %v1129
    %v1142 = vmul.f32 %v994, %v1129
    %v1143 = vmul.f32 %v998, %v1129
    %v1144 = vmul.f32 %v1002, %v1129
    %v1145 = vmul.f32 %v1006, %v1129
    %v1146 = vmul.f32 %v1014, %v1129
    %v1147 = vmul.f32 %v1018, %v1129
    %v1148 = vmul.f32 %v1022, %v1129
    %v1149 = vmul.f32 %v1026, %v1129
    %v1150 = vmul.f32 %v1034, %v1129
    %v1151 = vmul.f32 %v1038, %v1129
    %v1152 = vmul.f32 %v1042, %v1129
    %v1153 = vmul.f32 %v1046, %v1129
    %v1154 = vmul.f32 %v1054, %v1129
    %v1155 = vmul.f32 %v1058, %v1129
    %v1156 = vmul.f32 %v1062, %v1129
    %v1157 = vmul.f32 %v1066, %v1129
    %v1158 = vmul.f32 %v1074, %v1129
    %v1159 = vmul.f32 %v1078, %v1129
    %v1160 = vmul.f32 %v1082, %v1129
    %v1161 = vmul.f32 %v1086, %v1129
    %v1162 = vadd.f32 %v1094, %v1130
    %v1163 = vadd.f32 %v1095, %v1131
    %v1164 = vadd.f32 %v1096, %v1132
    %v1165 = vadd.f32 %v1097, %v1133
    %v1166 = vadd.f32 %v1098, %v1134
    %v1167 = vadd.f32 %v1099, %v1135
    %v1168 = vadd.f32 %v1100, %v1136
    %v1169 = vadd.f32 %v1101, %v1137
    %v1170 = vadd.f32 %v1102, %v1138
    %v1171 = vadd.f32 %v1103, %v1139
    %v1172 = vadd.f32 %v1104, %v1140
    %v1173 = vadd.f32 %v1105, %v1141
    %v1174 = vadd.f32 %v1106, %v1142
    %v1175 = vadd.f32 %v1107, %v1143
    %v1176 = vadd.f32 %v1108, %v1144
    %v1177 = vadd.f32 %v1109, %v1145
    %v1178 = vadd.f32 %v1110, %v1146
    %v1179 = vadd.f32 %v1111, %v1147
    %v1180 = vadd.f32 %v1112, %v1148
    %v1181 = vadd.f32 %v1113, %v1149
    %v1182 = vadd.f32 %v1114, %v1150
    %v1183 = vadd.f32 %v1115, %v1151
    %v1184 = vadd.f32 %v1116, %v1152
    %v1185 = vadd.f32 %v1117, %v1153
    %v1186 = vadd.f32 %v1118, %v1154
    %v1187 = vadd.f32 %v1119, %v1155
    %v1188 = vadd.f32 %v1120, %v1156
    %v1189 = vadd.f32 %v1121, %v1157
    %v1190 = vadd.f32 %v1122, %v1158
    %v1191 = vadd.f32 %v1123, %v1159
    %v1192 = vadd.f32 %v1124, %v1160
    %v1193 = vadd.f32 %v1125, %v1161
    %v1194 = vlaneseq
    %v1195 = vshrl.u32 %v1194, 7
    %v1196 = vsub.s32 0, %v1195
    %v1197 = vrot.slane %v1089, %v1196
    %v1198 = vadd.f32 %v1162, %v1197
    %v1199 = vadd.f32 %v1163, %v1197
    %v1200 = vadd.f32 %v1164, %v1197
    %v1201 = vadd.f32 %v1165, %v1197
    %v1202 = vadd.f32 %v1166, %v1197
    %v1203 = vadd.f32 %v1167, %v1197
    %v1204 = vadd.f32 %v1168, %v1197
    %v1205 = vadd.f32 %v1169, %v1197
    %v1206 = vadd.f32 %v1170, %v1197
    %v1207 = vadd.f32 %v1171, %v1197
    %v1208 = vadd.f32 %v1172, %v1197
    %v1209 = vadd.f32 %v1173, %v1197
    %v1210 = vadd.f32 %v1174, %v1197
    %v1211 = vadd.f32 %v1175, %v1197
    %v1212 = vadd.f32 %v1176, %v1197
    %v1213 = vadd.f32 %v1177, %v1197
    %v1214 = vadd.f32 %v1178, %v1197
    %v1215 = vadd.f32 %v1179, %v1197
    %v1216 = vadd.f32 %v1180, %v1197
    %v1217 = vadd.f32 %v1181, %v1197
    %v1218 = vadd.f32 %v1182, %v1197
    %v1219 = vadd.f32 %v1183, %v1197
    %v1220 = vadd.f32 %v1184, %v1197
    %v1221 = vadd.f32 %v1185, %v1197
    %v1222 = vadd.f32 %v1186, %v1197
    %v1223 = vadd.f32 %v1187, %v1197
    %v1224 = vadd.f32 %v1188, %v1197
    %v1225 = vadd.f32 %v1189, %v1197
    %v1226 = vadd.f32 %v1190, %v1197
    %v1227 = vadd.f32 %v1191, %v1197
    %v1228 = vadd.f32 %v1192, %v1197
    %v1229 = vadd.f32 %v1193, %v1197
    %v1230 = vmul.f32 %v934, %v1093
    %v1231 = vmul.f32 %v938, %v1093
    %v1232 = vmul.f32 %v942, %v1093
    %v1233 = vmul.f32 %v946, %v1093
    %v1234 = vmul.f32 %v954, %v1093
    %v1235 = vmul.f32 %v958, %v1093
    %v1236 = vmul.f32 %v962, %v1093
    %v1237 = vmul.f32 %v966, %v1093
    %v1238 = vmul.f32 %v974, %v1093
    %v1239 = vmul.f32 %v978, %v1093
    %v1240 = vmul.f32 %v982, %v1093
    %v1241 = vmul.f32 %v986, %v1093
    %v1242 = vmul.f32 %v994, %v1093
    %v1243 = vmul.f32 %v998, %v1093
    %v1244 = vmul.f32 %v1002, %v1093
    %v1245 = vmul.f32 %v1006, %v1093
    %v1246 = vmul.f32 %v1014, %v1093
    %v1247 = vmul.f32 %v1018, %v1093
    %v1248 = vmul.f32 %v1022, %v1093
    %v1249 = vmul.f32 %v1026, %v1093
    %v1250 = vmul.f32 %v1034, %v1093
    %v1251 = vmul.f32 %v1038, %v1093
    %v1252 = vmul.f32 %v1042, %v1093
    %v1253 = vmul.f32 %v1046, %v1093
    %v1254 = vmul.f32 %v1054, %v1093
    %v1255 = vmul.f32 %v1058, %v1093
    %v1256 = vmul.f32 %v1062, %v1093
    %v1257 = vmul.f32 %v1066, %v1093
    %v1258 = vmul.f32 %v1074, %v1093
    %v1259 = vmul.f32 %v1078, %v1093
    %v1260 = vmul.f32 %v1082, %v1093
    %v1261 = vmul.f32 %v1086, %v1093
    %v1262 = vmul.f32 %v774, %v1129
    %v1263 = vmul.f32 %v778, %v1129
    %v1264 = vmul.f32 %v782, %v1129
    %v1265 = vmul.f32 %v786, %v1129
    %v1266 = vmul.f32 %v794, %v1129
    %v1267 = vmul.f32 %v798, %v1129
    %v1268 = vmul.f32 %v802, %v1129
    %v1269 = vmul.f32 %v806, %v1129
    %v1270 = vmul.f32 %v814, %v1129
    %v1271 = vmul.f32 %v818, %v1129
    %v1272 = vmul.f32 %v822, %v1129
    %v1273 = vmul.f32 %v826, %v1129
    %v1274 = vmul.f32 %v834, %v1129
    %v1275 = vmul.f32 %v838, %v1129
    %v1276 = vmul.f32 %v842, %v1129
    %v1277 = vmul.f32 %v846, %v1129
    %v1278 = vmul.f32 %v854, %v1129
    %v1279 = vmul.f32 %v858, %v1129
    %v1280 = vmul.f32 %v862, %v1129
    %v1281 = vmul.f32 %v866, %v1129
    %v1282 = vmul.f32 %v874, %v1129
    %v1283 = vmul.f32 %v878, %v1129
    %v1284 = vmul.f32 %v882, %v1129
    %v1285 = vmul.f32 %v886, %v1129
    %v1286 = vmul.f32 %v894, %v1129
    %v1287 = vmul.f32 %v898, %v1129
    %v1288 = vmul.f32 %v902, %v1129
    %v1289 = vmul.f32 %v906, %v1129
    %v1290 = vmul.f32 %v914, %v1129
    %v1291 = vmul.f32 %v918, %v1129
    %v1292 = vmul.f32 %v922, %v1129
    %v1293 = vmul.f32 %v926, %v1129
    %v1294 = vadd.f32 %v1230, %v1262
    %v1295 = vadd.f32 %v1231, %v1263
    %v1296 = vadd.f32 %v1232, %v1264
    %v1297 = vadd.f32 %v1233, %v1265
    %v1298 = vadd.f32 %v1234, %v1266
    %v1299 = vadd.f32 %v1235, %v1267
    %v1300 = vadd.f32 %v1236, %v1268
    %v1301 = vadd.f32 %v1237, %v1269
    %v1302 = vadd.f32 %v1238, %v1270
    %v1303 = vadd.f32 %v1239, %v1271
    %v1304 = vadd.f32 %v1240, %v1272
    %v1305 = vadd.f32 %v1241, %v1273
    %v1306 = vadd.f32 %v1242, %v1274
    %v1307 = vadd.f32 %v1243, %v1275
    %v1308 = vadd.f32 %v1244, %v1276
    %v1309 = vadd.f32 %v1245, %v1277
    %v1310 = vadd.f32 %v1246, %v1278
    %v1311 = vadd.f32 %v1247, %v1279
    %v1312 = vadd.f32 %v1248, %v1280
    %v1313 = vadd.f32 %v1249, %v1281
    %v1314 = vadd.f32 %v1250, %v1282
    %v1315 = vadd.f32 %v1251, %v1283
    %v1316 = vadd.f32 %v1252, %v1284
    %v1317 = vadd.f32 %v1253, %v1285
    %v1318 = vadd.f32 %v1254, %v1286
    %v1319 = vadd.f32 %v1255, %v1287
    %v1320 = vadd.f32 %v1256, %v1288
    %v1321 = vadd.f32 %v1257, %v1289
    %v1322 = vadd.f32 %v1258, %v1290
    %v1323 = vadd.f32 %v1259, %v1291
    %v1324 = vadd.f32 %v1260, %v1292
    %v1325 = vadd.f32 %v1261, %v1293
    %v1326 = vadd.f32 %v1294, %v1197
    %v1327 = vadd.f32 %v1295, %v1197
    %v1328 = vadd.f32 %v1296, %v1197
    %v1329 = vadd.f32 %v1297, %v1197
    %v1330 = vadd.f32 %v1298, %v1197
    %v1331 = vadd.f32 %v1299, %v1197
    %v1332 = vadd.f32 %v1300, %v1197
    %v1333 = vadd.f32 %v1301, %v1197
    %v1334 = vadd.f32 %v1302, %v1197
    %v1335 = vadd.f32 %v1303, %v1197
    %v1336 = vadd.f32 %v1304, %v1197
    %v1337 = vadd.f32 %v1305, %v1197
    %v1338 = vadd.f32 %v1306, %v1197
    %v1339 = vadd.f32 %v1307, %v1197
    %v1340 = vadd.f32 %v1308, %v1197
    %v1341 = vadd.f32 %v1309, %v1197
    %v1342 = vadd.f32 %v1310, %v1197
    %v1343 = vadd.f32 %v1311, %v1197
    %v1344 = vadd.f32 %v1312, %v1197
    %v1345 = vadd.f32 %v1313, %v1197
    %v1346 = vadd.f32 %v1314, %v1197
    %v1347 = vadd.f32 %v1315, %v1197
    %v1348 = vadd.f32 %v1316, %v1197
    %v1349 = vadd.f32 %v1317, %v1197
    %v1350 = vadd.f32 %v1318, %v1197
    %v1351 = vadd.f32 %v1319, %v1197
    %v1352 = vadd.f32 %v1320, %v1197
    %v1353 = vadd.f32 %v1321, %v1197
    %v1354 = vadd.f32 %v1322, %v1197
    %v1355 = vadd.f32 %v1323, %v1197
    %v1356 = vadd.f32 %v1324, %v1197
    %v1357 = vadd.f32 %v1325, %v1197
    %v1358 = vmax.f32 %v1198, 0.0
    %v1359 = vmax.f32 %v1199, 0.0
    %v1360 = vmax.f32 %v1200, 0.0
    %v1361 = vmax.f32 %v1201, 0.0
    %v1362 = vmax.f32 %v1202, 0.0
    %v1363 = vmax.f32 %v1203, 0.0
    %v1364 = vmax.f32 %v1204, 0.0
    %v1365 = vmax.f32 %v1205, 0.0
    %v1366 = vmax.f32 %v1206, 0.0
    %v1367 = vmax.f32 %v1207, 0.0
    %v1368 = vmax.f32 %v1208, 0.0
    %v1369 = vmax.f32 %v1209, 0.0
    %v1370 = vmax.f32 %v1210, 0.0
    %v1371 = vmax.f32 %v1211, 0.0
    %v1372 = vmax.f32 %v1212, 0.0
    %v1373 = vmax.f32 %v1213, 0.0
    %v1374 = vmax.f32 %v1214, 0.0
    %v1375 = vmax.f32 %v1215, 0.0
    %v1376 = vmax.f32 %v1216, 0.0
    %v1377 = vmax.f32 %v1217, 0.0
    %v1378 = vmax.f32 %v1218, 0.0
    %v1379 = vmax.f32 %v1219, 0.0
    %v1380 = vmax.f32 %v1220, 0.0
    %v1381 = vmax.f32 %v1221, 0.0
    %v1382 = vmax.f32 %v1222, 0.0
    %v1383 = vmax.f32 %v1223, 0.0
    %v1384 = vmax.f32 %v1224, 0.0
    %v1385 = vmax.f32 %v1225, 0.0
    %v1386 = vmax.f32 %v1226, 0.0
    %v1387 = vmax.f32 %v1227, 0.0
    %v1388 = vmax.f32 %v1228, 0.0
    %v1389 = vmax.f32 %v1229, 0.0
    %v1390 = vmax.f32 %v1326, 0.0
    %v1391 = vmax.f32 %v1327, 0.0
    %v1392 = vmax.f32 %v1328, 0.0
    %v1393 = vmax.f32 %v1329, 0.0
    %v1394 = vmax.f32 %v1330, 0.0
    %v1395 = vmax.f32 %v1331, 0.0
    %v1396 = vmax.f32 %v1332, 0.0
    %v1397 = vmax.f32 %v1333, 0.0
    %v1398 = vmax.f32 %v1334, 0.0
    %v1399 = vmax.f32 %v1335, 0.0
    %v1400 = vmax.f32 %v1336, 0.0
    %v1401 = vmax.f32 %v1337, 0.0
    %v1402 = vmax.f32 %v1338, 0.0
    %v1403 = vmax.f32 %v1339, 0.0
    %v1404 = vmax.f32 %v1340, 0.0
    %v1405 = vmax.f32 %v1341, 0.0
    %v1406 = vmax.f32 %v1342, 0.0
    %v1407 = vmax.f32 %v1343, 0.0
    %v1408 = vmax.f32 %v1344, 0.0
    %v1409 = vmax.f32 %v1345, 0.0
    %v1410 = vmax.f32 %v1346, 0.0
    %v1411 = vmax.f32 %v1347, 0.0
    %v1412 = vmax.f32 %v1348, 0.0
    %v1413 = vmax.f32 %v1349, 0.0
    %v1414 = vmax.f32 %v1350, 0.0
    %v1415 = vmax.f32 %v1351, 0.0
    %v1416 = vmax.f32 %v1352, 0.0
    %v1417 = vmax.f32 %v1353, 0.0
    %v1418 = vmax.f32 %v1354, 0.0
    %v1419 = vmax.f32 %v1355, 0.0
    %v1420 = vmax.f32 %v1356, 0.0
    %v1421 = vmax.f32 %v1357, 0.0
    %v1422 = vadd.f32 %v1358, %v1390
    %v1423 = vadd.f32 %v1359, %v1391
    %v1424 = vadd.f32 %v1360, %v1392
    %v1425 = vadd.f32 %v1361, %v1393
    %v1426 = vadd.f32 %v1362, %v1394
    %v1427 = vadd.f32 %v1363, %v1395
    %v1428 = vadd.f32 %v1364, %v1396
    %v1429 = vadd.f32 %v1365, %v1397
    %v1430 = vadd.f32 %v1366, %v1398
    %v1431 = vadd.f32 %v1367, %v1399
    %v1432 = vadd.f32 %v1368, %v1400
    %v1433 = vadd.f32 %v1369, %v1401
    %v1434 = vadd.f32 %v1370, %v1402
    %v1435 = vadd.f32 %v1371, %v1403
    %v1436 = vadd.f32 %v1372, %v1404
    %v1437 = vadd.f32 %v1373, %v1405
    %v1438 = vadd.f32 %v1374, %v1406
    %v1439 = vadd.f32 %v1375, %v1407
    %v1440 = vadd.f32 %v1376, %v1408
    %v1441 = vadd.f32 %v1377, %v1409
    %v1442 = vadd.f32 %v1378, %v1410
    %v1443 = vadd.f32 %v1379, %v1411
    %v1444 = vadd.f32 %v1380, %v1412
    %v1445 = vadd.f32 %v1381, %v1413
    %v1446 = vadd.f32 %v1382, %v1414
    %v1447 = vadd.f32 %v1383, %v1415
    %v1448 = vadd.f32 %v1384, %v1416
    %v1449 = vadd.f32 %v1385, %v1417
    %v1450 = vadd.f32 %v1386, %v1418
    %v1451 = vadd.f32 %v1387, %v1419
    %v1452 = vadd.f32 %v1388, %v1420
    %v1453 = vadd.f32 %v1389, %v1421
    %s1455 = sor.u32 256, 64
    %1456 = vbcast.lane.b32.xlu0 %v770, %s1455
    %v1457 = vpop.permute.xlu0 %1456
    %s1459 = sor.u32 256, 72
    %1460 = vbcast.lane.b32.xlu0 %v770, %s1459
    %v1461 = vpop.permute.xlu0 %1460
    %s1463 = sor.u32 256, 80
    %1464 = vbcast.lane.b32.xlu0 %v770, %s1463
    %v1465 = vpop.permute.xlu0 %1464
    %s1467 = sor.u32 256, 88
    %1468 = vbcast.lane.b32.xlu0 %v770, %s1467
    %v1469 = vpop.permute.xlu0 %1468
    %s1471 = sor.u32 256, 64
    %1472 = vbcast.lane.b32.xlu0 %v790, %s1471
    %v1473 = vpop.permute.xlu0 %1472
    %s1475 = sor.u32 256, 72
    %1476 = vbcast.lane.b32.xlu0 %v790, %s1475
    %v1477 = vpop.permute.xlu0 %1476
    %s1479 = sor.u32 256, 80
    %1480 = vbcast.lane.b32.xlu0 %v790, %s1479
    %v1481 = vpop.permute.xlu0 %1480
    %s1483 = sor.u32 256, 88
    %1484 = vbcast.lane.b32.xlu0 %v790, %s1483
    %v1485 = vpop.permute.xlu0 %1484
    %s1487 = sor.u32 256, 64
    %1488 = vbcast.lane.b32.xlu0 %v810, %s1487
    %v1489 = vpop.permute.xlu0 %1488
    %s1491 = sor.u32 256, 72
    %1492 = vbcast.lane.b32.xlu0 %v810, %s1491
    %v1493 = vpop.permute.xlu0 %1492
    %s1495 = sor.u32 256, 80
    %1496 = vbcast.lane.b32.xlu0 %v810, %s1495
    %v1497 = vpop.permute.xlu0 %1496
    %s1499 = sor.u32 256, 88
    %1500 = vbcast.lane.b32.xlu0 %v810, %s1499
    %v1501 = vpop.permute.xlu0 %1500
    %s1503 = sor.u32 256, 64
    %1504 = vbcast.lane.b32.xlu0 %v830, %s1503
    %v1505 = vpop.permute.xlu0 %1504
    %s1507 = sor.u32 256, 72
    %1508 = vbcast.lane.b32.xlu0 %v830, %s1507
    %v1509 = vpop.permute.xlu0 %1508
    %s1511 = sor.u32 256, 80
    %1512 = vbcast.lane.b32.xlu0 %v830, %s1511
    %v1513 = vpop.permute.xlu0 %1512
    %s1515 = sor.u32 256, 88
    %1516 = vbcast.lane.b32.xlu0 %v830, %s1515
    %v1517 = vpop.permute.xlu0 %1516
    %s1519 = sor.u32 256, 64
    %1520 = vbcast.lane.b32.xlu0 %v850, %s1519
    %v1521 = vpop.permute.xlu0 %1520
    %s1523 = sor.u32 256, 72
    %1524 = vbcast.lane.b32.xlu0 %v850, %s1523
    %v1525 = vpop.permute.xlu0 %1524
    %s1527 = sor.u32 256, 80
    %1528 = vbcast.lane.b32.xlu0 %v850, %s1527
    %v1529 = vpop.permute.xlu0 %1528
    %s1531 = sor.u32 256, 88
    %1532 = vbcast.lane.b32.xlu0 %v850, %s1531
    %v1533 = vpop.permute.xlu0 %1532
    %s1535 = sor.u32 256, 64
    %1536 = vbcast.lane.b32.xlu0 %v870, %s1535
    %v1537 = vpop.permute.xlu0 %1536
    %s1539 = sor.u32 256, 72
    %1540 = vbcast.lane.b32.xlu0 %v870, %s1539
    %v1541 = vpop.permute.xlu0 %1540
    %s1543 = sor.u32 256, 80
    %1544 = vbcast.lane.b32.xlu0 %v870, %s1543
    %v1545 = vpop.permute.xlu0 %1544
    %s1547 = sor.u32 256, 88
    %1548 = vbcast.lane.b32.xlu0 %v870, %s1547
    %v1549 = vpop.permute.xlu0 %1548
    %s1551 = sor.u32 256, 64
    %1552 = vbcast.lane.b32.xlu0 %v890, %s1551
    %v1553 = vpop.permute.xlu0 %1552
    %s1555 = sor.u32 256, 72
    %1556 = vbcast.lane.b32.xlu0 %v890, %s1555
    %v1557 = vpop.permute.xlu0 %1556
    %s1559 = sor.u32 256, 80
    %1560 = vbcast.lane.b32.xlu0 %v890, %s1559
    %v1561 = vpop.permute.xlu0 %1560
    %s1563 = sor.u32 256, 88
    %1564 = vbcast.lane.b32.xlu0 %v890, %s1563
    %v1565 = vpop.permute.xlu0 %1564
    %s1567 = sor.u32 256, 64
    %1568 = vbcast.lane.b32.xlu0 %v910, %s1567
    %v1569 = vpop.permute.xlu0 %1568
    %s1571 = sor.u32 256, 72
    %1572 = vbcast.lane.b32.xlu0 %v910, %s1571
    %v1573 = vpop.permute.xlu0 %1572
    %s1575 = sor.u32 256, 80
    %1576 = vbcast.lane.b32.xlu0 %v910, %s1575
    %v1577 = vpop.permute.xlu0 %1576
    %s1579 = sor.u32 256, 88
    %1580 = vbcast.lane.b32.xlu0 %v910, %s1579
    %v1581 = vpop.permute.xlu0 %1580
    %s1583 = sor.u32 256, 64
    %1584 = vbcast.lane.b32.xlu0 %v930, %s1583
    %v1585 = vpop.permute.xlu0 %1584
    %s1587 = sor.u32 256, 72
    %1588 = vbcast.lane.b32.xlu0 %v930, %s1587
    %v1589 = vpop.permute.xlu0 %1588
    %s1591 = sor.u32 256, 80
    %1592 = vbcast.lane.b32.xlu0 %v930, %s1591
    %v1593 = vpop.permute.xlu0 %1592
    %s1595 = sor.u32 256, 88
    %1596 = vbcast.lane.b32.xlu0 %v930, %s1595
    %v1597 = vpop.permute.xlu0 %1596
    %s1599 = sor.u32 256, 64
    %1600 = vbcast.lane.b32.xlu0 %v950, %s1599
    %v1601 = vpop.permute.xlu0 %1600
    %s1603 = sor.u32 256, 72
    %1604 = vbcast.lane.b32.xlu0 %v950, %s1603
    %v1605 = vpop.permute.xlu0 %1604
    %s1607 = sor.u32 256, 80
    %1608 = vbcast.lane.b32.xlu0 %v950, %s1607
    %v1609 = vpop.permute.xlu0 %1608
    %s1611 = sor.u32 256, 88
    %1612 = vbcast.lane.b32.xlu0 %v950, %s1611
    %v1613 = vpop.permute.xlu0 %1612
    %s1615 = sor.u32 256, 64
    %1616 = vbcast.lane.b32.xlu0 %v970, %s1615
    %v1617 = vpop.permute.xlu0 %1616
    %s1619 = sor.u32 256, 72
    %1620 = vbcast.lane.b32.xlu0 %v970, %s1619
    %v1621 = vpop.permute.xlu0 %1620
    %s1623 = sor.u32 256, 80
    %1624 = vbcast.lane.b32.xlu0 %v970, %s1623
    %v1625 = vpop.permute.xlu0 %1624
    %s1627 = sor.u32 256, 88
    %1628 = vbcast.lane.b32.xlu0 %v970, %s1627
    %v1629 = vpop.permute.xlu0 %1628
    %s1631 = sor.u32 256, 64
    %1632 = vbcast.lane.b32.xlu0 %v990, %s1631
    %v1633 = vpop.permute.xlu0 %1632
    %s1635 = sor.u32 256, 72
    %1636 = vbcast.lane.b32.xlu0 %v990, %s1635
    %v1637 = vpop.permute.xlu0 %1636
    %s1639 = sor.u32 256, 80
    %1640 = vbcast.lane.b32.xlu0 %v990, %s1639
    %v1641 = vpop.permute.xlu0 %1640
    %s1643 = sor.u32 256, 88
    %1644 = vbcast.lane.b32.xlu0 %v990, %s1643
    %v1645 = vpop.permute.xlu0 %1644
    %s1647 = sor.u32 256, 64
    %1648 = vbcast.lane.b32.xlu0 %v1010, %s1647
    %v1649 = vpop.permute.xlu0 %1648
    %s1651 = sor.u32 256, 72
    %1652 = vbcast.lane.b32.xlu0 %v1010, %s1651
    %v1653 = vpop.permute.xlu0 %1652
    %s1655 = sor.u32 256, 80
    %1656 = vbcast.lane.b32.xlu0 %v1010, %s1655
    %v1657 = vpop.permute.xlu0 %1656
    %s1659 = sor.u32 256, 88
    %1660 = vbcast.lane.b32.xlu0 %v1010, %s1659
    %v1661 = vpop.permute.xlu0 %1660
    %s1663 = sor.u32 256, 64
    %1664 = vbcast.lane.b32.xlu0 %v1030, %s1663
    %v1665 = vpop.permute.xlu0 %1664
    %s1667 = sor.u32 256, 72
    %1668 = vbcast.lane.b32.xlu0 %v1030, %s1667
    %v1669 = vpop.permute.xlu0 %1668
    %s1671 = sor.u32 256, 80
    %1672 = vbcast.lane.b32.xlu0 %v1030, %s1671
    %v1673 = vpop.permute.xlu0 %1672
    %s1675 = sor.u32 256, 88
    %1676 = vbcast.lane.b32.xlu0 %v1030, %s1675
    %v1677 = vpop.permute.xlu0 %1676
    %s1679 = sor.u32 256, 64
    %1680 = vbcast.lane.b32.xlu0 %v1050, %s1679
    %v1681 = vpop.permute.xlu0 %1680
    %s1683 = sor.u32 256, 72
    %1684 = vbcast.lane.b32.xlu0 %v1050, %s1683
    %v1685 = vpop.permute.xlu0 %1684
    %s1687 = sor.u32 256, 80
    %1688 = vbcast.lane.b32.xlu0 %v1050, %s1687
    %v1689 = vpop.permute.xlu0 %1688
    %s1691 = sor.u32 256, 88
    %1692 = vbcast.lane.b32.xlu0 %v1050, %s1691
    %v1693 = vpop.permute.xlu0 %1692
    %s1695 = sor.u32 256, 64
    %1696 = vbcast.lane.b32.xlu0 %v1070, %s1695
    %v1697 = vpop.permute.xlu0 %1696
    %s1699 = sor.u32 256, 72
    %1700 = vbcast.lane.b32.xlu0 %v1070, %s1699
    %v1701 = vpop.permute.xlu0 %1700
    %s1703 = sor.u32 256, 80
    %1704 = vbcast.lane.b32.xlu0 %v1070, %s1703
    %v1705 = vpop.permute.xlu0 %1704
    %s1707 = sor.u32 256, 88
    %1708 = vbcast.lane.b32.xlu0 %v1070, %s1707
    %v1709 = vpop.permute.xlu0 %1708
    %v1710 = vld [vmem:[#allocation6 + $0x194] sm:$0x1]
    %v1711 = vld [vmem:[#allocation6 + $0x195] sm:$0x1]
    %v1712 = vld [vmem:[#allocation6 + $0x196] sm:$0x1]
    %v1713 = vlaneseq
    %v1714 = vshrl.u32 %v1713, 7
    %v1715 = vsub.s32 0, %v1714
    %v1716 = vrot.slane %v1710, %v1715
    %v1717 = vmul.f32 %v1457, %v1716
    %v1718 = vmul.f32 %v1461, %v1716
    %v1719 = vmul.f32 %v1465, %v1716
    %v1720 = vmul.f32 %v1469, %v1716
    %v1721 = vmul.f32 %v1473, %v1716
    %v1722 = vmul.f32 %v1477, %v1716
    %v1723 = vmul.f32 %v1481, %v1716
    %v1724 = vmul.f32 %v1485, %v1716
    %v1725 = vmul.f32 %v1489, %v1716
    %v1726 = vmul.f32 %v1493, %v1716
    %v1727 = vmul.f32 %v1497, %v1716
    %v1728 = vmul.f32 %v1501, %v1716
    %v1729 = vmul.f32 %v1505, %v1716
    %v1730 = vmul.f32 %v1509, %v1716
    %v1731 = vmul.f32 %v1513, %v1716
    %v1732 = vmul.f32 %v1517, %v1716
    %v1733 = vmul.f32 %v1521, %v1716
    %v1734 = vmul.f32 %v1525, %v1716
    %v1735 = vmul.f32 %v1529, %v1716
    %v1736 = vmul.f32 %v1533, %v1716
    %v1737 = vmul.f32 %v1537, %v1716
    %v1738 = vmul.f32 %v1541, %v1716
    %v1739 = vmul.f32 %v1545, %v1716
    %v1740 = vmul.f32 %v1549, %v1716
    %v1741 = vmul.f32 %v1553, %v1716
    %v1742 = vmul.f32 %v1557, %v1716
    %v1743 = vmul.f32 %v1561, %v1716
    %v1744 = vmul.f32 %v1565, %v1716
    %v1745 = vmul.f32 %v1569, %v1716
    %v1746 = vmul.f32 %v1573, %v1716
    %v1747 = vmul.f32 %v1577, %v1716
    %v1748 = vmul.f32 %v1581, %v1716
    %v1749 = vlaneseq
    %v1750 = vshrl.u32 %v1749, 7
    %v1751 = vsub.s32 0, %v1750
    %v1752 = vrot.slane %v1711, %v1751
    %v1753 = vmul.f32 %v1585, %v1752
    %v1754 = vmul.f32 %v1589, %v1752
    %v1755 = vmul.f32 %v1593, %v1752
    %v1756 = vmul.f32 %v1597, %v1752
    %v1757 = vmul.f32 %v1601, %v1752
    %v1758 = vmul.f32 %v1605, %v1752
    %v1759 = vmul.f32 %v1609, %v1752
    %v1760 = vmul.f32 %v1613, %v1752
    %v1761 = vmul.f32 %v1617, %v1752
    %v1762 = vmul.f32 %v1621, %v1752
    %v1763 = vmul.f32 %v1625, %v1752
    %v1764 = vmul.f32 %v1629, %v1752
    %v1765 = vmul.f32 %v1633, %v1752
    %v1766 = vmul.f32 %v1637, %v1752
    %v1767 = vmul.f32 %v1641, %v1752
    %v1768 = vmul.f32 %v1645, %v1752
    %v1769 = vmul.f32 %v1649, %v1752
    %v1770 = vmul.f32 %v1653, %v1752
    %v1771 = vmul.f32 %v1657, %v1752
    %v1772 = vmul.f32 %v1661, %v1752
    %v1773 = vmul.f32 %v1665, %v1752
    %v1774 = vmul.f32 %v1669, %v1752
    %v1775 = vmul.f32 %v1673, %v1752
    %v1776 = vmul.f32 %v1677, %v1752
    %v1777 = vmul.f32 %v1681, %v1752
    %v1778 = vmul.f32 %v1685, %v1752
    %v1779 = vmul.f32 %v1689, %v1752
    %v1780 = vmul.f32 %v1693, %v1752
    %v1781 = vmul.f32 %v1697, %v1752
    %v1782 = vmul.f32 %v1701, %v1752
    %v1783 = vmul.f32 %v1705, %v1752
    %v1784 = vmul.f32 %v1709, %v1752
    %v1785 = vadd.f32 %v1717, %v1753
    %v1786 = vadd.f32 %v1718, %v1754
    %v1787 = vadd.f32 %v1719, %v1755
    %v1788 = vadd.f32 %v1720, %v1756
    %v1789 = vadd.f32 %v1721, %v1757
    %v1790 = vadd.f32 %v1722, %v1758
    %v1791 = vadd.f32 %v1723, %v1759
    %v1792 = vadd.f32 %v1724, %v1760
    %v1793 = vadd.f32 %v1725, %v1761
    %v1794 = vadd.f32 %v1726, %v1762
    %v1795 = vadd.f32 %v1727, %v1763
    %v1796 = vadd.f32 %v1728, %v1764
    %v1797 = vadd.f32 %v1729, %v1765
    %v1798 = vadd.f32 %v1730, %v1766
    %v1799 = vadd.f32 %v1731, %v1767
    %v1800 = vadd.f32 %v1732, %v1768
    %v1801 = vadd.f32 %v1733, %v1769
    %v1802 = vadd.f32 %v1734, %v1770
    %v1803 = vadd.f32 %v1735, %v1771
    %v1804 = vadd.f32 %v1736, %v1772
    %v1805 = vadd.f32 %v1737, %v1773
    %v1806 = vadd.f32 %v1738, %v1774
    %v1807 = vadd.f32 %v1739, %v1775
    %v1808 = vadd.f32 %v1740, %v1776
    %v1809 = vadd.f32 %v1741, %v1777
    %v1810 = vadd.f32 %v1742, %v1778
    %v1811 = vadd.f32 %v1743, %v1779
    %v1812 = vadd.f32 %v1744, %v1780
    %v1813 = vadd.f32 %v1745, %v1781
    %v1814 = vadd.f32 %v1746, %v1782
    %v1815 = vadd.f32 %v1747, %v1783
    %v1816 = vadd.f32 %v1748, %v1784
    %v1817 = vlaneseq
    %v1818 = vshrl.u32 %v1817, 7
    %v1819 = vsub.s32 0, %v1818
    %v1820 = vrot.slane %v1712, %v1819
    %v1821 = vadd.f32 %v1785, %v1820
    %v1822 = vadd.f32 %v1786, %v1820
    %v1823 = vadd.f32 %v1787, %v1820
    %v1824 = vadd.f32 %v1788, %v1820
    %v1825 = vadd.f32 %v1789, %v1820
    %v1826 = vadd.f32 %v1790, %v1820
    %v1827 = vadd.f32 %v1791, %v1820
    %v1828 = vadd.f32 %v1792, %v1820
    %v1829 = vadd.f32 %v1793, %v1820
    %v1830 = vadd.f32 %v1794, %v1820
    %v1831 = vadd.f32 %v1795, %v1820
    %v1832 = vadd.f32 %v1796, %v1820
    %v1833 = vadd.f32 %v1797, %v1820
    %v1834 = vadd.f32 %v1798, %v1820
    %v1835 = vadd.f32 %v1799, %v1820
    %v1836 = vadd.f32 %v1800, %v1820
    %v1837 = vadd.f32 %v1801, %v1820
    %v1838 = vadd.f32 %v1802, %v1820
    %v1839 = vadd.f32 %v1803, %v1820
    %v1840 = vadd.f32 %v1804, %v1820
    %v1841 = vadd.f32 %v1805, %v1820
    %v1842 = vadd.f32 %v1806, %v1820
    %v1843 = vadd.f32 %v1807, %v1820
    %v1844 = vadd.f32 %v1808, %v1820
    %v1845 = vadd.f32 %v1809, %v1820
    %v1846 = vadd.f32 %v1810, %v1820
    %v1847 = vadd.f32 %v1811, %v1820
    %v1848 = vadd.f32 %v1812, %v1820
    %v1849 = vadd.f32 %v1813, %v1820
    %v1850 = vadd.f32 %v1814, %v1820
    %v1851 = vadd.f32 %v1815, %v1820
    %v1852 = vadd.f32 %v1816, %v1820
    %v1853 = vmul.f32 %v1585, %v1716
    %v1854 = vmul.f32 %v1589, %v1716
    %v1855 = vmul.f32 %v1593, %v1716
    %v1856 = vmul.f32 %v1597, %v1716
    %v1857 = vmul.f32 %v1601, %v1716
    %v1858 = vmul.f32 %v1605, %v1716
    %v1859 = vmul.f32 %v1609, %v1716
    %v1860 = vmul.f32 %v1613, %v1716
    %v1861 = vmul.f32 %v1617, %v1716
    %v1862 = vmul.f32 %v1621, %v1716
    %v1863 = vmul.f32 %v1625, %v1716
    %v1864 = vmul.f32 %v1629, %v1716
    %v1865 = vmul.f32 %v1633, %v1716
    %v1866 = vmul.f32 %v1637, %v1716
    %v1867 = vmul.f32 %v1641, %v1716
    %v1868 = vmul.f32 %v1645, %v1716
    %v1869 = vmul.f32 %v1649, %v1716
    %v1870 = vmul.f32 %v1653, %v1716
    %v1871 = vmul.f32 %v1657, %v1716
    %v1872 = vmul.f32 %v1661, %v1716
    %v1873 = vmul.f32 %v1665, %v1716
    %v1874 = vmul.f32 %v1669, %v1716
    %v1875 = vmul.f32 %v1673, %v1716
    %v1876 = vmul.f32 %v1677, %v1716
    %v1877 = vmul.f32 %v1681, %v1716
    %v1878 = vmul.f32 %v1685, %v1716
    %v1879 = vmul.f32 %v1689, %v1716
    %v1880 = vmul.f32 %v1693, %v1716
    %v1881 = vmul.f32 %v1697, %v1716
    %v1882 = vmul.f32 %v1701, %v1716
    %v1883 = vmul.f32 %v1705, %v1716
    %v1884 = vmul.f32 %v1709, %v1716
    %v1885 = vmul.f32 %v1457, %v1752
    %v1886 = vmul.f32 %v1461, %v1752
    %v1887 = vmul.f32 %v1465, %v1752
    %v1888 = vmul.f32 %v1469, %v1752
    %v1889 = vmul.f32 %v1473, %v1752
    %v1890 = vmul.f32 %v1477, %v1752
    %v1891 = vmul.f32 %v1481, %v1752
    %v1892 = vmul.f32 %v1485, %v1752
    %v1893 = vmul.f32 %v1489, %v1752
    %v1894 = vmul.f32 %v1493, %v1752
    %v1895 = vmul.f32 %v1497, %v1752
    %v1896 = vmul.f32 %v1501, %v1752
    %v1897 = vmul.f32 %v1505, %v1752
    %v1898 = vmul.f32 %v1509, %v1752
    %v1899 = vmul.f32 %v1513, %v1752
    %v1900 = vmul.f32 %v1517, %v1752
    %v1901 = vmul.f32 %v1521, %v1752
    %v1902 = vmul.f32 %v1525, %v1752
    %v1903 = vmul.f32 %v1529, %v1752
    %v1904 = vmul.f32 %v1533, %v1752
    %v1905 = vmul.f32 %v1537, %v1752
    %v1906 = vmul.f32 %v1541, %v1752
    %v1907 = vmul.f32 %v1545, %v1752
    %v1908 = vmul.f32 %v1549, %v1752
    %v1909 = vmul.f32 %v1553, %v1752
    %v1910 = vmul.f32 %v1557, %v1752
    %v1911 = vmul.f32 %v1561, %v1752
    %v1912 = vmul.f32 %v1565, %v1752
    %v1913 = vmul.f32 %v1569, %v1752
    %v1914 = vmul.f32 %v1573, %v1752
    %v1915 = vmul.f32 %v1577, %v1752
    %v1916 = vmul.f32 %v1581, %v1752
    %v1917 = vadd.f32 %v1853, %v1885
    %v1918 = vadd.f32 %v1854, %v1886
    %v1919 = vadd.f32 %v1855, %v1887
    %v1920 = vadd.f32 %v1856, %v1888
    %v1921 = vadd.f32 %v1857, %v1889
    %v1922 = vadd.f32 %v1858, %v1890
    %v1923 = vadd.f32 %v1859, %v1891
    %v1924 = vadd.f32 %v1860, %v1892
    %v1925 = vadd.f32 %v1861, %v1893
    %v1926 = vadd.f32 %v1862, %v1894
    %v1927 = vadd.f32 %v1863, %v1895
    %v1928 = vadd.f32 %v1864, %v1896
    %v1929 = vadd.f32 %v1865, %v1897
    %v1930 = vadd.f32 %v1866, %v1898
    %v1931 = vadd.f32 %v1867, %v1899
    %v1932 = vadd.f32 %v1868, %v1900
    %v1933 = vadd.f32 %v1869, %v1901
    %v1934 = vadd.f32 %v1870, %v1902
    %v1935 = vadd.f32 %v1871, %v1903
    %v1936 = vadd.f32 %v1872, %v1904
    %v1937 = vadd.f32 %v1873, %v1905
    %v1938 = vadd.f32 %v1874, %v1906
    %v1939 = vadd.f32 %v1875, %v1907
    %v1940 = vadd.f32 %v1876, %v1908
    %v1941 = vadd.f32 %v1877, %v1909
    %v1942 = vadd.f32 %v1878, %v1910
    %v1943 = vadd.f32 %v1879, %v1911
    %v1944 = vadd.f32 %v1880, %v1912
    %v1945 = vadd.f32 %v1881, %v1913
    %v1946 = vadd.f32 %v1882, %v1914
    %v1947 = vadd.f32 %v1883, %v1915
    %v1948 = vadd.f32 %v1884, %v1916
    %v1949 = vadd.f32 %v1917, %v1820
    %v1950 = vadd.f32 %v1918, %v1820
    %v1951 = vadd.f32 %v1919, %v1820
    %v1952 = vadd.f32 %v1920, %v1820
    %v1953 = vadd.f32 %v1921, %v1820
    %v1954 = vadd.f32 %v1922, %v1820
    %v1955 = vadd.f32 %v1923, %v1820
    %v1956 = vadd.f32 %v1924, %v1820
    %v1957 = vadd.f32 %v1925, %v1820
    %v1958 = vadd.f32 %v1926, %v1820
    %v1959 = vadd.f32 %v1927, %v1820
    %v1960 = vadd.f32 %v1928, %v1820
    %v1961 = vadd.f32 %v1929, %v1820
    %v1962 = vadd.f32 %v1930, %v1820
    %v1963 = vadd.f32 %v1931, %v1820
    %v1964 = vadd.f32 %v1932, %v1820
    %v1965 = vadd.f32 %v1933, %v1820
    %v1966 = vadd.f32 %v1934, %v1820
    %v1967 = vadd.f32 %v1935, %v1820
    %v1968 = vadd.f32 %v1936, %v1820
    %v1969 = vadd.f32 %v1937, %v1820
    %v1970 = vadd.f32 %v1938, %v1820
    %v1971 = vadd.f32 %v1939, %v1820
    %v1972 = vadd.f32 %v1940, %v1820
    %v1973 = vadd.f32 %v1941, %v1820
    %v1974 = vadd.f32 %v1942, %v1820
    %v1975 = vadd.f32 %v1943, %v1820
    %v1976 = vadd.f32 %v1944, %v1820
    %v1977 = vadd.f32 %v1945, %v1820
    %v1978 = vadd.f32 %v1946, %v1820
    %v1979 = vadd.f32 %v1947, %v1820
    %v1980 = vadd.f32 %v1948, %v1820
    %v1981 = vmax.f32 %v1821, 0.0
    %v1982 = vmax.f32 %v1822, 0.0
    %v1983 = vmax.f32 %v1823, 0.0
    %v1984 = vmax.f32 %v1824, 0.0
    %v1985 = vmax.f32 %v1825, 0.0
    %v1986 = vmax.f32 %v1826, 0.0
    %v1987 = vmax.f32 %v1827, 0.0
    %v1988 = vmax.f32 %v1828, 0.0
    %v1989 = vmax.f32 %v1829, 0.0
    %v1990 = vmax.f32 %v1830, 0.0
    %v1991 = vmax.f32 %v1831, 0.0
    %v1992 = vmax.f32 %v1832, 0.0
    %v1993 = vmax.f32 %v1833, 0.0
    %v1994 = vmax.f32 %v1834, 0.0
    %v1995 = vmax.f32 %v1835, 0.0
    %v1996 = vmax.f32 %v1836, 0.0
    %v1997 = vmax.f32 %v1837, 0.0
    %v1998 = vmax.f32 %v1838, 0.0
    %v1999 = vmax.f32 %v1839, 0.0
    %v2000 = vmax.f32 %v1840, 0.0
    %v2001 = vmax.f32 %v1841, 0.0
    %v2002 = vmax.f32 %v1842, 0.0
    %v2003 = vmax.f32 %v1843, 0.0
    %v2004 = vmax.f32 %v1844, 0.0
    %v2005 = vmax.f32 %v1845, 0.0
    %v2006 = vmax.f32 %v1846, 0.0
    %v2007 = vmax.f32 %v1847, 0.0
    %v2008 = vmax.f32 %v1848, 0.0
    %v2009 = vmax.f32 %v1849, 0.0
    %v2010 = vmax.f32 %v1850, 0.0
    %v2011 = vmax.f32 %v1851, 0.0
    %v2012 = vmax.f32 %v1852, 0.0
    %v2013 = vmax.f32 %v1949, 0.0
    %v2014 = vmax.f32 %v1950, 0.0
    %v2015 = vmax.f32 %v1951, 0.0
    %v2016 = vmax.f32 %v1952, 0.0
    %v2017 = vmax.f32 %v1953, 0.0
    %v2018 = vmax.f32 %v1954, 0.0
    %v2019 = vmax.f32 %v1955, 0.0
    %v2020 = vmax.f32 %v1956, 0.0
    %v2021 = vmax.f32 %v1957, 0.0
    %v2022 = vmax.f32 %v1958, 0.0
    %v2023 = vmax.f32 %v1959, 0.0
    %v2024 = vmax.f32 %v1960, 0.0
    %v2025 = vmax.f32 %v1961, 0.0
    %v2026 = vmax.f32 %v1962, 0.0
    %v2027 = vmax.f32 %v1963, 0.0
    %v2028 = vmax.f32 %v1964, 0.0
    %v2029 = vmax.f32 %v1965, 0.0
    %v2030 = vmax.f32 %v1966, 0.0
    %v2031 = vmax.f32 %v1967, 0.0
    %v2032 = vmax.f32 %v1968, 0.0
    %v2033 = vmax.f32 %v1969, 0.0
    %v2034 = vmax.f32 %v1970, 0.0
    %v2035 = vmax.f32 %v1971, 0.0
    %v2036 = vmax.f32 %v1972, 0.0
    %v2037 = vmax.f32 %v1973, 0.0
    %v2038 = vmax.f32 %v1974, 0.0
    %v2039 = vmax.f32 %v1975, 0.0
    %v2040 = vmax.f32 %v1976, 0.0
    %v2041 = vmax.f32 %v1977, 0.0
    %v2042 = vmax.f32 %v1978, 0.0
    %v2043 = vmax.f32 %v1979, 0.0
    %v2044 = vmax.f32 %v1980, 0.0
    %v2045 = vadd.f32 %v1981, %v2013
    %v2046 = vadd.f32 %v1982, %v2014
    %v2047 = vadd.f32 %v1983, %v2015
    %v2048 = vadd.f32 %v1984, %v2016
    %v2049 = vadd.f32 %v1985, %v2017
    %v2050 = vadd.f32 %v1986, %v2018
    %v2051 = vadd.f32 %v1987, %v2019
    %v2052 = vadd.f32 %v1988, %v2020
    %v2053 = vadd.f32 %v1989, %v2021
    %v2054 = vadd.f32 %v1990, %v2022
    %v2055 = vadd.f32 %v1991, %v2023
    %v2056 = vadd.f32 %v1992, %v2024
    %v2057 = vadd.f32 %v1993, %v2025
    %v2058 = vadd.f32 %v1994, %v2026
    %v2059 = vadd.f32 %v1995, %v2027
    %v2060 = vadd.f32 %v1996, %v2028
    %v2061 = vadd.f32 %v1997, %v2029
    %v2062 = vadd.f32 %v1998, %v2030
    %v2063 = vadd.f32 %v1999, %v2031
    %v2064 = vadd.f32 %v2000, %v2032
    %v2065 = vadd.f32 %v2001, %v2033
    %v2066 = vadd.f32 %v2002, %v2034
    %v2067 = vadd.f32 %v2003, %v2035
    %v2068 = vadd.f32 %v2004, %v2036
    %v2069 = vadd.f32 %v2005, %v2037
    %v2070 = vadd.f32 %v2006, %v2038
    %v2071 = vadd.f32 %v2007, %v2039
    %v2072 = vadd.f32 %v2008, %v2040
    %v2073 = vadd.f32 %v2009, %v2041
    %v2074 = vadd.f32 %v2010, %v2042
    %v2075 = vadd.f32 %v2011, %v2043
    %v2076 = vadd.f32 %v2012, %v2044
    %v2077 = vlaneseq
    %v2078 = vshrl.u32 %v2077, 7
    %v2079 = vsub.s32 0, %v2078
    %v2080 = vrot.slane %v691, %v2079
    %2082 = vbcast.lane.b32.xlu0 %v2080, 256
    %v2083 = vpop.permute.xlu0 %2082
    %s2085 = sor.u32 256, 8
    %2086 = vbcast.lane.b32.xlu0 %v2080, %s2085
    %v2087 = vpop.permute.xlu0 %2086
    %s2089 = sor.u32 256, 16
    %2090 = vbcast.lane.b32.xlu0 %v2080, %s2089
    %v2091 = vpop.permute.xlu0 %2090
    %s2093 = sor.u32 256, 24
    %2094 = vbcast.lane.b32.xlu0 %v2080, %s2093
    %v2095 = vpop.permute.xlu0 %2094
    %v2096 = vlaneseq
    %v2097 = vshrl.u32 %v2096, 7
    %v2098 = vsub.s32 1, %v2097
    %v2099 = vrot.slane %v691, %v2098
    %2101 = vbcast.lane.b32.xlu0 %v2099, 256
    %v2102 = vpop.permute.xlu0 %2101
    %s2104 = sor.u32 256, 8
    %2105 = vbcast.lane.b32.xlu0 %v2099, %s2104
    %v2106 = vpop.permute.xlu0 %2105
    %s2108 = sor.u32 256, 16
    %2109 = vbcast.lane.b32.xlu0 %v2099, %s2108
    %v2110 = vpop.permute.xlu0 %2109
    %s2112 = sor.u32 256, 24
    %2113 = vbcast.lane.b32.xlu0 %v2099, %s2112
    %v2114 = vpop.permute.xlu0 %2113
    %v2115 = vlaneseq
    %v2116 = vshrl.u32 %v2115, 7
    %v2117 = vsub.s32 2, %v2116
    %v2118 = vrot.slane %v691, %v2117
    %2120 = vbcast.lane.b32.xlu0 %v2118, 256
    %v2121 = vpop.permute.xlu0 %2120
    %s2123 = sor.u32 256, 8
    %2124 = vbcast.lane.b32.xlu0 %v2118, %s2123
    %v2125 = vpop.permute.xlu0 %2124
    %s2127 = sor.u32 256, 16
    %2128 = vbcast.lane.b32.xlu0 %v2118, %s2127
    %v2129 = vpop.permute.xlu0 %2128
    %s2131 = sor.u32 256, 24
    %2132 = vbcast.lane.b32.xlu0 %v2118, %s2131
    %v2133 = vpop.permute.xlu0 %2132
    %v2134 = vlaneseq
    %v2135 = vshrl.u32 %v2134, 7
    %v2136 = vsub.s32 3, %v2135
    %v2137 = vrot.slane %v691, %v2136
    %2139 = vbcast.lane.b32.xlu0 %v2137, 256
    %v2140 = vpop.permute.xlu0 %2139
    %s2142 = sor.u32 256, 8
    %2143 = vbcast.lane.b32.xlu0 %v2137, %s2142
    %v2144 = vpop.permute.xlu0 %2143
    %s2146 = sor.u32 256, 16
    %2147 = vbcast.lane.b32.xlu0 %v2137, %s2146
    %v2148 = vpop.permute.xlu0 %2147
    %s2150 = sor.u32 256, 24
    %2151 = vbcast.lane.b32.xlu0 %v2137, %s2150
    %v2152 = vpop.permute.xlu0 %2151
    %v2153 = vlaneseq
    %v2154 = vshrl.u32 %v2153, 7
    %v2155 = vsub.s32 4, %v2154
    %v2156 = vrot.slane %v691, %v2155
    %2158 = vbcast.lane.b32.xlu0 %v2156, 256
    %v2159 = vpop.permute.xlu0 %2158
    %s2161 = sor.u32 256, 8
    %2162 = vbcast.lane.b32.xlu0 %v2156, %s2161
    %v2163 = vpop.permute.xlu0 %2162
    %s2165 = sor.u32 256, 16
    %2166 = vbcast.lane.b32.xlu0 %v2156, %s2165
    %v2167 = vpop.permute.xlu0 %2166
    %s2169 = sor.u32 256, 24
    %2170 = vbcast.lane.b32.xlu0 %v2156, %s2169
    %v2171 = vpop.permute.xlu0 %2170
    %v2172 = vlaneseq
    %v2173 = vshrl.u32 %v2172, 7
    %v2174 = vsub.s32 5, %v2173
    %v2175 = vrot.slane %v691, %v2174
    %2177 = vbcast.lane.b32.xlu0 %v2175, 256
    %v2178 = vpop.permute.xlu0 %2177
    %s2180 = sor.u32 256, 8
    %2181 = vbcast.lane.b32.xlu0 %v2175, %s2180
    %v2182 = vpop.permute.xlu0 %2181
    %s2184 = sor.u32 256, 16
    %2185 = vbcast.lane.b32.xlu0 %v2175, %s2184
    %v2186 = vpop.permute.xlu0 %2185
    %s2188 = sor.u32 256, 24
    %2189 = vbcast.lane.b32.xlu0 %v2175, %s2188
    %v2190 = vpop.permute.xlu0 %2189
    %v2191 = vlaneseq
    %v2192 = vshrl.u32 %v2191, 7
    %v2193 = vsub.s32 6, %v2192
    %v2194 = vrot.slane %v691, %v2193
    %2196 = vbcast.lane.b32.xlu0 %v2194, 256
    %v2197 = vpop.permute.xlu0 %2196
    %s2199 = sor.u32 256, 8
    %2200 = vbcast.lane.b32.xlu0 %v2194, %s2199
    %v2201 = vpop.permute.xlu0 %2200
    %s2203 = sor.u32 256, 16
    %2204 = vbcast.lane.b32.xlu0 %v2194, %s2203
    %v2205 = vpop.permute.xlu0 %2204
    %s2207 = sor.u32 256, 24
    %2208 = vbcast.lane.b32.xlu0 %v2194, %s2207
    %v2209 = vpop.permute.xlu0 %2208
    %v2210 = vlaneseq
    %v2211 = vshrl.u32 %v2210, 7
    %v2212 = vsub.s32 7, %v2211
    %v2213 = vrot.slane %v691, %v2212
    %2215 = vbcast.lane.b32.xlu0 %v2213, 256
    %v2216 = vpop.permute.xlu0 %2215
    %s2218 = sor.u32 256, 8
    %2219 = vbcast.lane.b32.xlu0 %v2213, %s2218
    %v2220 = vpop.permute.xlu0 %2219
    %s2222 = sor.u32 256, 16
    %2223 = vbcast.lane.b32.xlu0 %v2213, %s2222
    %v2224 = vpop.permute.xlu0 %2223
    %s2226 = sor.u32 256, 24
    %2227 = vbcast.lane.b32.xlu0 %v2213, %s2226
    %v2228 = vpop.permute.xlu0 %2227
    %v2229 = vmul.f32 %v2083, %v1422
    %v2230 = vmul.f32 %v2087, %v1423
    %v2231 = vmul.f32 %v2091, %v1424
    %v2232 = vmul.f32 %v2095, %v1425
    %v2233 = vmul.f32 %v2102, %v1426
    %v2234 = vmul.f32 %v2106, %v1427
    %v2235 = vmul.f32 %v2110, %v1428
    %v2236 = vmul.f32 %v2114, %v1429
    %v2237 = vmul.f32 %v2121, %v1430
    %v2238 = vmul.f32 %v2125, %v1431
    %v2239 = vmul.f32 %v2129, %v1432
    %v2240 = vmul.f32 %v2133, %v1433
    %v2241 = vmul.f32 %v2140, %v1434
    %v2242 = vmul.f32 %v2144, %v1435
    %v2243 = vmul.f32 %v2148, %v1436
    %v2244 = vmul.f32 %v2152, %v1437
    %v2245 = vmul.f32 %v2159, %v1438
    %v2246 = vmul.f32 %v2163, %v1439
    %v2247 = vmul.f32 %v2167, %v1440
    %v2248 = vmul.f32 %v2171, %v1441
    %v2249 = vmul.f32 %v2178, %v1442
    %v2250 = vmul.f32 %v2182, %v1443
    %v2251 = vmul.f32 %v2186, %v1444
    %v2252 = vmul.f32 %v2190, %v1445
    %v2253 = vmul.f32 %v2197, %v1446
    %v2254 = vmul.f32 %v2201, %v1447
    %v2255 = vmul.f32 %v2205, %v1448
    %v2256 = vmul.f32 %v2209, %v1449
    %v2257 = vmul.f32 %v2216, %v1450
    %v2258 = vmul.f32 %v2220, %v1451
    %v2259 = vmul.f32 %v2224, %v1452
    %v2260 = vmul.f32 %v2228, %v1453
    %2261 = vst.msk [vmem:[#allocation2] sm:$0xff] %vm63, %v2229
    %2262 = vst.msk [vmem:[#allocation2 + $0x8] sm:$0xff] %vm63, %v2230
    %2263 = vst.msk [vmem:[#allocation2 + $0x10] sm:$0xff] %vm63, %v2231
    %2264 = vst.msk [vmem:[#allocation2 + $0x18] sm:$0xff] %vm63, %v2232
    %2265 = vst.msk [vmem:[#allocation2 + $0x20] sm:$0xff] %vm63, %v2233
    %2266 = vst.msk [vmem:[#allocation2 + $0x28] sm:$0xff] %vm63, %v2234
    %2267 = vst.msk [vmem:[#allocation2 + $0x30] sm:$0xff] %vm63, %v2235
    %2268 = vst.msk [vmem:[#allocation2 + $0x38] sm:$0xff] %vm63, %v2236
    %2269 = vst.msk [vmem:[#allocation2 + $0x40] sm:$0xff] %vm63, %v2237
    %2270 = vst.msk [vmem:[#allocation2 + $0x48] sm:$0xff] %vm63, %v2238
    %2271 = vst.msk [vmem:[#allocation2 + $0x50] sm:$0xff] %vm63, %v2239
    %2272 = vst.msk [vmem:[#allocation2 + $0x58] sm:$0xff] %vm63, %v2240
    %2273 = vst.msk [vmem:[#allocation2 + $0x60] sm:$0xff] %vm63, %v2241
    %2274 = vst.msk [vmem:[#allocation2 + $0x68] sm:$0xff] %vm63, %v2242
    %2275 = vst.msk [vmem:[#allocation2 + $0x70] sm:$0xff] %vm63, %v2243
    %2276 = vst.msk [vmem:[#allocation2 + $0x78] sm:$0xff] %vm63, %v2244
    %2277 = vst.msk [vmem:[#allocation2 + $0x80] sm:$0xff] %vm63, %v2245
    %2278 = vst.msk [vmem:[#allocation2 + $0x88] sm:$0xff] %vm63, %v2246
    %2279 = vst.msk [vmem:[#allocation2 + $0x90] sm:$0xff] %vm63, %v2247
    %2280 = vst.msk [vmem:[#allocation2 + $0x98] sm:$0xff] %vm63, %v2248
    %2281 = vst.msk [vmem:[#allocation2 + $0xa0] sm:$0xff] %vm63, %v2249
    %2282 = vst.msk [vmem:[#allocation2 + $0xa8] sm:$0xff] %vm63, %v2250
    %2283 = vst.msk [vmem:[#allocation2 + $0xb0] sm:$0xff] %vm63, %v2251
    %2284 = vst.msk [vmem:[#allocation2 + $0xb8] sm:$0xff] %vm63, %v2252
    %2285 = vst.msk [vmem:[#allocation2 + $0xc0] sm:$0xff] %vm63, %v2253
    %2286 = vst.msk [vmem:[#allocation2 + $0xc8] sm:$0xff] %vm63, %v2254
    %2287 = vst.msk [vmem:[#allocation2 + $0xd0] sm:$0xff] %vm63, %v2255
    %2288 = vst.msk [vmem:[#allocation2 + $0xd8] sm:$0xff] %vm63, %v2256
    %2289 = vst.msk [vmem:[#allocation2 + $0xe0] sm:$0xff] %vm63, %v2257
    %2290 = vst.msk [vmem:[#allocation2 + $0xe8] sm:$0xff] %vm63, %v2258
    %2291 = vst.msk [vmem:[#allocation2 + $0xf0] sm:$0xff] %vm63, %v2259
    %2292 = vst.msk [vmem:[#allocation2 + $0xf8] sm:$0xff] %vm63, %v2260
    %v2293 = vlaneseq
    %v2294 = vshrl.u32 %v2293, 7
    %v2295 = vsub.s32 0, %v2294
    %v2296 = vrot.slane %v697, %v2295
    %2298 = vbcast.lane.b32.xlu0 %v2296, 256
    %v2299 = vpop.permute.xlu0 %2298
    %s2301 = sor.u32 256, 8
    %2302 = vbcast.lane.b32.xlu0 %v2296, %s2301
    %v2303 = vpop.permute.xlu0 %2302
    %s2305 = sor.u32 256, 16
    %2306 = vbcast.lane.b32.xlu0 %v2296, %s2305
    %v2307 = vpop.permute.xlu0 %2306
    %s2309 = sor.u32 256, 24
    %2310 = vbcast.lane.b32.xlu0 %v2296, %s2309
    %v2311 = vpop.permute.xlu0 %2310
    %v2312 = vlaneseq
    %v2313 = vshrl.u32 %v2312, 7
    %v2314 = vsub.s32 1, %v2313
    %v2315 = vrot.slane %v697, %v2314
    %2317 = vbcast.lane.b32.xlu0 %v2315, 256
    %v2318 = vpop.permute.xlu0 %2317
    %s2320 = sor.u32 256, 8
    %2321 = vbcast.lane.b32.xlu0 %v2315, %s2320
    %v2322 = vpop.permute.xlu0 %2321
    %s2324 = sor.u32 256, 16
    %2325 = vbcast.lane.b32.xlu0 %v2315, %s2324
    %v2326 = vpop.permute.xlu0 %2325
    %s2328 = sor.u32 256, 24
    %2329 = vbcast.lane.b32.xlu0 %v2315, %s2328
    %v2330 = vpop.permute.xlu0 %2329
    %v2331 = vlaneseq
    %v2332 = vshrl.u32 %v2331, 7
    %v2333 = vsub.s32 2, %v2332
    %v2334 = vrot.slane %v697, %v2333
    %2336 = vbcast.lane.b32.xlu0 %v2334, 256
    %v2337 = vpop.permute.xlu0 %2336
    %s2339 = sor.u32 256, 8
    %2340 = vbcast.lane.b32.xlu0 %v2334, %s2339
    %v2341 = vpop.permute.xlu0 %2340
    %s2343 = sor.u32 256, 16
    %2344 = vbcast.lane.b32.xlu0 %v2334, %s2343
    %v2345 = vpop.permute.xlu0 %2344
    %s2347 = sor.u32 256, 24
    %2348 = vbcast.lane.b32.xlu0 %v2334, %s2347
    %v2349 = vpop.permute.xlu0 %2348
    %v2350 = vlaneseq
    %v2351 = vshrl.u32 %v2350, 7
    %v2352 = vsub.s32 3, %v2351
    %v2353 = vrot.slane %v697, %v2352
    %2355 = vbcast.lane.b32.xlu0 %v2353, 256
    %v2356 = vpop.permute.xlu0 %2355
    %s2358 = sor.u32 256, 8
    %2359 = vbcast.lane.b32.xlu0 %v2353, %s2358
    %v2360 = vpop.permute.xlu0 %2359
    %s2362 = sor.u32 256, 16
    %2363 = vbcast.lane.b32.xlu0 %v2353, %s2362
    %v2364 = vpop.permute.xlu0 %2363
    %s2366 = sor.u32 256, 24
    %2367 = vbcast.lane.b32.xlu0 %v2353, %s2366
    %v2368 = vpop.permute.xlu0 %2367
    %v2369 = vlaneseq
    %v2370 = vshrl.u32 %v2369, 7
    %v2371 = vsub.s32 4, %v2370
    %v2372 = vrot.slane %v697, %v2371
    %2374 = vbcast.lane.b32.xlu0 %v2372, 256
    %v2375 = vpop.permute.xlu0 %2374
    %s2377 = sor.u32 256, 8
    %2378 = vbcast.lane.b32.xlu0 %v2372, %s2377
    %v2379 = vpop.permute.xlu0 %2378
    %s2381 = sor.u32 256, 16
    %2382 = vbcast.lane.b32.xlu0 %v2372, %s2381
    %v2383 = vpop.permute.xlu0 %2382
    %s2385 = sor.u32 256, 24
    %2386 = vbcast.lane.b32.xlu0 %v2372, %s2385
    %v2387 = vpop.permute.xlu0 %2386
    %v2388 = vlaneseq
    %v2389 = vshrl.u32 %v2388, 7
    %v2390 = vsub.s32 5, %v2389
    %v2391 = vrot.slane %v697, %v2390
    %2393 = vbcast.lane.b32.xlu0 %v2391, 256
    %v2394 = vpop.permute.xlu0 %2393
    %s2396 = sor.u32 256, 8
    %2397 = vbcast.lane.b32.xlu0 %v2391, %s2396
    %v2398 = vpop.permute.xlu0 %2397
    %s2400 = sor.u32 256, 16
    %2401 = vbcast.lane.b32.xlu0 %v2391, %s2400
    %v2402 = vpop.permute.xlu0 %2401
    %s2404 = sor.u32 256, 24
    %2405 = vbcast.lane.b32.xlu0 %v2391, %s2404
    %v2406 = vpop.permute.xlu0 %2405
    %v2407 = vlaneseq
    %v2408 = vshrl.u32 %v2407, 7
    %v2409 = vsub.s32 6, %v2408
    %v2410 = vrot.slane %v697, %v2409
    %2412 = vbcast.lane.b32.xlu0 %v2410, 256
    %v2413 = vpop.permute.xlu0 %2412
    %s2415 = sor.u32 256, 8
    %2416 = vbcast.lane.b32.xlu0 %v2410, %s2415
    %v2417 = vpop.permute.xlu0 %2416
    %s2419 = sor.u32 256, 16
    %2420 = vbcast.lane.b32.xlu0 %v2410, %s2419
    %v2421 = vpop.permute.xlu0 %2420
    %s2423 = sor.u32 256, 24
    %2424 = vbcast.lane.b32.xlu0 %v2410, %s2423
    %v2425 = vpop.permute.xlu0 %2424
    %v2426 = vlaneseq
    %v2427 = vshrl.u32 %v2426, 7
    %v2428 = vsub.s32 7, %v2427
    %v2429 = vrot.slane %v697, %v2428
    %2431 = vbcast.lane.b32.xlu0 %v2429, 256
    %v2432 = vpop.permute.xlu0 %2431
    %s2434 = sor.u32 256, 8
    %2435 = vbcast.lane.b32.xlu0 %v2429, %s2434
    %v2436 = vpop.permute.xlu0 %2435
    %s2438 = sor.u32 256, 16
    %2439 = vbcast.lane.b32.xlu0 %v2429, %s2438
    %v2440 = vpop.permute.xlu0 %2439
    %s2442 = sor.u32 256, 24
    %2443 = vbcast.lane.b32.xlu0 %v2429, %s2442
    %v2444 = vpop.permute.xlu0 %2443
    %v2445 = vmul.f32 %v2299, %v1422
    %v2446 = vmul.f32 %v2303, %v1423
    %v2447 = vmul.f32 %v2307, %v1424
    %v2448 = vmul.f32 %v2311, %v1425
    %v2449 = vmul.f32 %v2318, %v1426
    %v2450 = vmul.f32 %v2322, %v1427
    %v2451 = vmul.f32 %v2326, %v1428
    %v2452 = vmul.f32 %v2330, %v1429
    %v2453 = vmul.f32 %v2337, %v1430
    %v2454 = vmul.f32 %v2341, %v1431
    %v2455 = vmul.f32 %v2345, %v1432
    %v2456 = vmul.f32 %v2349, %v1433
    %v2457 = vmul.f32 %v2356, %v1434
    %v2458 = vmul.f32 %v2360, %v1435
    %v2459 = vmul.f32 %v2364, %v1436
    %v2460 = vmul.f32 %v2368, %v1437
    %v2461 = vmul.f32 %v2375, %v1438
    %v2462 = vmul.f32 %v2379, %v1439
    %v2463 = vmul.f32 %v2383, %v1440
    %v2464 = vmul.f32 %v2387, %v1441
    %v2465 = vmul.f32 %v2394, %v1442
    %v2466 = vmul.f32 %v2398, %v1443
    %v2467 = vmul.f32 %v2402, %v1444
    %v2468 = vmul.f32 %v2406, %v1445
    %v2469 = vmul.f32 %v2413, %v1446
    %v2470 = vmul.f32 %v2417, %v1447
    %v2471 = vmul.f32 %v2421, %v1448
    %v2472 = vmul.f32 %v2425, %v1449
    %v2473 = vmul.f32 %v2432, %v1450
    %v2474 = vmul.f32 %v2436, %v1451
    %v2475 = vmul.f32 %v2440, %v1452
    %v2476 = vmul.f32 %v2444, %v1453
    %vm2477 = vcmask 523520
    %2478 = vst.msk [vmem:[#allocation2] sm:$0xff] %vm2477, %v2445
    %2479 = vst.msk [vmem:[#allocation2 + $0x8] sm:$0xff] %vm2477, %v2446
    %2480 = vst.msk [vmem:[#allocation2 + $0x10] sm:$0xff] %vm2477, %v2447
    %2481 = vst.msk [vmem:[#allocation2 + $0x18] sm:$0xff] %vm2477, %v2448
    %2482 = vst.msk [vmem:[#allocation2 + $0x20] sm:$0xff] %vm2477, %v2449
    %2483 = vst.msk [vmem:[#allocation2 + $0x28] sm:$0xff] %vm2477, %v2450
    %2484 = vst.msk [vmem:[#allocation2 + $0x30] sm:$0xff] %vm2477, %v2451
    %2485 = vst.msk [vmem:[#allocation2 + $0x38] sm:$0xff] %vm2477, %v2452
    %2486 = vst.msk [vmem:[#allocation2 + $0x40] sm:$0xff] %vm2477, %v2453
    %2487 = vst.msk [vmem:[#allocation2 + $0x48] sm:$0xff] %vm2477, %v2454
    %2488 = vst.msk [vmem:[#allocation2 + $0x50] sm:$0xff] %vm2477, %v2455
    %2489 = vst.msk [vmem:[#allocation2 + $0x58] sm:$0xff] %vm2477, %v2456
    %2490 = vst.msk [vmem:[#allocation2 + $0x60] sm:$0xff] %vm2477, %v2457
    %2491 = vst.msk [vmem:[#allocation2 + $0x68] sm:$0xff] %vm2477, %v2458
    %2492 = vst.msk [vmem:[#allocation2 + $0x70] sm:$0xff] %vm2477, %v2459
    %2493 = vst.msk [vmem:[#allocation2 + $0x78] sm:$0xff] %vm2477, %v2460
    %2494 = vst.msk [vmem:[#allocation2 + $0x80] sm:$0xff] %vm2477, %v2461
    %2495 = vst.msk [vmem:[#allocation2 + $0x88] sm:$0xff] %vm2477, %v2462
    %2496 = vst.msk [vmem:[#allocation2 + $0x90] sm:$0xff] %vm2477, %v2463
    %2497 = vst.msk [vmem:[#allocation2 + $0x98] sm:$0xff] %vm2477, %v2464
    %2498 = vst.msk [vmem:[#allocation2 + $0xa0] sm:$0xff] %vm2477, %v2465
    %2499 = vst.msk [vmem:[#allocation2 + $0xa8] sm:$0xff] %vm2477, %v2466
    %2500 = vst.msk [vmem:[#allocation2 + $0xb0] sm:$0xff] %vm2477, %v2467
    %2501 = vst.msk [vmem:[#allocation2 + $0xb8] sm:$0xff] %vm2477, %v2468
    %2502 = vst.msk [vmem:[#allocation2 + $0xc0] sm:$0xff] %vm2477, %v2469
    %2503 = vst.msk [vmem:[#allocation2 + $0xc8] sm:$0xff] %vm2477, %v2470
    %2504 = vst.msk [vmem:[#allocation2 + $0xd0] sm:$0xff] %vm2477, %v2471
    %2505 = vst.msk [vmem:[#allocation2 + $0xd8] sm:$0xff] %vm2477, %v2472
    %2506 = vst.msk [vmem:[#allocation2 + $0xe0] sm:$0xff] %vm2477, %v2473
    %2507 = vst.msk [vmem:[#allocation2 + $0xe8] sm:$0xff] %vm2477, %v2474
    %2508 = vst.msk [vmem:[#allocation2 + $0xf0] sm:$0xff] %vm2477, %v2475
    %2509 = vst.msk [vmem:[#allocation2 + $0xf8] sm:$0xff] %vm2477, %v2476
    %v2510 = vlaneseq
    %v2511 = vshrl.u32 %v2510, 7
    %v2512 = vsub.s32 0, %v2511
    %v2513 = vrot.slane %v759, %v2512
    %s2515 = sor.u32 256, 64
    %2516 = vbcast.lane.b32.xlu0 %v2513, %s2515
    %v2517 = vpop.permute.xlu0 %2516
    %s2519 = sor.u32 256, 72
    %2520 = vbcast.lane.b32.xlu0 %v2513, %s2519
    %v2521 = vpop.permute.xlu0 %2520
    %s2523 = sor.u32 256, 80
    %2524 = vbcast.lane.b32.xlu0 %v2513, %s2523
    %v2525 = vpop.permute.xlu0 %2524
    %s2527 = sor.u32 256, 88
    %2528 = vbcast.lane.b32.xlu0 %v2513, %s2527
    %v2529 = vpop.permute.xlu0 %2528
    %v2530 = vlaneseq
    %v2531 = vshrl.u32 %v2530, 7
    %v2532 = vsub.s32 1, %v2531
    %v2533 = vrot.slane %v759, %v2532
    %s2535 = sor.u32 256, 64
    %2536 = vbcast.lane.b32.xlu0 %v2533, %s2535
    %v2537 = vpop.permute.xlu0 %2536
    %s2539 = sor.u32 256, 72
    %2540 = vbcast.lane.b32.xlu0 %v2533, %s2539
    %v2541 = vpop.permute.xlu0 %2540
    %s2543 = sor.u32 256, 80
    %2544 = vbcast.lane.b32.xlu0 %v2533, %s2543
    %v2545 = vpop.permute.xlu0 %2544
    %s2547 = sor.u32 256, 88
    %2548 = vbcast.lane.b32.xlu0 %v2533, %s2547
    %v2549 = vpop.permute.xlu0 %2548
    %v2550 = vlaneseq
    %v2551 = vshrl.u32 %v2550, 7
    %v2552 = vsub.s32 2, %v2551
    %v2553 = vrot.slane %v759, %v2552
    %s2555 = sor.u32 256, 64
    %2556 = vbcast.lane.b32.xlu0 %v2553, %s2555
    %v2557 = vpop.permute.xlu0 %2556
    %s2559 = sor.u32 256, 72
    %2560 = vbcast.lane.b32.xlu0 %v2553, %s2559
    %v2561 = vpop.permute.xlu0 %2560
    %s2563 = sor.u32 256, 80
    %2564 = vbcast.lane.b32.xlu0 %v2553, %s2563
    %v2565 = vpop.permute.xlu0 %2564
    %s2567 = sor.u32 256, 88
    %2568 = vbcast.lane.b32.xlu0 %v2553, %s2567
    %v2569 = vpop.permute.xlu0 %2568
    %v2570 = vlaneseq
    %v2571 = vshrl.u32 %v2570, 7
    %v2572 = vsub.s32 3, %v2571
    %v2573 = vrot.slane %v759, %v2572
    %s2575 = sor.u32 256, 64
    %2576 = vbcast.lane.b32.xlu0 %v2573, %s2575
    %v2577 = vpop.permute.xlu0 %2576
    %s2579 = sor.u32 256, 72
    %2580 = vbcast.lane.b32.xlu0 %v2573, %s2579
    %v2581 = vpop.permute.xlu0 %2580
    %s2583 = sor.u32 256, 80
    %2584 = vbcast.lane.b32.xlu0 %v2573, %s2583
    %v2585 = vpop.permute.xlu0 %2584
    %s2587 = sor.u32 256, 88
    %2588 = vbcast.lane.b32.xlu0 %v2573, %s2587
    %v2589 = vpop.permute.xlu0 %2588
    %v2590 = vlaneseq
    %v2591 = vshrl.u32 %v2590, 7
    %v2592 = vsub.s32 4, %v2591
    %v2593 = vrot.slane %v759, %v2592
    %s2595 = sor.u32 256, 64
    %2596 = vbcast.lane.b32.xlu0 %v2593, %s2595
    %v2597 = vpop.permute.xlu0 %2596
    %s2599 = sor.u32 256, 72
    %2600 = vbcast.lane.b32.xlu0 %v2593, %s2599
    %v2601 = vpop.permute.xlu0 %2600
    %s2603 = sor.u32 256, 80
    %2604 = vbcast.lane.b32.xlu0 %v2593, %s2603
    %v2605 = vpop.permute.xlu0 %2604
    %s2607 = sor.u32 256, 88
    %2608 = vbcast.lane.b32.xlu0 %v2593, %s2607
    %v2609 = vpop.permute.xlu0 %2608
    %v2610 = vlaneseq
    %v2611 = vshrl.u32 %v2610, 7
    %v2612 = vsub.s32 5, %v2611
    %v2613 = vrot.slane %v759, %v2612
    %s2615 = sor.u32 256, 64
    %2616 = vbcast.lane.b32.xlu0 %v2613, %s2615
    %v2617 = vpop.permute.xlu0 %2616
    %s2619 = sor.u32 256, 72
    %2620 = vbcast.lane.b32.xlu0 %v2613, %s2619
    %v2621 = vpop.permute.xlu0 %2620
    %s2623 = sor.u32 256, 80
    %2624 = vbcast.lane.b32.xlu0 %v2613, %s2623
    %v2625 = vpop.permute.xlu0 %2624
    %s2627 = sor.u32 256, 88
    %2628 = vbcast.lane.b32.xlu0 %v2613, %s2627
    %v2629 = vpop.permute.xlu0 %2628
    %v2630 = vlaneseq
    %v2631 = vshrl.u32 %v2630, 7
    %v2632 = vsub.s32 6, %v2631
    %v2633 = vrot.slane %v759, %v2632
    %s2635 = sor.u32 256, 64
    %2636 = vbcast.lane.b32.xlu0 %v2633, %s2635
    %v2637 = vpop.permute.xlu0 %2636
    %s2639 = sor.u32 256, 72
    %2640 = vbcast.lane.b32.xlu0 %v2633, %s2639
    %v2641 = vpop.permute.xlu0 %2640
    %s2643 = sor.u32 256, 80
    %2644 = vbcast.lane.b32.xlu0 %v2633, %s2643
    %v2645 = vpop.permute.xlu0 %2644
    %s2647 = sor.u32 256, 88
    %2648 = vbcast.lane.b32.xlu0 %v2633, %s2647
    %v2649 = vpop.permute.xlu0 %2648
    %v2650 = vlaneseq
    %v2651 = vshrl.u32 %v2650, 7
    %v2652 = vsub.s32 7, %v2651
    %v2653 = vrot.slane %v759, %v2652
    %s2655 = sor.u32 256, 64
    %2656 = vbcast.lane.b32.xlu0 %v2653, %s2655
    %v2657 = vpop.permute.xlu0 %2656
    %s2659 = sor.u32 256, 72
    %2660 = vbcast.lane.b32.xlu0 %v2653, %s2659
    %v2661 = vpop.permute.xlu0 %2660
    %s2663 = sor.u32 256, 80
    %2664 = vbcast.lane.b32.xlu0 %v2653, %s2663
    %v2665 = vpop.permute.xlu0 %2664
    %s2667 = sor.u32 256, 88
    %2668 = vbcast.lane.b32.xlu0 %v2653, %s2667
    %v2669 = vpop.permute.xlu0 %2668
    %v2670 = vmul.f32 %v2517, %v2045
    %v2671 = vmul.f32 %v2521, %v2046
    %v2672 = vmul.f32 %v2525, %v2047
    %v2673 = vmul.f32 %v2529, %v2048
    %v2674 = vmul.f32 %v2537, %v2049
    %v2675 = vmul.f32 %v2541, %v2050
    %v2676 = vmul.f32 %v2545, %v2051
    %v2677 = vmul.f32 %v2549, %v2052
    %v2678 = vmul.f32 %v2557, %v2053
    %v2679 = vmul.f32 %v2561, %v2054
    %v2680 = vmul.f32 %v2565, %v2055
    %v2681 = vmul.f32 %v2569, %v2056
    %v2682 = vmul.f32 %v2577, %v2057
    %v2683 = vmul.f32 %v2581, %v2058
    %v2684 = vmul.f32 %v2585, %v2059
    %v2685 = vmul.f32 %v2589, %v2060
    %v2686 = vmul.f32 %v2597, %v2061
    %v2687 = vmul.f32 %v2601, %v2062
    %v2688 = vmul.f32 %v2605, %v2063
    %v2689 = vmul.f32 %v2609, %v2064
    %v2690 = vmul.f32 %v2617, %v2065
    %v2691 = vmul.f32 %v2621, %v2066
    %v2692 = vmul.f32 %v2625, %v2067
    %v2693 = vmul.f32 %v2629, %v2068
    %v2694 = vmul.f32 %v2637, %v2069
    %v2695 = vmul.f32 %v2641, %v2070
    %v2696 = vmul.f32 %v2645, %v2071
    %v2697 = vmul.f32 %v2649, %v2072
    %v2698 = vmul.f32 %v2657, %v2073
    %v2699 = vmul.f32 %v2661, %v2074
    %v2700 = vmul.f32 %v2665, %v2075
    %v2701 = vmul.f32 %v2669, %v2076
    %2734 = vrot.lane.b32.xlu0 %v2670, 64
    %v2735 = vpop.permute.xlu0 %2734
    %2736 = vrot.lane.b32.xlu0 %v2671, 64
    %v2737 = vpop.permute.xlu0 %2736
    %2738 = vrot.lane.b32.xlu0 %v2672, 64
    %v2739 = vpop.permute.xlu0 %2738
    %2740 = vrot.lane.b32.xlu0 %v2673, 64
    %v2741 = vpop.permute.xlu0 %2740
    %2742 = vrot.lane.b32.xlu0 %v2674, 64
    %v2743 = vpop.permute.xlu0 %2742
    %2744 = vrot.lane.b32.xlu0 %v2675, 64
    %v2745 = vpop.permute.xlu0 %2744
    %2746 = vrot.lane.b32.xlu0 %v2676, 64
    %v2747 = vpop.permute.xlu0 %2746
    %2748 = vrot.lane.b32.xlu0 %v2677, 64
    %v2749 = vpop.permute.xlu0 %2748
    %2750 = vrot.lane.b32.xlu0 %v2678, 64
    %v2751 = vpop.permute.xlu0 %2750
    %2752 = vrot.lane.b32.xlu0 %v2679, 64
    %v2753 = vpop.permute.xlu0 %2752
    %2754 = vrot.lane.b32.xlu0 %v2680, 64
    %v2755 = vpop.permute.xlu0 %2754
    %2756 = vrot.lane.b32.xlu0 %v2681, 64
    %v2757 = vpop.permute.xlu0 %2756
    %2758 = vrot.lane.b32.xlu0 %v2682, 64
    %v2759 = vpop.permute.xlu0 %2758
    %2760 = vrot.lane.b32.xlu0 %v2683, 64
    %v2761 = vpop.permute.xlu0 %2760
    %2762 = vrot.lane.b32.xlu0 %v2684, 64
    %v2763 = vpop.permute.xlu0 %2762
    %2764 = vrot.lane.b32.xlu0 %v2685, 64
    %v2765 = vpop.permute.xlu0 %2764
    %2766 = vrot.lane.b32.xlu0 %v2686, 64
    %v2767 = vpop.permute.xlu0 %2766
    %2768 = vrot.lane.b32.xlu0 %v2687, 64
    %v2769 = vpop.permute.xlu0 %2768
    %2770 = vrot.lane.b32.xlu0 %v2688, 64
    %v2771 = vpop.permute.xlu0 %2770
    %2772 = vrot.lane.b32.xlu0 %v2689, 64
    %v2773 = vpop.permute.xlu0 %2772
    %2774 = vrot.lane.b32.xlu0 %v2690, 64
    %v2775 = vpop.permute.xlu0 %2774
    %2776 = vrot.lane.b32.xlu0 %v2691, 64
    %v2777 = vpop.permute.xlu0 %2776
    %2778 = vrot.lane.b32.xlu0 %v2692, 64
    %v2779 = vpop.permute.xlu0 %2778
    %2780 = vrot.lane.b32.xlu0 %v2693, 64
    %v2781 = vpop.permute.xlu0 %2780
    %2782 = vrot.lane.b32.xlu0 %v2694, 64
    %v2783 = vpop.permute.xlu0 %2782
    %2784 = vrot.lane.b32.xlu0 %v2695, 64
    %v2785 = vpop.permute.xlu0 %2784
    %2786 = vrot.lane.b32.xlu0 %v2696, 64
    %v2787 = vpop.permute.xlu0 %2786
    %2788 = vrot.lane.b32.xlu0 %v2697, 64
    %v2789 = vpop.permute.xlu0 %2788
    %2790 = vrot.lane.b32.xlu0 %v2698, 64
    %v2791 = vpop.permute.xlu0 %2790
    %2792 = vrot.lane.b32.xlu0 %v2699, 64
    %v2793 = vpop.permute.xlu0 %2792
    %2794 = vrot.lane.b32.xlu0 %v2700, 64
    %v2795 = vpop.permute.xlu0 %2794
    %2796 = vrot.lane.b32.xlu0 %v2701, 64
    %v2797 = vpop.permute.xlu0 %2796
    %vm2830 = vcmask 785920
    %2831 = vst.msk [vmem:[#allocation2] sm:$0xff] %vm2830, %v2735
    %2832 = vst.msk [vmem:[#allocation2 + $0x8] sm:$0xff] %vm2830, %v2737
    %2833 = vst.msk [vmem:[#allocation2 + $0x10] sm:$0xff] %vm2830, %v2739
    %2834 = vst.msk [vmem:[#allocation2 + $0x18] sm:$0xff] %vm2830, %v2741
    %2835 = vst.msk [vmem:[#allocation2 + $0x20] sm:$0xff] %vm2830, %v2743
    %2836 = vst.msk [vmem:[#allocation2 + $0x28] sm:$0xff] %vm2830, %v2745
    %2837 = vst.msk [vmem:[#allocation2 + $0x30] sm:$0xff] %vm2830, %v2747
    %2838 = vst.msk [vmem:[#allocation2 + $0x38] sm:$0xff] %vm2830, %v2749
    %2839 = vst.msk [vmem:[#allocation2 + $0x40] sm:$0xff] %vm2830, %v2751
    %2840 = vst.msk [vmem:[#allocation2 + $0x48] sm:$0xff] %vm2830, %v2753
    %2841 = vst.msk [vmem:[#allocation2 + $0x50] sm:$0xff] %vm2830, %v2755
    %2842 = vst.msk [vmem:[#allocation2 + $0x58] sm:$0xff] %vm2830, %v2757
    %2843 = vst.msk [vmem:[#allocation2 + $0x60] sm:$0xff] %vm2830, %v2759
    %2844 = vst.msk [vmem:[#allocation2 + $0x68] sm:$0xff] %vm2830, %v2761
    %2845 = vst.msk [vmem:[#allocation2 + $0x70] sm:$0xff] %vm2830, %v2763
    %2846 = vst.msk [vmem:[#allocation2 + $0x78] sm:$0xff] %vm2830, %v2765
    %2847 = vst.msk [vmem:[#allocation2 + $0x80] sm:$0xff] %vm2830, %v2767
    %2848 = vst.msk [vmem:[#allocation2 + $0x88] sm:$0xff] %vm2830, %v2769
    %2849 = vst.msk [vmem:[#allocation2 + $0x90] sm:$0xff] %vm2830, %v2771
    %2850 = vst.msk [vmem:[#allocation2 + $0x98] sm:$0xff] %vm2830, %v2773
    %2851 = vst.msk [vmem:[#allocation2 + $0xa0] sm:$0xff] %vm2830, %v2775
    %2852 = vst.msk [vmem:[#allocation2 + $0xa8] sm:$0xff] %vm2830, %v2777
    %2853 = vst.msk [vmem:[#allocation2 + $0xb0] sm:$0xff] %vm2830, %v2779
    %2854 = vst.msk [vmem:[#allocation2 + $0xb8] sm:$0xff] %vm2830, %v2781
    %2855 = vst.msk [vmem:[#allocation2 + $0xc0] sm:$0xff] %vm2830, %v2783
    %2856 = vst.msk [vmem:[#allocation2 + $0xc8] sm:$0xff] %vm2830, %v2785
    %2857 = vst.msk [vmem:[#allocation2 + $0xd0] sm:$0xff] %vm2830, %v2787
    %2858 = vst.msk [vmem:[#allocation2 + $0xd8] sm:$0xff] %vm2830, %v2789
    %2859 = vst.msk [vmem:[#allocation2 + $0xe0] sm:$0xff] %vm2830, %v2791
    %2860 = vst.msk [vmem:[#allocation2 + $0xe8] sm:$0xff] %vm2830, %v2793
    %2861 = vst.msk [vmem:[#allocation2 + $0xf0] sm:$0xff] %vm2830, %v2795
    %2862 = vst.msk [vmem:[#allocation2 + $0xf8] sm:$0xff] %vm2830, %v2797
    %vm2863 = vcmask 1048320
    %2864 = vst.msk [vmem:[#allocation2] sm:$0xff] %vm2863, 0.0
    %2865 = vst.msk [vmem:[#allocation2 + $0x8] sm:$0xff] %vm2863, 0.0
    %2866 = vst.msk [vmem:[#allocation2 + $0x10] sm:$0xff] %vm2863, 0.0
    %2867 = vst.msk [vmem:[#allocation2 + $0x18] sm:$0xff] %vm2863, 0.0
    %2868 = vst.msk [vmem:[#allocation2 + $0x20] sm:$0xff] %vm2863, 0.0
    %2869 = vst.msk [vmem:[#allocation2 + $0x28] sm:$0xff] %vm2863, 0.0
    %2870 = vst.msk [vmem:[#allocation2 + $0x30] sm:$0xff] %vm2863, 0.0
    %2871 = vst.msk [vmem:[#allocation2 + $0x38] sm:$0xff] %vm2863, 0.0
    %2872 = vst.msk [vmem:[#allocation2 + $0x40] sm:$0xff] %vm2863, 0.0
    %2873 = vst.msk [vmem:[#allocation2 + $0x48] sm:$0xff] %vm2863, 0.0
    %2874 = vst.msk [vmem:[#allocation2 + $0x50] sm:$0xff] %vm2863, 0.0
    %2875 = vst.msk [vmem:[#allocation2 + $0x58] sm:$0xff] %vm2863, 0.0
    %2876 = vst.msk [vmem:[#allocation2 + $0x60] sm:$0xff] %vm2863, 0.0
    %2877 = vst.msk [vmem:[#allocation2 + $0x68] sm:$0xff] %vm2863, 0.0
    %2878 = vst.msk [vmem:[#allocation2 + $0x70] sm:$0xff] %vm2863, 0.0
    %2879 = vst.msk [vmem:[#allocation2 + $0x78] sm:$0xff] %vm2863, 0.0
    %2880 = vst.msk [vmem:[#allocation2 + $0x80] sm:$0xff] %vm2863, 0.0
    %2881 = vst.msk [vmem:[#allocation2 + $0x88] sm:$0xff] %vm2863, 0.0
    %2882 = vst.msk [vmem:[#allocation2 + $0x90] sm:$0xff] %vm2863, 0.0
    %2883 = vst.msk [vmem:[#allocation2 + $0x98] sm:$0xff] %vm2863, 0.0
    %2884 = vst.msk [vmem:[#allocation2 + $0xa0] sm:$0xff] %vm2863, 0.0
    %2885 = vst.msk [vmem:[#allocation2 + $0xa8] sm:$0xff] %vm2863, 0.0
    %2886 = vst.msk [vmem:[#allocation2 + $0xb0] sm:$0xff] %vm2863, 0.0
    %2887 = vst.msk [vmem:[#allocation2 + $0xb8] sm:$0xff] %vm2863, 0.0
    %2888 = vst.msk [vmem:[#allocation2 + $0xc0] sm:$0xff] %vm2863, 0.0
    %2889 = vst.msk [vmem:[#allocation2 + $0xc8] sm:$0xff] %vm2863, 0.0
    %2890 = vst.msk [vmem:[#allocation2 + $0xd0] sm:$0xff] %vm2863, 0.0
    %2891 = vst.msk [vmem:[#allocation2 + $0xd8] sm:$0xff] %vm2863, 0.0
    %2892 = vst.msk [vmem:[#allocation2 + $0xe0] sm:$0xff] %vm2863, 0.0
    %2893 = vst.msk [vmem:[#allocation2 + $0xe8] sm:$0xff] %vm2863, 0.0
    %2894 = vst.msk [vmem:[#allocation2 + $0xf0] sm:$0xff] %vm2863, 0.0
    %2895 = vst.msk [vmem:[#allocation2 + $0xf8] sm:$0xff] %vm2863, 0.0
    %v2896 = vld [vmem:[#allocation2] sm:$0xff]
    %v2897 = vld [vmem:[#allocation2 + $0x8] sm:$0xff]
    %v2898 = vld [vmem:[#allocation2 + $0x10] sm:$0xff]
    %v2899 = vld [vmem:[#allocation2 + $0x18] sm:$0xff]
    %v2900 = vld [vmem:[#allocation2 + $0x20] sm:$0xff]
    %v2901 = vld [vmem:[#allocation2 + $0x28] sm:$0xff]
    %v2902 = vld [vmem:[#allocation2 + $0x30] sm:$0xff]
    %v2903 = vld [vmem:[#allocation2 + $0x38] sm:$0xff]
    %v2904 = vld [vmem:[#allocation2 + $0x40] sm:$0xff]
    %v2905 = vld [vmem:[#allocation2 + $0x48] sm:$0xff]
    %v2906 = vld [vmem:[#allocation2 + $0x50] sm:$0xff]
    %v2907 = vld [vmem:[#allocation2 + $0x58] sm:$0xff]
    %v2908 = vld [vmem:[#allocation2 + $0x60] sm:$0xff]
    %v2909 = vld [vmem:[#allocation2 + $0x68] sm:$0xff]
    %v2910 = vld [vmem:[#allocation2 + $0x70] sm:$0xff]
    %v2911 = vld [vmem:[#allocation2 + $0x78] sm:$0xff]
    %v2912 = vld [vmem:[#allocation2 + $0x80] sm:$0xff]
    %v2913 = vld [vmem:[#allocation2 + $0x88] sm:$0xff]
    %v2914 = vld [vmem:[#allocation2 + $0x90] sm:$0xff]
    %v2915 = vld [vmem:[#allocation2 + $0x98] sm:$0xff]
    %v2916 = vld [vmem:[#allocation2 + $0xa0] sm:$0xff]
    %v2917 = vld [vmem:[#allocation2 + $0xa8] sm:$0xff]
    %v2918 = vld [vmem:[#allocation2 + $0xb0] sm:$0xff]
    %v2919 = vld [vmem:[#allocation2 + $0xb8] sm:$0xff]
    %v2920 = vld [vmem:[#allocation2 + $0xc0] sm:$0xff]
    %v2921 = vld [vmem:[#allocation2 + $0xc8] sm:$0xff]
    %v2922 = vld [vmem:[#allocation2 + $0xd0] sm:$0xff]
    %v2923 = vld [vmem:[#allocation2 + $0xd8] sm:$0xff]
    %v2924 = vld [vmem:[#allocation2 + $0xe0] sm:$0xff]
    %v2925 = vld [vmem:[#allocation2 + $0xe8] sm:$0xff]
    %v2926 = vld [vmem:[#allocation2 + $0xf0] sm:$0xff]
    %v2927 = vld [vmem:[#allocation2 + $0xf8] sm:$0xff]
    %v2928 = vld [vmem:[#allocation6 + $0xc0] sm:$0xff]
    %v2929 = vld [vmem:[#allocation6 + $0xc8] sm:$0xff]
    %v2930 = vld [vmem:[#allocation6 + $0xd0] sm:$0xff]
    %v2931 = vld [vmem:[#allocation6 + $0xd8] sm:$0xff]
    %v2932 = vld [vmem:[#allocation6 + $0xe0] sm:$0xff]
    %v2933 = vld [vmem:[#allocation6 + $0xe8] sm:$0xff]
    %v2934 = vld [vmem:[#allocation6 + $0xf0] sm:$0xff]
    %v2935 = vld [vmem:[#allocation6 + $0xf8] sm:$0xff]
    %v2936 = vld [vmem:[#allocation6 + $0x100] sm:$0xff]
    %v2937 = vld [vmem:[#allocation6 + $0x108] sm:$0xff]
    %v2938 = vld [vmem:[#allocation6 + $0x110] sm:$0xff]
    %v2939 = vld [vmem:[#allocation6 + $0x118] sm:$0xff]
    %v2940 = vld [vmem:[#allocation6 + $0x120] sm:$0xff]
    %v2941 = vld [vmem:[#allocation6 + $0x128] sm:$0xff]
    %v2942 = vld [vmem:[#allocation6 + $0x130] sm:$0xff]
    %v2943 = vld [vmem:[#allocation6 + $0x138] sm:$0xff]
    %2944 = vmatprep.subr.mxu0 0.0
    %2945 = vmatpush1.msra.mxu0 %v2943
    %2946 = vmatprep.subr.mxu0 0.0
    %2947 = vmatpush1.msra.mxu0 %v2942
    %2948 = vmatprep.subr.mxu0 0.0
    %2949 = vmatpush1.msra.mxu0 %v2941
    %2950 = vmatprep.subr.mxu0 0.0
    %2951 = vmatpush1.msra.mxu0 %v2940
    %2952 = vmatprep.subr.mxu0 0.0
    %2953 = vmatpush1.msra.mxu0 %v2939
    %2954 = vmatprep.subr.mxu0 0.0
    %2955 = vmatpush1.msra.mxu0 %v2938
    %2956 = vmatprep.subr.mxu0 0.0
    %2957 = vmatpush1.msra.mxu0 %v2937
    %2958 = vmatprep.subr.mxu0 0.0
    %2959 = vmatpush1.msra.mxu0 %v2936
    %2960 = vmatprep.subr.mxu0 0.0
    %2961 = vmatpush1.msra.mxu0 %v2935
    %2962 = vmatprep.subr.mxu0 0.0
    %2963 = vmatpush1.msra.mxu0 %v2934
    %2964 = vmatprep.subr.mxu0 0.0
    %2965 = vmatpush1.msra.mxu0 %v2933
    %2966 = vmatprep.subr.mxu0 0.0
    %2967 = vmatpush1.msra.mxu0 %v2932
    %2968 = vmatprep.subr.mxu0 0.0
    %2969 = vmatpush1.msra.mxu0 %v2931
    %2970 = vmatprep.subr.mxu0 0.0
    %2971 = vmatpush1.msra.mxu0 %v2930
    %2972 = vmatprep.subr.mxu0 0.0
    %2973 = vmatpush1.msra.mxu0 %v2929
    %2974 = vmatprep.subr.mxu0 0.0
    %2975 = vmatpush1.msra.mxu0 %v2928
    %2976 = vmatprep.subr.mxu0 0.0
    %2977 = vmatpush2.msra.mxu0 0.0
    %2978 = vmatprep.subr.mxu0 0.0
    %2979 = vmatpush2.msra.mxu0 0.0
    %2980 = vmatprep.subr.mxu0 0.0
    %2981 = vmatpush2.msra.mxu0 0.0
    %2982 = vmatprep.subr.mxu0 0.0
    %2983 = vmatpush2.msra.mxu0 0.0
    %2984 = vmatprep.subr.mxu0 0.0
    %2985 = vmatpush2.msra.mxu0 0.0
    %2986 = vmatprep.subr.mxu0 0.0
    %2987 = vmatpush2.msra.mxu0 0.0
    %2988 = vmatprep.subr.mxu0 0.0
    %2989 = vmatpush2.msra.mxu0 0.0
    %2990 = vmatprep.subr.mxu0 0.0
    %2991 = vmatpush2.msra.mxu0 0.0
    %2992 = vmatprep.subr.mxu0 0.0
    %2993 = vmatpush2.msra.mxu0 0.0
    %2994 = vmatprep.subr.mxu0 0.0
    %2995 = vmatpush2.msra.mxu0 0.0
    %2996 = vmatprep.subr.mxu0 0.0
    %2997 = vmatpush2.msra.mxu0 0.0
    %2998 = vmatprep.subr.mxu0 0.0
    %2999 = vmatpush2.msra.mxu0 0.0
    %3000 = vmatprep.subr.mxu0 0.0
    %3001 = vmatpush2.msra.mxu0 0.0
    %3002 = vmatprep.subr.mxu0 0.0
    %3003 = vmatpush2.msra.mxu0 0.0
    %3004 = vmatprep.subr.mxu0 0.0
    %3005 = vmatpush2.msra.mxu0 0.0
    %3006 = vmatprep.subr.mxu0 0.0
    %3007 = vmatpush2.msra.mxu0 0.0
    %3008 = vmatprep.mubr.f32.mxu0 0.0
    %3009 = vmatmul.mubr.f32.gmra.mxu0 %v2896
    %v3010 = vpop.f32.mrf.mxu0
    %v3011 = vadd.f32 0.0, %v3010
    %v3012 = vpop.f32.mrf.mxu0
    %3013 = vmatprep.mubr.f32.mxu0 0.0
    %3014 = vmatmul.mubr.f32.gmra.mxu0 %v2897
    %v3015 = vpop.f32.mrf.mxu0
    %v3016 = vadd.f32 0.0, %v3015
    %v3017 = vpop.f32.mrf.mxu0
    %3018 = vmatprep.mubr.f32.mxu0 0.0
    %3019 = vmatmul.mubr.f32.gmra.mxu0 %v2898
    %v3020 = vpop.f32.mrf.mxu0
    %v3021 = vadd.f32 0.0, %v3020
    %v3022 = vpop.f32.mrf.mxu0
    %3023 = vmatprep.mubr.f32.mxu0 0.0
    %3024 = vmatmul.mubr.f32.gmra.mxu0 %v2899
    %v3025 = vpop.f32.mrf.mxu0
    %v3026 = vadd.f32 0.0, %v3025
    %v3027 = vpop.f32.mrf.mxu0
    %3028 = vmatprep.mubr.f32.mxu0 0.0
    %3029 = vmatmul.mubr.f32.gmra.mxu0 %v2900
    %v3030 = vpop.f32.mrf.mxu0
    %v3031 = vadd.f32 0.0, %v3030
    %v3032 = vpop.f32.mrf.mxu0
    %3033 = vmatprep.mubr.f32.mxu0 0.0
    %3034 = vmatmul.mubr.f32.gmra.mxu0 %v2901
    %v3035 = vpop.f32.mrf.mxu0
    %v3036 = vadd.f32 0.0, %v3035
    %v3037 = vpop.f32.mrf.mxu0
    %3038 = vmatprep.mubr.f32.mxu0 0.0
    %3039 = vmatmul.mubr.f32.gmra.mxu0 %v2902
    %v3040 = vpop.f32.mrf.mxu0
    %v3041 = vadd.f32 0.0, %v3040
    %v3042 = vpop.f32.mrf.mxu0
    %3043 = vmatprep.mubr.f32.mxu0 0.0
    %3044 = vmatmul.mubr.f32.gmra.mxu0 %v2903
    %v3045 = vpop.f32.mrf.mxu0
    %v3046 = vadd.f32 0.0, %v3045
    %v3047 = vpop.f32.mrf.mxu0
    %3048 = vmatprep.mubr.f32.mxu0 0.0
    %3049 = vmatmul.mubr.f32.gmra.mxu0 %v2904
    %v3050 = vpop.f32.mrf.mxu0
    %v3051 = vadd.f32 0.0, %v3050
    %v3052 = vpop.f32.mrf.mxu0
    %3053 = vmatprep.mubr.f32.mxu0 0.0
    %3054 = vmatmul.mubr.f32.gmra.mxu0 %v2905
    %v3055 = vpop.f32.mrf.mxu0
    %v3056 = vadd.f32 0.0, %v3055
    %v3057 = vpop.f32.mrf.mxu0
    %3058 = vmatprep.mubr.f32.mxu0 0.0
    %3059 = vmatmul.mubr.f32.gmra.mxu0 %v2906
    %v3060 = vpop.f32.mrf.mxu0
    %v3061 = vadd.f32 0.0, %v3060
    %v3062 = vpop.f32.mrf.mxu0
    %3063 = vmatprep.mubr.f32.mxu0 0.0
    %3064 = vmatmul.mubr.f32.gmra.mxu0 %v2907
    %v3065 = vpop.f32.mrf.mxu0
    %v3066 = vadd.f32 0.0, %v3065
    %v3067 = vpop.f32.mrf.mxu0
    %3068 = vmatprep.mubr.f32.mxu0 0.0
    %3069 = vmatmul.mubr.f32.gmra.mxu0 %v2908
    %v3070 = vpop.f32.mrf.mxu0
    %v3071 = vadd.f32 0.0, %v3070
    %v3072 = vpop.f32.mrf.mxu0
    %3073 = vmatprep.mubr.f32.mxu0 0.0
    %3074 = vmatmul.mubr.f32.gmra.mxu0 %v2909
    %v3075 = vpop.f32.mrf.mxu0
    %v3076 = vadd.f32 0.0, %v3075
    %v3077 = vpop.f32.mrf.mxu0
    %3078 = vmatprep.mubr.f32.mxu0 0.0
    %3079 = vmatmul.mubr.f32.gmra.mxu0 %v2910
    %v3080 = vpop.f32.mrf.mxu0
    %v3081 = vadd.f32 0.0, %v3080
    %v3082 = vpop.f32.mrf.mxu0
    %3083 = vmatprep.mubr.f32.mxu0 0.0
    %3084 = vmatmul.mubr.f32.gmra.mxu0 %v2911
    %v3085 = vpop.f32.mrf.mxu0
    %v3086 = vadd.f32 0.0, %v3085
    %v3087 = vpop.f32.mrf.mxu0
    %3088 = vmatprep.mubr.f32.mxu0 0.0
    %3089 = vmatmul.mubr.f32.gmra.mxu0 %v2912
    %v3090 = vpop.f32.mrf.mxu0
    %v3091 = vadd.f32 0.0, %v3090
    %v3092 = vpop.f32.mrf.mxu0
    %3093 = vmatprep.mubr.f32.mxu0 0.0
    %3094 = vmatmul.mubr.f32.gmra.mxu0 %v2913
    %v3095 = vpop.f32.mrf.mxu0
    %v3096 = vadd.f32 0.0, %v3095
    %v3097 = vpop.f32.mrf.mxu0
    %3098 = vmatprep.mubr.f32.mxu0 0.0
    %3099 = vmatmul.mubr.f32.gmra.mxu0 %v2914
    %v3100 = vpop.f32.mrf.mxu0
    %v3101 = vadd.f32 0.0, %v3100
    %v3102 = vpop.f32.mrf.mxu0
    %3103 = vmatprep.mubr.f32.mxu0 0.0
    %3104 = vmatmul.mubr.f32.gmra.mxu0 %v2915
    %v3105 = vpop.f32.mrf.mxu0
    %v3106 = vadd.f32 0.0, %v3105
    %v3107 = vpop.f32.mrf.mxu0
    %3108 = vmatprep.mubr.f32.mxu0 0.0
    %3109 = vmatmul.mubr.f32.gmra.mxu0 %v2916
    %v3110 = vpop.f32.mrf.mxu0
    %v3111 = vadd.f32 0.0, %v3110
    %v3112 = vpop.f32.mrf.mxu0
    %3113 = vmatprep.mubr.f32.mxu0 0.0
    %3114 = vmatmul.mubr.f32.gmra.mxu0 %v2917
    %v3115 = vpop.f32.mrf.mxu0
    %v3116 = vadd.f32 0.0, %v3115
    %v3117 = vpop.f32.mrf.mxu0
    %3118 = vmatprep.mubr.f32.mxu0 0.0
    %3119 = vmatmul.mubr.f32.gmra.mxu0 %v2918
    %v3120 = vpop.f32.mrf.mxu0
    %v3121 = vadd.f32 0.0, %v3120
    %v3122 = vpop.f32.mrf.mxu0
    %3123 = vmatprep.mubr.f32.mxu0 0.0
    %3124 = vmatmul.mubr.f32.gmra.mxu0 %v2919
    %v3125 = vpop.f32.mrf.mxu0
    %v3126 = vadd.f32 0.0, %v3125
    %v3127 = vpop.f32.mrf.mxu0
    %3128 = vmatprep.mubr.f32.mxu0 0.0
    %3129 = vmatmul.mubr.f32.gmra.mxu0 %v2920
    %v3130 = vpop.f32.mrf.mxu0
    %v3131 = vadd.f32 0.0, %v3130
    %v3132 = vpop.f32.mrf.mxu0
    %3133 = vmatprep.mubr.f32.mxu0 0.0
    %3134 = vmatmul.mubr.f32.gmra.mxu0 %v2921
    %v3135 = vpop.f32.mrf.mxu0
    %v3136 = vadd.f32 0.0, %v3135
    %v3137 = vpop.f32.mrf.mxu0
    %3138 = vmatprep.mubr.f32.mxu0 0.0
    %3139 = vmatmul.mubr.f32.gmra.mxu0 %v2922
    %v3140 = vpop.f32.mrf.mxu0
    %v3141 = vadd.f32 0.0, %v3140
    %v3142 = vpop.f32.mrf.mxu0
    %3143 = vmatprep.mubr.f32.mxu0 0.0
    %3144 = vmatmul.mubr.f32.gmra.mxu0 %v2923
    %v3145 = vpop.f32.mrf.mxu0
    %v3146 = vadd.f32 0.0, %v3145
    %v3147 = vpop.f32.mrf.mxu0
    %3148 = vmatprep.mubr.f32.mxu0 0.0
    %3149 = vmatmul.mubr.f32.gmra.mxu0 %v2924
    %v3150 = vpop.f32.mrf.mxu0
    %v3151 = vadd.f32 0.0, %v3150
    %v3152 = vpop.f32.mrf.mxu0
    %3153 = vmatprep.mubr.f32.mxu0 0.0
    %3154 = vmatmul.mubr.f32.gmra.mxu0 %v2925
    %v3155 = vpop.f32.mrf.mxu0
    %v3156 = vadd.f32 0.0, %v3155
    %v3157 = vpop.f32.mrf.mxu0
    %3158 = vmatprep.mubr.f32.mxu0 0.0
    %3159 = vmatmul.mubr.f32.gmra.mxu0 %v2926
    %v3160 = vpop.f32.mrf.mxu0
    %v3161 = vadd.f32 0.0, %v3160
    %v3162 = vpop.f32.mrf.mxu0
    %3163 = vmatprep.mubr.f32.mxu0 0.0
    %3164 = vmatmul.mubr.f32.gmra.mxu0 %v2927
    %v3165 = vpop.f32.mrf.mxu0
    %v3166 = vadd.f32 0.0, %v3165
    %v3167 = vpop.f32.mrf.mxu0
    %3168 = vdwg.mxu0
    %v3169 = vld [vmem:[#allocation6 + $0x197] sm:$0x1]
    %v3170 = vlaneseq
    %v3171 = vshrl.u32 %v3170, 7
    %v3172 = vsub.s32 0, %v3171
    %v3173 = vrot.slane %v3169, %v3172
    %v3174 = vmul.f32 %v2083, %v3173
    %v3175 = vmul.f32 %v2087, %v3173
    %v3176 = vmul.f32 %v2091, %v3173
    %v3177 = vmul.f32 %v2095, %v3173
    %v3178 = vmul.f32 %v2102, %v3173
    %v3179 = vmul.f32 %v2106, %v3173
    %v3180 = vmul.f32 %v2110, %v3173
    %v3181 = vmul.f32 %v2114, %v3173
    %v3182 = vmul.f32 %v2121, %v3173
    %v3183 = vmul.f32 %v2125, %v3173
    %v3184 = vmul.f32 %v2129, %v3173
    %v3185 = vmul.f32 %v2133, %v3173
    %v3186 = vmul.f32 %v2140, %v3173
    %v3187 = vmul.f32 %v2144, %v3173
    %v3188 = vmul.f32 %v2148, %v3173
    %v3189 = vmul.f32 %v2152, %v3173
    %v3190 = vmul.f32 %v2159, %v3173
    %v3191 = vmul.f32 %v2163, %v3173
    %v3192 = vmul.f32 %v2167, %v3173
    %v3193 = vmul.f32 %v2171, %v3173
    %v3194 = vmul.f32 %v2178, %v3173
    %v3195 = vmul.f32 %v2182, %v3173
    %v3196 = vmul.f32 %v2186, %v3173
    %v3197 = vmul.f32 %v2190, %v3173
    %v3198 = vmul.f32 %v2197, %v3173
    %v3199 = vmul.f32 %v2201, %v3173
    %v3200 = vmul.f32 %v2205, %v3173
    %v3201 = vmul.f32 %v2209, %v3173
    %v3202 = vmul.f32 %v2216, %v3173
    %v3203 = vmul.f32 %v2220, %v3173
    %v3204 = vmul.f32 %v2224, %v3173
    %v3205 = vmul.f32 %v2228, %v3173
    %v3206 = vld [vmem:[#allocation6 + $0x198] sm:$0x1]
    %v3207 = vlaneseq
    %v3208 = vshrl.u32 %v3207, 7
    %v3209 = vsub.s32 0, %v3208
    %v3210 = vrot.slane %v3206, %v3209
    %v3211 = vmul.f32 %v2299, %v3210
    %v3212 = vmul.f32 %v2303, %v3210
    %v3213 = vmul.f32 %v2307, %v3210
    %v3214 = vmul.f32 %v2311, %v3210
    %v3215 = vmul.f32 %v2318, %v3210
    %v3216 = vmul.f32 %v2322, %v3210
    %v3217 = vmul.f32 %v2326, %v3210
    %v3218 = vmul.f32 %v2330, %v3210
    %v3219 = vmul.f32 %v2337, %v3210
    %v3220 = vmul.f32 %v2341, %v3210
    %v3221 = vmul.f32 %v2345, %v3210
    %v3222 = vmul.f32 %v2349, %v3210
    %v3223 = vmul.f32 %v2356, %v3210
    %v3224 = vmul.f32 %v2360, %v3210
    %v3225 = vmul.f32 %v2364, %v3210
    %v3226 = vmul.f32 %v2368, %v3210
    %v3227 = vmul.f32 %v2375, %v3210
    %v3228 = vmul.f32 %v2379, %v3210
    %v3229 = vmul.f32 %v2383, %v3210
    %v3230 = vmul.f32 %v2387, %v3210
    %v3231 = vmul.f32 %v2394, %v3210
    %v3232 = vmul.f32 %v2398, %v3210
    %v3233 = vmul.f32 %v2402, %v3210
    %v3234 = vmul.f32 %v2406, %v3210
    %v3235 = vmul.f32 %v2413, %v3210
    %v3236 = vmul.f32 %v2417, %v3210
    %v3237 = vmul.f32 %v2421, %v3210
    %v3238 = vmul.f32 %v2425, %v3210
    %v3239 = vmul.f32 %v2432, %v3210
    %v3240 = vmul.f32 %v2436, %v3210
    %v3241 = vmul.f32 %v2440, %v3210
    %v3242 = vmul.f32 %v2444, %v3210
    %v3243 = vadd.f32 %v3174, %v3211
    %v3244 = vadd.f32 %v3175, %v3212
    %v3245 = vadd.f32 %v3176, %v3213
    %v3246 = vadd.f32 %v3177, %v3214
    %v3247 = vadd.f32 %v3178, %v3215
    %v3248 = vadd.f32 %v3179, %v3216
    %v3249 = vadd.f32 %v3180, %v3217
    %v3250 = vadd.f32 %v3181, %v3218
    %v3251 = vadd.f32 %v3182, %v3219
    %v3252 = vadd.f32 %v3183, %v3220
    %v3253 = vadd.f32 %v3184, %v3221
    %v3254 = vadd.f32 %v3185, %v3222
    %v3255 = vadd.f32 %v3186, %v3223
    %v3256 = vadd.f32 %v3187, %v3224
    %v3257 = vadd.f32 %v3188, %v3225
    %v3258 = vadd.f32 %v3189, %v3226
    %v3259 = vadd.f32 %v3190, %v3227
    %v3260 = vadd.f32 %v3191, %v3228
    %v3261 = vadd.f32 %v3192, %v3229
    %v3262 = vadd.f32 %v3193, %v3230
    %v3263 = vadd.f32 %v3194, %v3231
    %v3264 = vadd.f32 %v3195, %v3232
    %v3265 = vadd.f32 %v3196, %v3233
    %v3266 = vadd.f32 %v3197, %v3234
    %v3267 = vadd.f32 %v3198, %v3235
    %v3268 = vadd.f32 %v3199, %v3236
    %v3269 = vadd.f32 %v3200, %v3237
    %v3270 = vadd.f32 %v3201, %v3238
    %v3271 = vadd.f32 %v3202, %v3239
    %v3272 = vadd.f32 %v3203, %v3240
    %v3273 = vadd.f32 %v3204, %v3241
    %v3274 = vadd.f32 %v3205, %v3242
    %v3275 = vld [vmem:[#allocation6 + $0x199] sm:$0x1]
    %v3276 = vlaneseq
    %v3277 = vshrl.u32 %v3276, 7
    %v3278 = vsub.s32 0, %v3277
    %v3279 = vrot.slane %v3275, %v3278
    %v3280 = vmul.f32 %v2517, %v3279
    %v3281 = vmul.f32 %v2521, %v3279
    %v3282 = vmul.f32 %v2525, %v3279
    %v3283 = vmul.f32 %v2529, %v3279
    %v3284 = vmul.f32 %v2537, %v3279
    %v3285 = vmul.f32 %v2541, %v3279
    %v3286 = vmul.f32 %v2545, %v3279
    %v3287 = vmul.f32 %v2549, %v3279
    %v3288 = vmul.f32 %v2557, %v3279
    %v3289 = vmul.f32 %v2561, %v3279
    %v3290 = vmul.f32 %v2565, %v3279
    %v3291 = vmul.f32 %v2569, %v3279
    %v3292 = vmul.f32 %v2577, %v3279
    %v3293 = vmul.f32 %v2581, %v3279
    %v3294 = vmul.f32 %v2585, %v3279
    %v3295 = vmul.f32 %v2589, %v3279
    %v3296 = vmul.f32 %v2597, %v3279
    %v3297 = vmul.f32 %v2601, %v3279
    %v3298 = vmul.f32 %v2605, %v3279
    %v3299 = vmul.f32 %v2609, %v3279
    %v3300 = vmul.f32 %v2617, %v3279
    %v3301 = vmul.f32 %v2621, %v3279
    %v3302 = vmul.f32 %v2625, %v3279
    %v3303 = vmul.f32 %v2629, %v3279
    %v3304 = vmul.f32 %v2637, %v3279
    %v3305 = vmul.f32 %v2641, %v3279
    %v3306 = vmul.f32 %v2645, %v3279
    %v3307 = vmul.f32 %v2649, %v3279
    %v3308 = vmul.f32 %v2657, %v3279
    %v3309 = vmul.f32 %v2661, %v3279
    %v3310 = vmul.f32 %v2665, %v3279
    %v3311 = vmul.f32 %v2669, %v3279
    %v3312 = vadd.f32 %v3243, %v3280
    %v3313 = vadd.f32 %v3244, %v3281
    %v3314 = vadd.f32 %v3245, %v3282
    %v3315 = vadd.f32 %v3246, %v3283
    %v3316 = vadd.f32 %v3247, %v3284
    %v3317 = vadd.f32 %v3248, %v3285
    %v3318 = vadd.f32 %v3249, %v3286
    %v3319 = vadd.f32 %v3250, %v3287
    %v3320 = vadd.f32 %v3251, %v3288
    %v3321 = vadd.f32 %v3252, %v3289
    %v3322 = vadd.f32 %v3253, %v3290
    %v3323 = vadd.f32 %v3254, %v3291
    %v3324 = vadd.f32 %v3255, %v3292
    %v3325 = vadd.f32 %v3256, %v3293
    %v3326 = vadd.f32 %v3257, %v3294
    %v3327 = vadd.f32 %v3258, %v3295
    %v3328 = vadd.f32 %v3259, %v3296
    %v3329 = vadd.f32 %v3260, %v3297
    %v3330 = vadd.f32 %v3261, %v3298
    %v3331 = vadd.f32 %v3262, %v3299
    %v3332 = vadd.f32 %v3263, %v3300
    %v3333 = vadd.f32 %v3264, %v3301
    %v3334 = vadd.f32 %v3265, %v3302
    %v3335 = vadd.f32 %v3266, %v3303
    %v3336 = vadd.f32 %v3267, %v3304
    %v3337 = vadd.f32 %v3268, %v3305
    %v3338 = vadd.f32 %v3269, %v3306
    %v3339 = vadd.f32 %v3270, %v3307
    %v3340 = vadd.f32 %v3271, %v3308
    %v3341 = vadd.f32 %v3272, %v3309
    %v3342 = vadd.f32 %v3273, %v3310
    %v3343 = vadd.f32 %v3274, %v3311
    %v3344 = vmul.f32 %v3312, 2.0
    %v3345 = vmul.f32 %v3313, 2.0
    %v3346 = vmul.f32 %v3314, 2.0
    %v3347 = vmul.f32 %v3315, 2.0
    %v3348 = vmul.f32 %v3316, 2.0
    %v3349 = vmul.f32 %v3317, 2.0
    %v3350 = vmul.f32 %v3318, 2.0
    %v3351 = vmul.f32 %v3319, 2.0
    %v3352 = vmul.f32 %v3320, 2.0
    %v3353 = vmul.f32 %v3321, 2.0
    %v3354 = vmul.f32 %v3322, 2.0
    %v3355 = vmul.f32 %v3323, 2.0
    %v3356 = vmul.f32 %v3324, 2.0
    %v3357 = vmul.f32 %v3325, 2.0
    %v3358 = vmul.f32 %v3326, 2.0
    %v3359 = vmul.f32 %v3327, 2.0
    %v3360 = vmul.f32 %v3328, 2.0
    %v3361 = vmul.f32 %v3329, 2.0
    %v3362 = vmul.f32 %v3330, 2.0
    %v3363 = vmul.f32 %v3331, 2.0
    %v3364 = vmul.f32 %v3332, 2.0
    %v3365 = vmul.f32 %v3333, 2.0
    %v3366 = vmul.f32 %v3334, 2.0
    %v3367 = vmul.f32 %v3335, 2.0
    %v3368 = vmul.f32 %v3336, 2.0
    %v3369 = vmul.f32 %v3337, 2.0
    %v3370 = vmul.f32 %v3338, 2.0
    %v3371 = vmul.f32 %v3339, 2.0
    %v3372 = vmul.f32 %v3340, 2.0
    %v3373 = vmul.f32 %v3341, 2.0
    %v3374 = vmul.f32 %v3342, 2.0
    %v3375 = vmul.f32 %v3343, 2.0
    %v3376 = vadd.f32 %v3011, %v3344
    %v3377 = vadd.f32 %v3016, %v3345
    %v3378 = vadd.f32 %v3021, %v3346
    %v3379 = vadd.f32 %v3026, %v3347
    %v3380 = vadd.f32 %v3031, %v3348
    %v3381 = vadd.f32 %v3036, %v3349
    %v3382 = vadd.f32 %v3041, %v3350
    %v3383 = vadd.f32 %v3046, %v3351
    %v3384 = vadd.f32 %v3051, %v3352
    %v3385 = vadd.f32 %v3056, %v3353
    %v3386 = vadd.f32 %v3061, %v3354
    %v3387 = vadd.f32 %v3066, %v3355
    %v3388 = vadd.f32 %v3071, %v3356
    %v3389 = vadd.f32 %v3076, %v3357
    %v3390 = vadd.f32 %v3081, %v3358
    %v3391 = vadd.f32 %v3086, %v3359
    %v3392 = vadd.f32 %v3091, %v3360
    %v3393 = vadd.f32 %v3096, %v3361
    %v3394 = vadd.f32 %v3101, %v3362
    %v3395 = vadd.f32 %v3106, %v3363
    %v3396 = vadd.f32 %v3111, %v3364
    %v3397 = vadd.f32 %v3116, %v3365
    %v3398 = vadd.f32 %v3121, %v3366
    %v3399 = vadd.f32 %v3126, %v3367
    %v3400 = vadd.f32 %v3131, %v3368
    %v3401 = vadd.f32 %v3136, %v3369
    %v3402 = vadd.f32 %v3141, %v3370
    %v3403 = vadd.f32 %v3146, %v3371
    %v3404 = vadd.f32 %v3151, %v3372
    %v3405 = vadd.f32 %v3156, %v3373
    %v3406 = vadd.f32 %v3161, %v3374
    %v3407 = vadd.f32 %v3166, %v3375
    %v3408 = vld [vmem:[#allocation6 + $0x60] sm:$0xff]
    %v3409 = vld [vmem:[#allocation6 + $0x68] sm:$0xff]
    %v3410 = vld [vmem:[#allocation6 + $0x70] sm:$0xff]
    %v3411 = vld [vmem:[#allocation6 + $0x78] sm:$0xff]
    %v3412 = vld [vmem:[#allocation6 + $0x80] sm:$0xff]
    %v3413 = vld [vmem:[#allocation6 + $0x88] sm:$0xff]
    %v3414 = vld [vmem:[#allocation6 + $0x90] sm:$0xff]
    %v3415 = vld [vmem:[#allocation6 + $0x98] sm:$0xff]
    %v3417 = vsel %vm63, %v507, 0
    %3419 = vmatprep.subr.mxu0 0.0
    %3420 = vmatpush1.msra.mxu0 0.0
    %3421 = vmatprep.subr.mxu0 0.0
    %3422 = vmatpush1.msra.mxu0 0.0
    %3423 = vmatprep.subr.mxu0 0.0
    %3424 = vmatpush1.msra.mxu0 0.0
    %3425 = vmatprep.subr.mxu0 0.0
    %3426 = vmatpush1.msra.mxu0 0.0
    %3427 = vmatprep.subr.mxu0 0.0
    %3428 = vmatpush1.msra.mxu0 0.0
    %3429 = vmatprep.subr.mxu0 0.0
    %3430 = vmatpush1.msra.mxu0 0.0
    %3431 = vmatprep.subr.mxu0 0.0
    %3432 = vmatpush1.msra.mxu0 0.0
    %3433 = vmatprep.subr.mxu0 0.0
    %3434 = vmatpush1.msra.mxu0 0.0
    %3435 = vmatprep.subr.mxu0 0.0
    %3436 = vmatpush1.msra.mxu0 0.0
    %3437 = vmatprep.subr.mxu0 0.0
    %3438 = vmatpush1.msra.mxu0 0.0
    %3439 = vmatprep.subr.mxu0 0.0
    %3440 = vmatpush1.msra.mxu0 0.0
    %3441 = vmatprep.subr.mxu0 0.0
    %3442 = vmatpush1.msra.mxu0 0.0
    %3443 = vmatprep.subr.mxu0 0.0
    %3444 = vmatpush1.msra.mxu0 %v3415
    %3445 = vmatprep.subr.mxu0 0.0
    %3446 = vmatpush1.msra.mxu0 %v3414
    %3447 = vmatprep.subr.mxu0 0.0
    %3448 = vmatpush1.msra.mxu0 %v3413
    %3449 = vmatprep.subr.mxu0 0.0
    %3450 = vmatpush1.msra.mxu0 %v3412
    %3451 = vmatprep.subr.mxu0 0.0
    %3452 = vmatpush2.msra.mxu0 0.0
    %3453 = vmatprep.subr.mxu0 0.0
    %3454 = vmatpush2.msra.mxu0 0.0
    %3455 = vmatprep.subr.mxu0 0.0
    %3456 = vmatpush2.msra.mxu0 0.0
    %3457 = vmatprep.subr.mxu0 0.0
    %3458 = vmatpush2.msra.mxu0 0.0
    %3459 = vmatprep.subr.mxu0 0.0
    %3460 = vmatpush2.msra.mxu0 0.0
    %3461 = vmatprep.subr.mxu0 0.0
    %3462 = vmatpush2.msra.mxu0 0.0
    %3463 = vmatprep.subr.mxu0 0.0
    %3464 = vmatpush2.msra.mxu0 0.0
    %3465 = vmatprep.subr.mxu0 0.0
    %3466 = vmatpush2.msra.mxu0 0.0
    %3467 = vmatprep.subr.mxu0 0.0
    %3468 = vmatpush2.msra.mxu0 0.0
    %3469 = vmatprep.subr.mxu0 0.0
    %3470 = vmatpush2.msra.mxu0 0.0
    %3471 = vmatprep.subr.mxu0 0.0
    %3472 = vmatpush2.msra.mxu0 0.0
    %3473 = vmatprep.subr.mxu0 0.0
    %3474 = vmatpush2.msra.mxu0 0.0
    %3475 = vmatprep.subr.mxu0 0.0
    %3476 = vmatpush2.msra.mxu0 0.0
    %3477 = vmatprep.subr.mxu0 0.0
    %3478 = vmatpush2.msra.mxu0 0.0
    %3479 = vmatprep.subr.mxu0 0.0
    %3480 = vmatpush2.msra.mxu0 0.0
    %3481 = vmatprep.subr.mxu0 0.0
    %3482 = vmatpush2.msra.mxu0 0.0
    %3483 = vmatprep.mubr.f32.mxu0 0.0
    %3484 = vmatmul.mubr.f32.gmra.mxu0 %v3417
    %v3485 = vpop.f32.mrf.mxu0
    %v3486 = vadd.f32 0.0, %v3485
    %v3487 = vpop.f32.mrf.mxu0
    %3488 = vdwg.mxu0
    %v3490 = vsel %vm63, %v502, 0
    %3492 = vmatprep.subr.mxu0 0.0
    %3493 = vmatpush1.msra.mxu0 0.0
    %3494 = vmatprep.subr.mxu0 0.0
    %3495 = vmatpush1.msra.mxu0 0.0
    %3496 = vmatprep.subr.mxu0 0.0
    %3497 = vmatpush1.msra.mxu0 0.0
    %3498 = vmatprep.subr.mxu0 0.0
    %3499 = vmatpush1.msra.mxu0 0.0
    %3500 = vmatprep.subr.mxu0 0.0
    %3501 = vmatpush1.msra.mxu0 0.0
    %3502 = vmatprep.subr.mxu0 0.0
    %3503 = vmatpush1.msra.mxu0 0.0
    %3504 = vmatprep.subr.mxu0 0.0
    %3505 = vmatpush1.msra.mxu0 0.0
    %3506 = vmatprep.subr.mxu0 0.0
    %3507 = vmatpush1.msra.mxu0 0.0
    %3508 = vmatprep.subr.mxu0 0.0
    %3509 = vmatpush1.msra.mxu0 0.0
    %3510 = vmatprep.subr.mxu0 0.0
    %3511 = vmatpush1.msra.mxu0 0.0
    %3512 = vmatprep.subr.mxu0 0.0
    %3513 = vmatpush1.msra.mxu0 0.0
    %3514 = vmatprep.subr.mxu0 0.0
    %3515 = vmatpush1.msra.mxu0 0.0
    %3516 = vmatprep.subr.mxu0 0.0
    %3517 = vmatpush1.msra.mxu0 %v3411
    %3518 = vmatprep.subr.mxu0 0.0
    %3519 = vmatpush1.msra.mxu0 %v3410
    %3520 = vmatprep.subr.mxu0 0.0
    %3521 = vmatpush1.msra.mxu0 %v3409
    %3522 = vmatprep.subr.mxu0 0.0
    %3523 = vmatpush1.msra.mxu0 %v3408
    %3524 = vmatprep.subr.mxu0 0.0
    %3525 = vmatpush2.msra.mxu0 0.0
    %3526 = vmatprep.subr.mxu0 0.0
    %3527 = vmatpush2.msra.mxu0 0.0
    %3528 = vmatprep.subr.mxu0 0.0
    %3529 = vmatpush2.msra.mxu0 0.0
    %3530 = vmatprep.subr.mxu0 0.0
    %3531 = vmatpush2.msra.mxu0 0.0
    %3532 = vmatprep.subr.mxu0 0.0
    %3533 = vmatpush2.msra.mxu0 0.0
    %3534 = vmatprep.subr.mxu0 0.0
    %3535 = vmatpush2.msra.mxu0 0.0
    %3536 = vmatprep.subr.mxu0 0.0
    %3537 = vmatpush2.msra.mxu0 0.0
    %3538 = vmatprep.subr.mxu0 0.0
    %3539 = vmatpush2.msra.mxu0 0.0
    %3540 = vmatprep.subr.mxu0 0.0
    %3541 = vmatpush2.msra.mxu0 0.0
    %3542 = vmatprep.subr.mxu0 0.0
    %3543 = vmatpush2.msra.mxu0 0.0
    %3544 = vmatprep.subr.mxu0 0.0
    %3545 = vmatpush2.msra.mxu0 0.0
    %3546 = vmatprep.subr.mxu0 0.0
    %3547 = vmatpush2.msra.mxu0 0.0
    %3548 = vmatprep.subr.mxu0 0.0
    %3549 = vmatpush2.msra.mxu0 0.0
    %3550 = vmatprep.subr.mxu0 0.0
    %3551 = vmatpush2.msra.mxu0 0.0
    %3552 = vmatprep.subr.mxu0 0.0
    %3553 = vmatpush2.msra.mxu0 0.0
    %3554 = vmatprep.subr.mxu0 0.0
    %3555 = vmatpush2.msra.mxu0 0.0
    %3556 = vmatprep.mubr.f32.mxu0 0.0
    %3557 = vmatmul.mubr.f32.gmra.mxu0 %v3490
    %v3558 = vpop.f32.mrf.mxu0
    %v3559 = vadd.f32 %v3486, %v3558
    %v3560 = vpop.f32.mrf.mxu0
    %3561 = vdwg.mxu0
    %v3563 = vcombine.high %v3559, %v3559
    %v3565 = vunpack.c.l.s4 1966171168
    %v3566 = vunpack.c.0.s8 %v3565
    %v3567 = vlaneseq
    %v3568 = vshrl.u32 %v3567, 7
    %v3569 = vsub.s32 %v3566, %v3568
    %v3570 = vrot.slane %v3559, %v3569
    %v3572 = vunpack.c.l.s4 1966171168
    %v3573 = vunpack.c.0.s8 %v3572
    %v3574 = vlaneseq
    %v3575 = vshrl.u32 %v3574, 7
    %v3576 = vsub.s32 %v3573, %v3575
    %v3577 = vrot.slane %v3563, %v3576
    %v3578 = vcombine.high %v3570, %v3570
    %v3579 = vcombine.high %v3577, %v3577
    %v3581 = vunpack.c.l.s4 1966171168
    %v3582 = vunpack.c.0.s8 %v3581
    %v3583 = vlaneseq
    %v3584 = vshrl.u32 %v3583, 7
    %v3585 = vsub.s32 %v3582, %v3584
    %v3586 = vrot.slane %v3570, %v3585
    %v3588 = vunpack.c.l.s4 1966171168
    %v3589 = vunpack.c.0.s8 %v3588
    %v3590 = vlaneseq
    %v3591 = vshrl.u32 %v3590, 7
    %v3592 = vsub.s32 %v3589, %v3591
    %v3593 = vrot.slane %v3577, %v3592
    %v3595 = vunpack.c.l.s4 1966171168
    %v3596 = vunpack.c.0.s8 %v3595
    %v3597 = vlaneseq
    %v3598 = vshrl.u32 %v3597, 7
    %v3599 = vsub.s32 %v3596, %v3598
    %v3600 = vrot.slane %v3578, %v3599
    %v3602 = vunpack.c.l.s4 1966171168
    %v3603 = vunpack.c.0.s8 %v3602
    %v3604 = vlaneseq
    %v3605 = vshrl.u32 %v3604, 7
    %v3606 = vsub.s32 %v3603, %v3605
    %v3607 = vrot.slane %v3579, %v3606
    %v3608 = vcombine.high %v3586, %v3586
    %v3609 = vcombine.high %v3593, %v3593
    %v3610 = vcombine.high %v3600, %v3600
    %v3611 = vcombine.high %v3607, %v3607
    %v3612 = vlaneseq
    %v3613 = vshrl.u32 %v3612, 7
    %v3614 = vsub.s32 0, %v3613
    %v3615 = vrot.slane %v3586, %v3614
    %v3616 = vlaneseq
    %v3617 = vshrl.u32 %v3616, 7
    %v3618 = vsub.s32 0, %v3617
    %v3619 = vrot.slane %v3600, %v3618
    %v3620 = vlaneseq
    %v3621 = vshrl.u32 %v3620, 7
    %v3622 = vsub.s32 0, %v3621
    %v3623 = vrot.slane %v3608, %v3622
    %v3624 = vlaneseq
    %v3625 = vshrl.u32 %v3624, 7
    %v3626 = vsub.s32 0, %v3625
    %v3627 = vrot.slane %v3610, %v3626
    %v3628 = vlaneseq
    %v3629 = vshrl.u32 %v3628, 7
    %v3630 = vsub.s32 0, %v3629
    %v3631 = vrot.slane %v3593, %v3630
    %v3632 = vlaneseq
    %v3633 = vshrl.u32 %v3632, 7
    %v3634 = vsub.s32 0, %v3633
    %v3635 = vrot.slane %v3607, %v3634
    %v3636 = vlaneseq
    %v3637 = vshrl.u32 %v3636, 7
    %v3638 = vsub.s32 0, %v3637
    %v3639 = vrot.slane %v3609, %v3638
    %v3640 = vlaneseq
    %v3641 = vshrl.u32 %v3640, 7
    %v3642 = vsub.s32 0, %v3641
    %v3643 = vrot.slane %v3611, %v3642
    %v3652 = vmul.f32 %v3615, %v3376
    %v3653 = vmul.f32 %v3615, %v3377
    %v3654 = vmul.f32 %v3615, %v3378
    %v3655 = vmul.f32 %v3615, %v3379
    %v3656 = vmul.f32 %v3619, %v3380
    %v3657 = vmul.f32 %v3619, %v3381
    %v3658 = vmul.f32 %v3619, %v3382
    %v3659 = vmul.f32 %v3619, %v3383
    %v3660 = vmul.f32 %v3623, %v3384
    %v3661 = vmul.f32 %v3623, %v3385
    %v3662 = vmul.f32 %v3623, %v3386
    %v3663 = vmul.f32 %v3623, %v3387
    %v3664 = vmul.f32 %v3627, %v3388
    %v3665 = vmul.f32 %v3627, %v3389
    %v3666 = vmul.f32 %v3627, %v3390
    %v3667 = vmul.f32 %v3627, %v3391
    %v3668 = vmul.f32 %v3631, %v3392
    %v3669 = vmul.f32 %v3631, %v3393
    %v3670 = vmul.f32 %v3631, %v3394
    %v3671 = vmul.f32 %v3631, %v3395
    %v3672 = vmul.f32 %v3635, %v3396
    %v3673 = vmul.f32 %v3635, %v3397
    %v3674 = vmul.f32 %v3635, %v3398
    %v3675 = vmul.f32 %v3635, %v3399
    %v3676 = vmul.f32 %v3639, %v3400
    %v3677 = vmul.f32 %v3639, %v3401
    %v3678 = vmul.f32 %v3639, %v3402
    %v3679 = vmul.f32 %v3639, %v3403
    %v3680 = vmul.f32 %v3643, %v3404
    %v3681 = vmul.f32 %v3643, %v3405
    %v3682 = vmul.f32 %v3643, %v3406
    %v3683 = vmul.f32 %v3643, %v3407
    %v3684 = vsel %vm63, %v3652, 0.0
    %3685 = vadd.xlane.f32.xlu0 %v3684
    %v3686 = vpop.xlane.xlu0 %3685
    %v3687 = vsel %vm63, %v3653, 0.0
    %3688 = vadd.xlane.f32.xlu0 %v3687
    %v3689 = vpop.xlane.xlu0 %3688
    %v3690 = vsel %vm63, %v3654, 0.0
    %3691 = vadd.xlane.f32.xlu0 %v3690
    %v3692 = vpop.xlane.xlu0 %3691
    %v3693 = vsel %vm63, %v3655, 0.0
    %3694 = vadd.xlane.f32.xlu0 %v3693
    %v3695 = vpop.xlane.xlu0 %3694
    %v3696 = vsel %vm63, %v3656, 0.0
    %3697 = vadd.xlane.f32.xlu0 %v3696
    %v3698 = vpop.xlane.xlu0 %3697
    %v3699 = vsel %vm63, %v3657, 0.0
    %3700 = vadd.xlane.f32.xlu0 %v3699
    %v3701 = vpop.xlane.xlu0 %3700
    %v3702 = vsel %vm63, %v3658, 0.0
    %3703 = vadd.xlane.f32.xlu0 %v3702
    %v3704 = vpop.xlane.xlu0 %3703
    %v3705 = vsel %vm63, %v3659, 0.0
    %3706 = vadd.xlane.f32.xlu0 %v3705
    %v3707 = vpop.xlane.xlu0 %3706
    %v3708 = vsel %vm63, %v3660, 0.0
    %3709 = vadd.xlane.f32.xlu0 %v3708
    %v3710 = vpop.xlane.xlu0 %3709
    %v3711 = vsel %vm63, %v3661, 0.0
    %3712 = vadd.xlane.f32.xlu0 %v3711
    %v3713 = vpop.xlane.xlu0 %3712
    %v3714 = vsel %vm63, %v3662, 0.0
    %3715 = vadd.xlane.f32.xlu0 %v3714
    %v3716 = vpop.xlane.xlu0 %3715
    %v3717 = vsel %vm63, %v3663, 0.0
    %3718 = vadd.xlane.f32.xlu0 %v3717
    %v3719 = vpop.xlane.xlu0 %3718
    %v3720 = vsel %vm63, %v3664, 0.0
    %3721 = vadd.xlane.f32.xlu0 %v3720
    %v3722 = vpop.xlane.xlu0 %3721
    %v3723 = vsel %vm63, %v3665, 0.0
    %3724 = vadd.xlane.f32.xlu0 %v3723
    %v3725 = vpop.xlane.xlu0 %3724
    %v3726 = vsel %vm63, %v3666, 0.0
    %3727 = vadd.xlane.f32.xlu0 %v3726
    %v3728 = vpop.xlane.xlu0 %3727
    %v3729 = vsel %vm63, %v3667, 0.0
    %3730 = vadd.xlane.f32.xlu0 %v3729
    %v3731 = vpop.xlane.xlu0 %3730
    %v3732 = vsel %vm63, %v3668, 0.0
    %3733 = vadd.xlane.f32.xlu0 %v3732
    %v3734 = vpop.xlane.xlu0 %3733
    %v3735 = vsel %vm63, %v3669, 0.0
    %3736 = vadd.xlane.f32.xlu0 %v3735
    %v3737 = vpop.xlane.xlu0 %3736
    %v3738 = vsel %vm63, %v3670, 0.0
    %3739 = vadd.xlane.f32.xlu0 %v3738
    %v3740 = vpop.xlane.xlu0 %3739
    %v3741 = vsel %vm63, %v3671, 0.0
    %3742 = vadd.xlane.f32.xlu0 %v3741
    %v3743 = vpop.xlane.xlu0 %3742
    %v3744 = vsel %vm63, %v3672, 0.0
    %3745 = vadd.xlane.f32.xlu0 %v3744
    %v3746 = vpop.xlane.xlu0 %3745
    %v3747 = vsel %vm63, %v3673, 0.0
    %3748 = vadd.xlane.f32.xlu0 %v3747
    %v3749 = vpop.xlane.xlu0 %3748
    %v3750 = vsel %vm63, %v3674, 0.0
    %3751 = vadd.xlane.f32.xlu0 %v3750
    %v3752 = vpop.xlane.xlu0 %3751
    %v3753 = vsel %vm63, %v3675, 0.0
    %3754 = vadd.xlane.f32.xlu0 %v3753
    %v3755 = vpop.xlane.xlu0 %3754
    %v3756 = vsel %vm63, %v3676, 0.0
    %3757 = vadd.xlane.f32.xlu0 %v3756
    %v3758 = vpop.xlane.xlu0 %3757
    %v3759 = vsel %vm63, %v3677, 0.0
    %3760 = vadd.xlane.f32.xlu0 %v3759
    %v3761 = vpop.xlane.xlu0 %3760
    %v3762 = vsel %vm63, %v3678, 0.0
    %3763 = vadd.xlane.f32.xlu0 %v3762
    %v3764 = vpop.xlane.xlu0 %3763
    %v3765 = vsel %vm63, %v3679, 0.0
    %3766 = vadd.xlane.f32.xlu0 %v3765
    %v3767 = vpop.xlane.xlu0 %3766
    %v3768 = vsel %vm63, %v3680, 0.0
    %3769 = vadd.xlane.f32.xlu0 %v3768
    %v3770 = vpop.xlane.xlu0 %3769
    %v3771 = vsel %vm63, %v3681, 0.0
    %3772 = vadd.xlane.f32.xlu0 %v3771
    %v3773 = vpop.xlane.xlu0 %3772
    %v3774 = vsel %vm63, %v3682, 0.0
    %3775 = vadd.xlane.f32.xlu0 %v3774
    %v3776 = vpop.xlane.xlu0 %3775
    %v3777 = vsel %vm63, %v3683, 0.0
    %3778 = vadd.xlane.f32.xlu0 %v3777
    %v3779 = vpop.xlane.xlu0 %3778
    %v3812 = vlaneseq
    %v3813 = vshrl.u32 %v3812, 7
    %v3814 = vsub.s32 %v339, %v3813
    %v3815 = vrot.slane %v3686, %v3814
    %v3816 = vadd.s32 %v339, 4294967288
    %v3817 = vlaneseq
    %v3818 = vshrl.u32 %v3817, 7
    %v3819 = vsub.s32 %v3816, %v3818
    %v3820 = vrot.slane %v3689, %v3819
    %vm3821 = vcmask 130112
    %v3822 = vsel %vm3821, %v3820, %v3815
    %v3823 = vadd.s32 %v339, 4294967280
    %v3824 = vlaneseq
    %v3825 = vshrl.u32 %v3824, 7
    %v3826 = vsub.s32 %v3823, %v3825
    %v3827 = vrot.slane %v3692, %v3826
    %vm3828 = vcmask 195712
    %v3829 = vsel %vm3828, %v3827, %v3822
    %v3830 = vadd.s32 %v339, 4294967272
    %v3831 = vlaneseq
    %v3832 = vshrl.u32 %v3831, 7
    %v3833 = vsub.s32 %v3830, %v3832
    %v3834 = vrot.slane %v3695, %v3833
    %vm3835 = vcmask 261312
    %v3836 = vsel %vm3835, %v3834, %v3829
    %v3837 = vlaneseq
    %v3838 = vshrl.u32 %v3837, 7
    %v3839 = vsub.s32 %v339, %v3838
    %v3840 = vrot.slane %v3698, %v3839
    %v3841 = vlaneseq
    %v3842 = vshrl.u32 %v3841, 7
    %v3843 = vsub.s32 %v3816, %v3842
    %v3844 = vrot.slane %v3701, %v3843
    %v3845 = vsel %vm3821, %v3844, %v3840
    %v3846 = vlaneseq
    %v3847 = vshrl.u32 %v3846, 7
    %v3848 = vsub.s32 %v3823, %v3847
    %v3849 = vrot.slane %v3704, %v3848
    %v3850 = vsel %vm3828, %v3849, %v3845
    %v3851 = vlaneseq
    %v3852 = vshrl.u32 %v3851, 7
    %v3853 = vsub.s32 %v3830, %v3852
    %v3854 = vrot.slane %v3707, %v3853
    %v3855 = vsel %vm3835, %v3854, %v3850
    %v3856 = vlaneseq
    %v3857 = vshrl.u32 %v3856, 7
    %v3858 = vsub.s32 %v339, %v3857
    %v3859 = vrot.slane %v3710, %v3858
    %v3860 = vlaneseq
    %v3861 = vshrl.u32 %v3860, 7
    %v3862 = vsub.s32 %v3816, %v3861
    %v3863 = vrot.slane %v3713, %v3862
    %v3864 = vsel %vm3821, %v3863, %v3859
    %v3865 = vlaneseq
    %v3866 = vshrl.u32 %v3865, 7
    %v3867 = vsub.s32 %v3823, %v3866
    %v3868 = vrot.slane %v3716, %v3867
    %v3869 = vsel %vm3828, %v3868, %v3864
    %v3870 = vlaneseq
    %v3871 = vshrl.u32 %v3870, 7
    %v3872 = vsub.s32 %v3830, %v3871
    %v3873 = vrot.slane %v3719, %v3872
    %v3874 = vsel %vm3835, %v3873, %v3869
    %v3875 = vlaneseq
    %v3876 = vshrl.u32 %v3875, 7
    %v3877 = vsub.s32 %v339, %v3876
    %v3878 = vrot.slane %v3722, %v3877
    %v3879 = vlaneseq
    %v3880 = vshrl.u32 %v3879, 7
    %v3881 = vsub.s32 %v3816, %v3880
    %v3882 = vrot.slane %v3725, %v3881
    %v3883 = vsel %vm3821, %v3882, %v3878
    %v3884 = vlaneseq
    %v3885 = vshrl.u32 %v3884, 7
    %v3886 = vsub.s32 %v3823, %v3885
    %v3887 = vrot.slane %v3728, %v3886
    %v3888 = vsel %vm3828, %v3887, %v3883
    %v3889 = vlaneseq
    %v3890 = vshrl.u32 %v3889, 7
    %v3891 = vsub.s32 %v3830, %v3890
    %v3892 = vrot.slane %v3731, %v3891
    %v3893 = vsel %vm3835, %v3892, %v3888
    %v3894 = vlaneseq
    %v3895 = vshrl.u32 %v3894, 7
    %v3896 = vsub.s32 %v339, %v3895
    %v3897 = vrot.slane %v3734, %v3896
    %v3898 = vlaneseq
    %v3899 = vshrl.u32 %v3898, 7
    %v3900 = vsub.s32 %v3816, %v3899
    %v3901 = vrot.slane %v3737, %v3900
    %v3902 = vsel %vm3821, %v3901, %v3897
    %v3903 = vlaneseq
    %v3904 = vshrl.u32 %v3903, 7
    %v3905 = vsub.s32 %v3823, %v3904
    %v3906 = vrot.slane %v3740, %v3905
    %v3907 = vsel %vm3828, %v3906, %v3902
    %v3908 = vlaneseq
    %v3909 = vshrl.u32 %v3908, 7
    %v3910 = vsub.s32 %v3830, %v3909
    %v3911 = vrot.slane %v3743, %v3910
    %v3912 = vsel %vm3835, %v3911, %v3907
    %v3913 = vlaneseq
    %v3914 = vshrl.u32 %v3913, 7
    %v3915 = vsub.s32 %v339, %v3914
    %v3916 = vrot.slane %v3746, %v3915
    %v3917 = vlaneseq
    %v3918 = vshrl.u32 %v3917, 7
    %v3919 = vsub.s32 %v3816, %v3918
    %v3920 = vrot.slane %v3749, %v3919
    %v3921 = vsel %vm3821, %v3920, %v3916
    %v3922 = vlaneseq
    %v3923 = vshrl.u32 %v3922, 7
    %v3924 = vsub.s32 %v3823, %v3923
    %v3925 = vrot.slane %v3752, %v3924
    %v3926 = vsel %vm3828, %v3925, %v3921
    %v3927 = vlaneseq
    %v3928 = vshrl.u32 %v3927, 7
    %v3929 = vsub.s32 %v3830, %v3928
    %v3930 = vrot.slane %v3755, %v3929
    %v3931 = vsel %vm3835, %v3930, %v3926
    %v3932 = vlaneseq
    %v3933 = vshrl.u32 %v3932, 7
    %v3934 = vsub.s32 %v339, %v3933
    %v3935 = vrot.slane %v3758, %v3934
    %v3936 = vlaneseq
    %v3937 = vshrl.u32 %v3936, 7
    %v3938 = vsub.s32 %v3816, %v3937
    %v3939 = vrot.slane %v3761, %v3938
    %v3940 = vsel %vm3821, %v3939, %v3935
    %v3941 = vlaneseq
    %v3942 = vshrl.u32 %v3941, 7
    %v3943 = vsub.s32 %v3823, %v3942
    %v3944 = vrot.slane %v3764, %v3943
    %v3945 = vsel %vm3828, %v3944, %v3940
    %v3946 = vlaneseq
    %v3947 = vshrl.u32 %v3946, 7
    %v3948 = vsub.s32 %v3830, %v3947
    %v3949 = vrot.slane %v3767, %v3948
    %v3950 = vsel %vm3835, %v3949, %v3945
    %v3951 = vlaneseq
    %v3952 = vshrl.u32 %v3951, 7
    %v3953 = vsub.s32 %v339, %v3952
    %v3954 = vrot.slane %v3770, %v3953
    %v3955 = vlaneseq
    %v3956 = vshrl.u32 %v3955, 7
    %v3957 = vsub.s32 %v3816, %v3956
    %v3958 = vrot.slane %v3773, %v3957
    %v3959 = vsel %vm3821, %v3958, %v3954
    %v3960 = vlaneseq
    %v3961 = vshrl.u32 %v3960, 7
    %v3962 = vsub.s32 %v3823, %v3961
    %v3963 = vrot.slane %v3776, %v3962
    %v3964 = vsel %vm3828, %v3963, %v3959
    %v3965 = vlaneseq
    %v3966 = vshrl.u32 %v3965, 7
    %v3967 = vsub.s32 %v3830, %v3966
    %v3968 = vrot.slane %v3779, %v3967
    %v3969 = vsel %vm3835, %v3968, %v3964
    %vm3970 = vcmask 1041409
    %v3971 = vsel %vm3970, %v3855, %v3836
    %vm3972 = vcmask 1042434
    %v3973 = vsel %vm3972, %v3874, %v3971
    %vm3974 = vcmask 1043459
    %v3975 = vsel %vm3974, %v3893, %v3973
    %vm3976 = vcmask 1044484
    %v3977 = vsel %vm3976, %v3912, %v3975
    %vm3978 = vcmask 1045509
    %v3979 = vsel %vm3978, %v3931, %v3977
    %vm3980 = vcmask 1046534
    %v3981 = vsel %vm3980, %v3950, %v3979
    %vm3982 = vcmask 1047559
    %v3983 = vsel %vm3982, %v3969, %v3981
    %v3985 = vsel %vm63, %v3559, 0
    %v3988 = vsel %vm63, %v334, 0
    %v3991 = vsel %vm63, %v335, 0
    %v3994 = vsel %vm63, %v336, 0
    %v3997 = vsel %vm63, %v337, 0
    %3999 = vmatprep.subr.mxu0 0.0
    %4000 = vmatpush1.xpose.msra.mxu0 0.0
    %4001 = vmatprep.subr.mxu0 0.0
    %4002 = vmatpush1.xpose.msra.mxu0 0.0
    %4003 = vmatprep.subr.mxu0 0.0
    %4004 = vmatpush1.xpose.msra.mxu0 0.0
    %4005 = vmatprep.subr.mxu0 0.0
    %4006 = vmatpush1.xpose.msra.mxu0 0.0
    %4007 = vmatprep.subr.mxu0 0.0
    %4008 = vmatpush1.xpose.msra.mxu0 0.0
    %4009 = vmatprep.subr.mxu0 0.0
    %4010 = vmatpush1.xpose.msra.mxu0 0.0
    %4011 = vmatprep.subr.mxu0 0.0
    %4012 = vmatpush1.xpose.msra.mxu0 0.0
    %4013 = vmatprep.subr.mxu0 0.0
    %4014 = vmatpush1.xpose.msra.mxu0 0.0
    %4015 = vmatprep.subr.mxu0 0.0
    %4016 = vmatpush1.xpose.msra.mxu0 0.0
    %4017 = vmatprep.subr.mxu0 0.0
    %4018 = vmatpush1.xpose.msra.mxu0 0.0
    %4019 = vmatprep.subr.mxu0 0.0
    %4020 = vmatpush1.xpose.msra.mxu0 0.0
    %4021 = vmatprep.subr.mxu0 0.0
    %4022 = vmatpush1.xpose.msra.mxu0 0.0
    %4023 = vmatprep.subr.mxu0 0.0
    %4024 = vmatpush1.xpose.msra.mxu0 %v3997
    %4025 = vmatprep.subr.mxu0 0.0
    %4026 = vmatpush1.xpose.msra.mxu0 %v3994
    %4027 = vmatprep.subr.mxu0 0.0
    %4028 = vmatpush1.xpose.msra.mxu0 %v3991
    %4029 = vmatprep.subr.mxu0 0.0
    %4030 = vmatpush1.xpose.msra.mxu0 %v3988
    %4031 = vmatprep.subr.mxu0 0.0
    %4032 = vmatpush2.xpose.msra.mxu0 0.0
    %4033 = vmatprep.subr.mxu0 0.0
    %4034 = vmatpush2.xpose.msra.mxu0 0.0
    %4035 = vmatprep.subr.mxu0 0.0
    %4036 = vmatpush2.xpose.msra.mxu0 0.0
    %4037 = vmatprep.subr.mxu0 0.0
    %4038 = vmatpush2.xpose.msra.mxu0 0.0
    %4039 = vmatprep.subr.mxu0 0.0
    %4040 = vmatpush2.xpose.msra.mxu0 0.0
    %4041 = vmatprep.subr.mxu0 0.0
    %4042 = vmatpush2.xpose.msra.mxu0 0.0
    %4043 = vmatprep.subr.mxu0 0.0
    %4044 = vmatpush2.xpose.msra.mxu0 0.0
    %4045 = vmatprep.subr.mxu0 0.0
    %4046 = vmatpush2.xpose.msra.mxu0 0.0
    %4047 = vmatprep.subr.mxu0 0.0
    %4048 = vmatpush2.xpose.msra.mxu0 0.0
    %4049 = vmatprep.subr.mxu0 0.0
    %4050 = vmatpush2.xpose.msra.mxu0 0.0
    %4051 = vmatprep.subr.mxu0 0.0
    %4052 = vmatpush2.xpose.msra.mxu0 0.0
    %4053 = vmatprep.subr.mxu0 0.0
    %4054 = vmatpush2.xpose.msra.mxu0 0.0
    %4055 = vmatprep.subr.mxu0 0.0
    %4056 = vmatpush2.xpose.msra.mxu0 0.0
    %4057 = vmatprep.subr.mxu0 0.0
    %4058 = vmatpush2.xpose.msra.mxu0 0.0
    %4059 = vmatprep.subr.mxu0 0.0
    %4060 = vmatpush2.xpose.msra.mxu0 0.0
    %4061 = vmatprep.subr.mxu0 0.0
    %4062 = vmatpush2.xpose.msra.mxu0 0.0
    %4063 = vmatprep.mubr.f32.mxu0 0.0
    %4064 = vmatmul.mubr.f32.gmra.mxu0 %v3985
    %v4065 = vpop.f32.mrf.mxu0
    %v4066 = vadd.f32 %v3983, %v4065
    %v4067 = vpop.f32.mrf.mxu0
    %4068 = vdwg.mxu0
    %v4069 = vmul.f32 %v4066, 0.17677669
    %v4070 = vsel %vm63, %v4069, -inf
    %4071 = vmax.xlane.f32.xlu0 %v4070
    %v4072 = vpop.xlane.xlu0 %4071
    %v4073 = vsub.f32 %v4069, %v4072
    %v4074 = vmul.f32 %v4073, 1.442695
    %v4075 = vpow.pop %v4074
    %v4076 = vmul.f32 %v4075, %v766
    %v4077 = vsel %vm63, %v4076, 0.0
    %4078 = vadd.xlane.f32.xlu0 %v4077
    %v4079 = vpop.xlane.xlu0 %4078
    %v4080 = vmax.f32 %v4079, 1e-09
    %v4081 = vrcp.pop %v4080
    %v4082 = vmul.f32 %v4076, %v4081
    %v4083 = vlaneseq
    %v4084 = vshrl.u32 %v4083, 7
    %v4085 = vsub.s32 0, %v4084
    %v4086 = vrot.slane %v4082, %v4085
    %4088 = vbcast.lane.b32.xlu0 %v4086, 256
    %v4089 = vpop.permute.xlu0 %4088
    %s4091 = sor.u32 256, 8
    %4092 = vbcast.lane.b32.xlu0 %v4086, %s4091
    %v4093 = vpop.permute.xlu0 %4092
    %s4095 = sor.u32 256, 16
    %4096 = vbcast.lane.b32.xlu0 %v4086, %s4095
    %v4097 = vpop.permute.xlu0 %4096
    %s4099 = sor.u32 256, 24
    %4100 = vbcast.lane.b32.xlu0 %v4086, %s4099
    %v4101 = vpop.permute.xlu0 %4100
    %v4102 = vlaneseq
    %v4103 = vshrl.u32 %v4102, 7
    %v4104 = vsub.s32 1, %v4103
    %v4105 = vrot.slane %v4082, %v4104
    %4107 = vbcast.lane.b32.xlu0 %v4105, 256
    %v4108 = vpop.permute.xlu0 %4107
    %s4110 = sor.u32 256, 8
    %4111 = vbcast.lane.b32.xlu0 %v4105, %s4110
    %v4112 = vpop.permute.xlu0 %4111
    %s4114 = sor.u32 256, 16
    %4115 = vbcast.lane.b32.xlu0 %v4105, %s4114
    %v4116 = vpop.permute.xlu0 %4115
    %s4118 = sor.u32 256, 24
    %4119 = vbcast.lane.b32.xlu0 %v4105, %s4118
    %v4120 = vpop.permute.xlu0 %4119
    %v4121 = vlaneseq
    %v4122 = vshrl.u32 %v4121, 7
    %v4123 = vsub.s32 2, %v4122
    %v4124 = vrot.slane %v4082, %v4123
    %4126 = vbcast.lane.b32.xlu0 %v4124, 256
    %v4127 = vpop.permute.xlu0 %4126
    %s4129 = sor.u32 256, 8
    %4130 = vbcast.lane.b32.xlu0 %v4124, %s4129
    %v4131 = vpop.permute.xlu0 %4130
    %s4133 = sor.u32 256, 16
    %4134 = vbcast.lane.b32.xlu0 %v4124, %s4133
    %v4135 = vpop.permute.xlu0 %4134
    %s4137 = sor.u32 256, 24
    %4138 = vbcast.lane.b32.xlu0 %v4124, %s4137
    %v4139 = vpop.permute.xlu0 %4138
    %v4140 = vlaneseq
    %v4141 = vshrl.u32 %v4140, 7
    %v4142 = vsub.s32 3, %v4141
    %v4143 = vrot.slane %v4082, %v4142
    %4145 = vbcast.lane.b32.xlu0 %v4143, 256
    %v4146 = vpop.permute.xlu0 %4145
    %s4148 = sor.u32 256, 8
    %4149 = vbcast.lane.b32.xlu0 %v4143, %s4148
    %v4150 = vpop.permute.xlu0 %4149
    %s4152 = sor.u32 256, 16
    %4153 = vbcast.lane.b32.xlu0 %v4143, %s4152
    %v4154 = vpop.permute.xlu0 %4153
    %s4156 = sor.u32 256, 24
    %4157 = vbcast.lane.b32.xlu0 %v4143, %s4156
    %v4158 = vpop.permute.xlu0 %4157
    %v4159 = vlaneseq
    %v4160 = vshrl.u32 %v4159, 7
    %v4161 = vsub.s32 4, %v4160
    %v4162 = vrot.slane %v4082, %v4161
    %4164 = vbcast.lane.b32.xlu0 %v4162, 256
    %v4165 = vpop.permute.xlu0 %4164
    %s4167 = sor.u32 256, 8
    %4168 = vbcast.lane.b32.xlu0 %v4162, %s4167
    %v4169 = vpop.permute.xlu0 %4168
    %s4171 = sor.u32 256, 16
    %4172 = vbcast.lane.b32.xlu0 %v4162, %s4171
    %v4173 = vpop.permute.xlu0 %4172
    %s4175 = sor.u32 256, 24
    %4176 = vbcast.lane.b32.xlu0 %v4162, %s4175
    %v4177 = vpop.permute.xlu0 %4176
    %v4178 = vlaneseq
    %v4179 = vshrl.u32 %v4178, 7
    %v4180 = vsub.s32 5, %v4179
    %v4181 = vrot.slane %v4082, %v4180
    %4183 = vbcast.lane.b32.xlu0 %v4181, 256
    %v4184 = vpop.permute.xlu0 %4183
    %s4186 = sor.u32 256, 8
    %4187 = vbcast.lane.b32.xlu0 %v4181, %s4186
    %v4188 = vpop.permute.xlu0 %4187
    %s4190 = sor.u32 256, 16
    %4191 = vbcast.lane.b32.xlu0 %v4181, %s4190
    %v4192 = vpop.permute.xlu0 %4191
    %s4194 = sor.u32 256, 24
    %4195 = vbcast.lane.b32.xlu0 %v4181, %s4194
    %v4196 = vpop.permute.xlu0 %4195
    %v4197 = vlaneseq
    %v4198 = vshrl.u32 %v4197, 7
    %v4199 = vsub.s32 6, %v4198
    %v4200 = vrot.slane %v4082, %v4199
    %4202 = vbcast.lane.b32.xlu0 %v4200, 256
    %v4203 = vpop.permute.xlu0 %4202
    %s4205 = sor.u32 256, 8
    %4206 = vbcast.lane.b32.xlu0 %v4200, %s4205
    %v4207 = vpop.permute.xlu0 %4206
    %s4209 = sor.u32 256, 16
    %4210 = vbcast.lane.b32.xlu0 %v4200, %s4209
    %v4211 = vpop.permute.xlu0 %4210
    %s4213 = sor.u32 256, 24
    %4214 = vbcast.lane.b32.xlu0 %v4200, %s4213
    %v4215 = vpop.permute.xlu0 %4214
    %v4216 = vlaneseq
    %v4217 = vshrl.u32 %v4216, 7
    %v4218 = vsub.s32 7, %v4217
    %v4219 = vrot.slane %v4082, %v4218
    %4221 = vbcast.lane.b32.xlu0 %v4219, 256
    %v4222 = vpop.permute.xlu0 %4221
    %s4224 = sor.u32 256, 8
    %4225 = vbcast.lane.b32.xlu0 %v4219, %s4224
    %v4226 = vpop.permute.xlu0 %4225
    %s4228 = sor.u32 256, 16
    %4229 = vbcast.lane.b32.xlu0 %v4219, %s4228
    %v4230 = vpop.permute.xlu0 %4229
    %s4232 = sor.u32 256, 24
    %4233 = vbcast.lane.b32.xlu0 %v4219, %s4232
    %v4234 = vpop.permute.xlu0 %4233
    %v4235 = vmul.f32 %v4089, %v3376
    %v4236 = vmul.f32 %v4093, %v3377
    %v4237 = vmul.f32 %v4097, %v3378
    %v4238 = vmul.f32 %v4101, %v3379
    %v4239 = vmul.f32 %v4108, %v3380
    %v4240 = vmul.f32 %v4112, %v3381
    %v4241 = vmul.f32 %v4116, %v3382
    %v4242 = vmul.f32 %v4120, %v3383
    %v4243 = vmul.f32 %v4127, %v3384
    %v4244 = vmul.f32 %v4131, %v3385
    %v4245 = vmul.f32 %v4135, %v3386
    %v4246 = vmul.f32 %v4139, %v3387
    %v4247 = vmul.f32 %v4146, %v3388
    %v4248 = vmul.f32 %v4150, %v3389
    %v4249 = vmul.f32 %v4154, %v3390
    %v4250 = vmul.f32 %v4158, %v3391
    %v4251 = vmul.f32 %v4165, %v3392
    %v4252 = vmul.f32 %v4169, %v3393
    %v4253 = vmul.f32 %v4173, %v3394
    %v4254 = vmul.f32 %v4177, %v3395
    %v4255 = vmul.f32 %v4184, %v3396
    %v4256 = vmul.f32 %v4188, %v3397
    %v4257 = vmul.f32 %v4192, %v3398
    %v4258 = vmul.f32 %v4196, %v3399
    %v4259 = vmul.f32 %v4203, %v3400
    %v4260 = vmul.f32 %v4207, %v3401
    %v4261 = vmul.f32 %v4211, %v3402
    %v4262 = vmul.f32 %v4215, %v3403
    %v4263 = vmul.f32 %v4222, %v3404
    %v4264 = vmul.f32 %v4226, %v3405
    %v4265 = vmul.f32 %v4230, %v3406
    %v4266 = vmul.f32 %v4234, %v3407
    %v4267 = vsel %vm63, %v4235, 0.0
    %v4268 = vsel %vm63, %v4236, 0.0
    %v4269 = vadd.f32 %v4267, %v4268
    %v4270 = vsel %vm63, %v4237, 0.0
    %v4271 = vadd.f32 %v4269, %v4270
    %v4272 = vsel %vm63, %v4238, 0.0
    %v4273 = vadd.f32 %v4271, %v4272
    %v4274 = vrot.slane %v4273, 4
    %v4275 = vadd.f32 %v4273, %v4274
    %v4276 = vrot.slane %v4275, 2
    %v4277 = vadd.f32 %v4275, %v4276
    %v4278 = vrot.slane %v4277, 1
    %v4279 = vadd.f32 %v4277, %v4278
    %v4280 = vsel %vm63, %v4239, 0.0
    %v4281 = vsel %vm63, %v4240, 0.0
    %v4282 = vadd.f32 %v4280, %v4281
    %v4283 = vsel %vm63, %v4241, 0.0
    %v4284 = vadd.f32 %v4282, %v4283
    %v4285 = vsel %vm63, %v4242, 0.0
    %v4286 = vadd.f32 %v4284, %v4285
    %v4287 = vrot.slane %v4286, 4
    %v4288 = vadd.f32 %v4286, %v4287
    %v4289 = vrot.slane %v4288, 2
    %v4290 = vadd.f32 %v4288, %v4289
    %v4291 = vrot.slane %v4290, 1
    %v4292 = vadd.f32 %v4290, %v4291
    %v4293 = vsel %vm63, %v4243, 0.0
    %v4294 = vsel %vm63, %v4244, 0.0
    %v4295 = vadd.f32 %v4293, %v4294
    %v4296 = vsel %vm63, %v4245, 0.0
    %v4297 = vadd.f32 %v4295, %v4296
    %v4298 = vsel %vm63, %v4246, 0.0
    %v4299 = vadd.f32 %v4297, %v4298
    %v4300 = vrot.slane %v4299, 4
    %v4301 = vadd.f32 %v4299, %v4300
    %v4302 = vrot.slane %v4301, 2
    %v4303 = vadd.f32 %v4301, %v4302
    %v4304 = vrot.slane %v4303, 1
    %v4305 = vadd.f32 %v4303, %v4304
    %v4306 = vsel %vm63, %v4247, 0.0
    %v4307 = vsel %vm63, %v4248, 0.0
    %v4308 = vadd.f32 %v4306, %v4307
    %v4309 = vsel %vm63, %v4249, 0.0
    %v4310 = vadd.f32 %v4308, %v4309
    %v4311 = vsel %vm63, %v4250, 0.0
    %v4312 = vadd.f32 %v4310, %v4311
    %v4313 = vrot.slane %v4312, 4
    %v4314 = vadd.f32 %v4312, %v4313
    %v4315 = vrot.slane %v4314, 2
    %v4316 = vadd.f32 %v4314, %v4315
    %v4317 = vrot.slane %v4316, 1
    %v4318 = vadd.f32 %v4316, %v4317
    %v4319 = vsel %vm63, %v4251, 0.0
    %v4320 = vsel %vm63, %v4252, 0.0
    %v4321 = vadd.f32 %v4319, %v4320
    %v4322 = vsel %vm63, %v4253, 0.0
    %v4323 = vadd.f32 %v4321, %v4322
    %v4324 = vsel %vm63, %v4254, 0.0
    %v4325 = vadd.f32 %v4323, %v4324
    %v4326 = vrot.slane %v4325, 4
    %v4327 = vadd.f32 %v4325, %v4326
    %v4328 = vrot.slane %v4327, 2
    %v4329 = vadd.f32 %v4327, %v4328
    %v4330 = vrot.slane %v4329, 1
    %v4331 = vadd.f32 %v4329, %v4330
    %v4332 = vsel %vm63, %v4255, 0.0
    %v4333 = vsel %vm63, %v4256, 0.0
    %v4334 = vadd.f32 %v4332, %v4333
    %v4335 = vsel %vm63, %v4257, 0.0
    %v4336 = vadd.f32 %v4334, %v4335
    %v4337 = vsel %vm63, %v4258, 0.0
    %v4338 = vadd.f32 %v4336, %v4337
    %v4339 = vrot.slane %v4338, 4
    %v4340 = vadd.f32 %v4338, %v4339
    %v4341 = vrot.slane %v4340, 2
    %v4342 = vadd.f32 %v4340, %v4341
    %v4343 = vrot.slane %v4342, 1
    %v4344 = vadd.f32 %v4342, %v4343
    %v4345 = vsel %vm63, %v4259, 0.0
    %v4346 = vsel %vm63, %v4260, 0.0
    %v4347 = vadd.f32 %v4345, %v4346
    %v4348 = vsel %vm63, %v4261, 0.0
    %v4349 = vadd.f32 %v4347, %v4348
    %v4350 = vsel %vm63, %v4262, 0.0
    %v4351 = vadd.f32 %v4349, %v4350
    %v4352 = vrot.slane %v4351, 4
    %v4353 = vadd.f32 %v4351, %v4352
    %v4354 = vrot.slane %v4353, 2
    %v4355 = vadd.f32 %v4353, %v4354
    %v4356 = vrot.slane %v4355, 1
    %v4357 = vadd.f32 %v4355, %v4356
    %v4358 = vsel %vm63, %v4263, 0.0
    %v4359 = vsel %vm63, %v4264, 0.0
    %v4360 = vadd.f32 %v4358, %v4359
    %v4361 = vsel %vm63, %v4265, 0.0
    %v4362 = vadd.f32 %v4360, %v4361
    %v4363 = vsel %vm63, %v4266, 0.0
    %v4364 = vadd.f32 %v4362, %v4363
    %v4365 = vrot.slane %v4364, 4
    %v4366 = vadd.f32 %v4364, %v4365
    %v4367 = vrot.slane %v4366, 2
    %v4368 = vadd.f32 %v4366, %v4367
    %v4369 = vrot.slane %v4368, 1
    %v4370 = vadd.f32 %v4368, %v4369
    %v4379 = vsel %vm3970, %v4292, %v4279
    %v4380 = vsel %vm3972, %v4305, %v4379
    %v4381 = vsel %vm3974, %v4318, %v4380
    %v4382 = vsel %vm3976, %v4331, %v4381
    %v4383 = vsel %vm3978, %v4344, %v4382
    %v4384 = vsel %vm3980, %v4357, %v4383
    %v4385 = vsel %vm3982, %v4370, %v4384
    %v4388 = vsel %vm63, %v4082, 0
    %4390 = vmatprep.subr.mxu0 0.0
    %4391 = vmatpush1.msra.mxu0 0.0
    %4392 = vmatprep.subr.mxu0 0.0
    %4393 = vmatpush1.msra.mxu0 0.0
    %4394 = vmatprep.subr.mxu0 0.0
    %4395 = vmatpush1.msra.mxu0 0.0
    %4396 = vmatprep.subr.mxu0 0.0
    %4397 = vmatpush1.msra.mxu0 0.0
    %4398 = vmatprep.subr.mxu0 0.0
    %4399 = vmatpush1.msra.mxu0 0.0
    %4400 = vmatprep.subr.mxu0 0.0
    %4401 = vmatpush1.msra.mxu0 0.0
    %4402 = vmatprep.subr.mxu0 0.0
    %4403 = vmatpush1.msra.mxu0 0.0
    %4404 = vmatprep.subr.mxu0 0.0
    %4405 = vmatpush1.msra.mxu0 0.0
    %4406 = vmatprep.subr.mxu0 0.0
    %4407 = vmatpush1.msra.mxu0 0.0
    %4408 = vmatprep.subr.mxu0 0.0
    %4409 = vmatpush1.msra.mxu0 0.0
    %4410 = vmatprep.subr.mxu0 0.0
    %4411 = vmatpush1.msra.mxu0 0.0
    %4412 = vmatprep.subr.mxu0 0.0
    %4413 = vmatpush1.msra.mxu0 0.0
    %4414 = vmatprep.subr.mxu0 0.0
    %4415 = vmatpush1.msra.mxu0 %v337
    %4416 = vmatprep.subr.mxu0 0.0
    %4417 = vmatpush1.msra.mxu0 %v336
    %4418 = vmatprep.subr.mxu0 0.0
    %4419 = vmatpush1.msra.mxu0 %v335
    %4420 = vmatprep.subr.mxu0 0.0
    %4421 = vmatpush1.msra.mxu0 %v334
    %4422 = vmatprep.subr.mxu0 0.0
    %4423 = vmatpush2.msra.mxu0 0.0
    %4424 = vmatprep.subr.mxu0 0.0
    %4425 = vmatpush2.msra.mxu0 0.0
    %4426 = vmatprep.subr.mxu0 0.0
    %4427 = vmatpush2.msra.mxu0 0.0
    %4428 = vmatprep.subr.mxu0 0.0
    %4429 = vmatpush2.msra.mxu0 0.0
    %4430 = vmatprep.subr.mxu0 0.0
    %4431 = vmatpush2.msra.mxu0 0.0
    %4432 = vmatprep.subr.mxu0 0.0
    %4433 = vmatpush2.msra.mxu0 0.0
    %4434 = vmatprep.subr.mxu0 0.0
    %4435 = vmatpush2.msra.mxu0 0.0
    %4436 = vmatprep.subr.mxu0 0.0
    %4437 = vmatpush2.msra.mxu0 0.0
    %4438 = vmatprep.subr.mxu0 0.0
    %4439 = vmatpush2.msra.mxu0 0.0
    %4440 = vmatprep.subr.mxu0 0.0
    %4441 = vmatpush2.msra.mxu0 0.0
    %4442 = vmatprep.subr.mxu0 0.0
    %4443 = vmatpush2.msra.mxu0 0.0
    %4444 = vmatprep.subr.mxu0 0.0
    %4445 = vmatpush2.msra.mxu0 0.0
    %4446 = vmatprep.subr.mxu0 0.0
    %4447 = vmatpush2.msra.mxu0 0.0
    %4448 = vmatprep.subr.mxu0 0.0
    %4449 = vmatpush2.msra.mxu0 0.0
    %4450 = vmatprep.subr.mxu0 0.0
    %4451 = vmatpush2.msra.mxu0 0.0
    %4452 = vmatprep.subr.mxu0 0.0
    %4453 = vmatpush2.msra.mxu0 0.0
    %4454 = vmatprep.mubr.f32.mxu0 0.0
    %4455 = vmatmul.mubr.f32.gmra.mxu0 %v4388
    %v4456 = vpop.f32.mrf.mxu0
    %v4457 = vadd.f32 %v4385, %v4456
    %v4458 = vpop.f32.mrf.mxu0
    %4459 = vdwg.mxu0
    %v4460 = vld [vmem:[#allocation6 + $0xa0] sm:$0xff]
    %v4461 = vld [vmem:[#allocation6 + $0xa8] sm:$0xff]
    %v4462 = vld [vmem:[#allocation6 + $0xb0] sm:$0xff]
    %v4463 = vld [vmem:[#allocation6 + $0xb8] sm:$0xff]
    %v4465 = vsel %vm63, %v4457, 0
    %4467 = vmatprep.subr.mxu0 0.0
    %4468 = vmatpush1.msra.mxu0 0.0
    %4469 = vmatprep.subr.mxu0 0.0
    %4470 = vmatpush1.msra.mxu0 0.0
    %4471 = vmatprep.subr.mxu0 0.0
    %4472 = vmatpush1.msra.mxu0 0.0
    %4473 = vmatprep.subr.mxu0 0.0
    %4474 = vmatpush1.msra.mxu0 0.0
    %4475 = vmatprep.subr.mxu0 0.0
    %4476 = vmatpush1.msra.mxu0 0.0
    %4477 = vmatprep.subr.mxu0 0.0
    %4478 = vmatpush1.msra.mxu0 0.0
    %4479 = vmatprep.subr.mxu0 0.0
    %4480 = vmatpush1.msra.mxu0 0.0
    %4481 = vmatprep.subr.mxu0 0.0
    %4482 = vmatpush1.msra.mxu0 0.0
    %4483 = vmatprep.subr.mxu0 0.0
    %4484 = vmatpush1.msra.mxu0 0.0
    %4485 = vmatprep.subr.mxu0 0.0
    %4486 = vmatpush1.msra.mxu0 0.0
    %4487 = vmatprep.subr.mxu0 0.0
    %4488 = vmatpush1.msra.mxu0 0.0
    %4489 = vmatprep.subr.mxu0 0.0
    %4490 = vmatpush1.msra.mxu0 0.0
    %4491 = vmatprep.subr.mxu0 0.0
    %4492 = vmatpush1.msra.mxu0 %v4463
    %4493 = vmatprep.subr.mxu0 0.0
    %4494 = vmatpush1.msra.mxu0 %v4462
    %4495 = vmatprep.subr.mxu0 0.0
    %4496 = vmatpush1.msra.mxu0 %v4461
    %4497 = vmatprep.subr.mxu0 0.0
    %4498 = vmatpush1.msra.mxu0 %v4460
    %4499 = vmatprep.subr.mxu0 0.0
    %4500 = vmatpush2.msra.mxu0 0.0
    %4501 = vmatprep.subr.mxu0 0.0
    %4502 = vmatpush2.msra.mxu0 0.0
    %4503 = vmatprep.subr.mxu0 0.0
    %4504 = vmatpush2.msra.mxu0 0.0
    %4505 = vmatprep.subr.mxu0 0.0
    %4506 = vmatpush2.msra.mxu0 0.0
    %4507 = vmatprep.subr.mxu0 0.0
    %4508 = vmatpush2.msra.mxu0 0.0
    %4509 = vmatprep.subr.mxu0 0.0
    %4510 = vmatpush2.msra.mxu0 0.0
    %4511 = vmatprep.subr.mxu0 0.0
    %4512 = vmatpush2.msra.mxu0 0.0
    %4513 = vmatprep.subr.mxu0 0.0
    %4514 = vmatpush2.msra.mxu0 0.0
    %4515 = vmatprep.subr.mxu0 0.0
    %4516 = vmatpush2.msra.mxu0 0.0
    %4517 = vmatprep.subr.mxu0 0.0
    %4518 = vmatpush2.msra.mxu0 0.0
    %4519 = vmatprep.subr.mxu0 0.0
    %4520 = vmatpush2.msra.mxu0 0.0
    %4521 = vmatprep.subr.mxu0 0.0
    %4522 = vmatpush2.msra.mxu0 0.0
    %4523 = vmatprep.subr.mxu0 0.0
    %4524 = vmatpush2.msra.mxu0 0.0
    %4525 = vmatprep.subr.mxu0 0.0
    %4526 = vmatpush2.msra.mxu0 0.0
    %4527 = vmatprep.subr.mxu0 0.0
    %4528 = vmatpush2.msra.mxu0 0.0
    %4529 = vmatprep.subr.mxu0 0.0
    %4530 = vmatpush2.msra.mxu0 0.0
    %4531 = vmatprep.mubr.f32.mxu0 0.0
    %4532 = vmatmul.mubr.f32.gmra.mxu0 %v4465
    %v4533 = vpop.f32.mrf.mxu0
    %v4534 = vadd.f32 0.0, %v4533
    %v4535 = vpop.f32.mrf.mxu0
    %4536 = vdwg.mxu0
    %v4537 = vsel %vm63, %v691, 0.0
    %4538 = vadd.xlane.f32.xlu0 %v4537
    %v4539 = vpop.xlane.xlu0 %4538
    %v4540 = vsel %vm63, %v697, 0.0
    %4541 = vadd.xlane.f32.xlu0 %v4540
    %v4542 = vpop.xlane.xlu0 %4541
    %v4543 = vsel %vm63, %v763, 0.0
    %4544 = vadd.xlane.f32.xlu0 %v4543
    %v4545 = vpop.xlane.xlu0 %4544
    %v4546 = vadd.f32 %v4539, %v4542
    %v4547 = vld [vmem:[#allocation6 + $0x160] sm:$0xf]
    %v4548 = vld [vmem:[#allocation6 + $0x140] sm:$0xff]
    %v4549 = vld [vmem:[#allocation6 + $0x148] sm:$0xff]
    %v4550 = vld [vmem:[#allocation6 + $0x150] sm:$0xff]
    %v4551 = vld [vmem:[#allocation6 + $0x158] sm:$0xff]
    %v4552 = vlaneseq
    %v4553 = vshrl.u32 %v4552, 7
    %v4554 = vsub.s32 0, %v4553
    %v4555 = vrot.slane %v4547, %v4554
    %v4556 = vmul.f32 %v4539, %v4555
    %v4558 = vsel %vm63, %v4534, 0
    %4560 = vmatprep.subr.mxu0 0.0
    %4561 = vmatpush1.msra.mxu0 0.0
    %4562 = vmatprep.subr.mxu0 0.0
    %4563 = vmatpush1.msra.mxu0 0.0
    %4564 = vmatprep.subr.mxu0 0.0
    %4565 = vmatpush1.msra.mxu0 0.0
    %4566 = vmatprep.subr.mxu0 0.0
    %4567 = vmatpush1.msra.mxu0 0.0
    %4568 = vmatprep.subr.mxu0 0.0
    %4569 = vmatpush1.msra.mxu0 0.0
    %4570 = vmatprep.subr.mxu0 0.0
    %4571 = vmatpush1.msra.mxu0 0.0
    %4572 = vmatprep.subr.mxu0 0.0
    %4573 = vmatpush1.msra.mxu0 0.0
    %4574 = vmatprep.subr.mxu0 0.0
    %4575 = vmatpush1.msra.mxu0 0.0
    %4576 = vmatprep.subr.mxu0 0.0
    %4577 = vmatpush1.msra.mxu0 0.0
    %4578 = vmatprep.subr.mxu0 0.0
    %4579 = vmatpush1.msra.mxu0 0.0
    %4580 = vmatprep.subr.mxu0 0.0
    %4581 = vmatpush1.msra.mxu0 0.0
    %4582 = vmatprep.subr.mxu0 0.0
    %4583 = vmatpush1.msra.mxu0 0.0
    %4584 = vmatprep.subr.mxu0 0.0
    %4585 = vmatpush1.msra.mxu0 %v4551
    %4586 = vmatprep.subr.mxu0 0.0
    %4587 = vmatpush1.msra.mxu0 %v4550
    %4588 = vmatprep.subr.mxu0 0.0
    %4589 = vmatpush1.msra.mxu0 %v4549
    %4590 = vmatprep.subr.mxu0 0.0
    %4591 = vmatpush1.msra.mxu0 %v4548
    %4592 = vmatprep.subr.mxu0 0.0
    %4593 = vmatpush2.msra.mxu0 0.0
    %4594 = vmatprep.subr.mxu0 0.0
    %4595 = vmatpush2.msra.mxu0 0.0
    %4596 = vmatprep.subr.mxu0 0.0
    %4597 = vmatpush2.msra.mxu0 0.0
    %4598 = vmatprep.subr.mxu0 0.0
    %4599 = vmatpush2.msra.mxu0 0.0
    %4600 = vmatprep.subr.mxu0 0.0
    %4601 = vmatpush2.msra.mxu0 0.0
    %4602 = vmatprep.subr.mxu0 0.0
    %4603 = vmatpush2.msra.mxu0 0.0
    %4604 = vmatprep.subr.mxu0 0.0
    %4605 = vmatpush2.msra.mxu0 0.0
    %4606 = vmatprep.subr.mxu0 0.0
    %4607 = vmatpush2.msra.mxu0 0.0
    %4608 = vmatprep.subr.mxu0 0.0
    %4609 = vmatpush2.msra.mxu0 0.0
    %4610 = vmatprep.subr.mxu0 0.0
    %4611 = vmatpush2.msra.mxu0 0.0
    %4612 = vmatprep.subr.mxu0 0.0
    %4613 = vmatpush2.msra.mxu0 0.0
    %4614 = vmatprep.subr.mxu0 0.0
    %4615 = vmatpush2.msra.mxu0 0.0
    %4616 = vmatprep.subr.mxu0 0.0
    %4617 = vmatpush2.msra.mxu0 0.0
    %4618 = vmatprep.subr.mxu0 0.0
    %4619 = vmatpush2.msra.mxu0 0.0
    %4620 = vmatprep.subr.mxu0 0.0
    %4621 = vmatpush2.msra.mxu0 0.0
    %4622 = vmatprep.subr.mxu0 0.0
    %4623 = vmatpush2.msra.mxu0 0.0
    %4624 = vmatprep.mubr.f32.mxu0 0.0
    %4625 = vmatmul.mubr.f32.gmra.mxu0 %v4558
    %v4626 = vpop.f32.mrf.mxu0
    %v4627 = vadd.f32 %v4556, %v4626
    %v4628 = vpop.f32.mrf.mxu0
    %4629 = vdwg.mxu0
    %v4630 = vlaneseq
    %v4631 = vshrl.u32 %v4630, 7
    %v4632 = vsub.s32 1, %v4631
    %v4633 = vrot.slane %v4547, %v4632
    %v4634 = vmul.f32 %v4542, %v4633
    %v4635 = vadd.f32 %v4627, %v4634
    %v4636 = vlaneseq
    %v4637 = vshrl.u32 %v4636, 7
    %v4638 = vsub.s32 2, %v4637
    %v4639 = vrot.slane %v4547, %v4638
    %v4640 = vmul.f32 %v4545, %v4639
    %v4641 = vadd.f32 %v4635, %v4640
    %v4642 = vlaneseq
    %v4643 = vshrl.u32 %v4642, 7
    %v4644 = vsub.s32 3, %v4643
    %v4645 = vrot.slane %v4547, %v4644
    %v4646 = vmul.f32 %v4546, %v4645
    %v4647 = vadd.f32 %v4641, %v4646
    %v4648 = vld [vmem:[#allocation6 + $0x19a] sm:$0x1]
    %v4649 = vlaneseq
    %v4650 = vshrl.u32 %v4649, 7
    %v4651 = vsub.s32 0, %v4650
    %v4652 = vrot.slane %v4648, %v4651
    %v4653 = vadd.f32 %v4647, %v4652
    %v4654 = vmax.f32 %v4653, 0.0
    %v4655 = vld [vmem:[#allocation6 + $0x168] sm:$0xff]
    %v4656 = vld [vmem:[#allocation6 + $0x170] sm:$0xff]
    %v4657 = vld [vmem:[#allocation6 + $0x178] sm:$0xff]
    %v4658 = vld [vmem:[#allocation6 + $0x180] sm:$0xff]
    %v4659 = vld [vmem:[#allocation6 + $0x188] sm:$0xf]
    %v4660 = vld [vmem:[#allocation6 + $0x19b] sm:$0x1]
    %v4661 = vlaneseq
    %v4662 = vshrl.u32 %v4661, 7
    %v4663 = vsub.s32 0, %v4662
    %v4664 = vrot.slane %v4660, %v4663
    %vm4665 = vcmask 293888
    %v4667 = vsel %vm4665, %v4654, 0
    %vm4669 = vcmask 1043456
    %v4671 = vsel %vm4669, %v4659, 0
    %4673 = vmatprep.subr.mxu0 0.0
    %4674 = vmatpush1.msra.mxu0 0.0
    %4675 = vmatprep.subr.mxu0 0.0
    %4676 = vmatpush1.msra.mxu0 0.0
    %4677 = vmatprep.subr.mxu0 0.0
    %4678 = vmatpush1.msra.mxu0 0.0
    %4679 = vmatprep.subr.mxu0 0.0
    %4680 = vmatpush1.msra.mxu0 0.0
    %4681 = vmatprep.subr.mxu0 0.0
    %4682 = vmatpush1.msra.mxu0 0.0
    %4683 = vmatprep.subr.mxu0 0.0
    %4684 = vmatpush1.msra.mxu0 0.0
    %4685 = vmatprep.subr.mxu0 0.0
    %4686 = vmatpush1.msra.mxu0 0.0
    %4687 = vmatprep.subr.mxu0 0.0
    %4688 = vmatpush1.msra.mxu0 0.0
    %4689 = vmatprep.subr.mxu0 0.0
    %4690 = vmatpush1.msra.mxu0 0.0
    %4691 = vmatprep.subr.mxu0 0.0
    %4692 = vmatpush1.msra.mxu0 0.0
    %4693 = vmatprep.subr.mxu0 0.0
    %4694 = vmatpush1.msra.mxu0 0.0
    %4695 = vmatprep.subr.mxu0 0.0
    %4696 = vmatpush1.msra.mxu0 %v4671
    %4697 = vmatprep.subr.mxu0 0.0
    %4698 = vmatpush1.msra.mxu0 %v4658
    %4699 = vmatprep.subr.mxu0 0.0
    %4700 = vmatpush1.msra.mxu0 %v4657
    %4701 = vmatprep.subr.mxu0 0.0
    %4702 = vmatpush1.msra.mxu0 %v4656
    %4703 = vmatprep.subr.mxu0 0.0
    %4704 = vmatpush1.msra.mxu0 %v4655
    %4705 = vmatprep.subr.mxu0 0.0
    %4706 = vmatpush2.msra.mxu0 0.0
    %4707 = vmatprep.subr.mxu0 0.0
    %4708 = vmatpush2.msra.mxu0 0.0
    %4709 = vmatprep.subr.mxu0 0.0
    %4710 = vmatpush2.msra.mxu0 0.0
    %4711 = vmatprep.subr.mxu0 0.0
    %4712 = vmatpush2.msra.mxu0 0.0
    %4713 = vmatprep.subr.mxu0 0.0
    %4714 = vmatpush2.msra.mxu0 0.0
    %4715 = vmatprep.subr.mxu0 0.0
    %4716 = vmatpush2.msra.mxu0 0.0
    %4717 = vmatprep.subr.mxu0 0.0
    %4718 = vmatpush2.msra.mxu0 0.0
    %4719 = vmatprep.subr.mxu0 0.0
    %4720 = vmatpush2.msra.mxu0 0.0
    %4721 = vmatprep.subr.mxu0 0.0
    %4722 = vmatpush2.msra.mxu0 0.0
    %4723 = vmatprep.subr.mxu0 0.0
    %4724 = vmatpush2.msra.mxu0 0.0
    %4725 = vmatprep.subr.mxu0 0.0
    %4726 = vmatpush2.msra.mxu0 0.0
    %4727 = vmatprep.subr.mxu0 0.0
    %4728 = vmatpush2.msra.mxu0 0.0
    %4729 = vmatprep.subr.mxu0 0.0
    %4730 = vmatpush2.msra.mxu0 0.0
    %4731 = vmatprep.subr.mxu0 0.0
    %4732 = vmatpush2.msra.mxu0 0.0
    %4733 = vmatprep.subr.mxu0 0.0
    %4734 = vmatpush2.msra.mxu0 0.0
    %4735 = vmatprep.subr.mxu0 0.0
    %4736 = vmatpush2.msra.mxu0 0.0
    %4737 = vmatprep.mubr.f32.mxu0 0.0
    %4738 = vmatmul.mubr.f32.gmra.mxu0 %v4667
    %v4739 = vpop.f32.mrf.mxu0
    %v4740 = vadd.f32 %v4664, %v4739
    %v4741 = vpop.f32.mrf.mxu0
    %4742 = vdwg.mxu0
    %4744 = vrot.lane.b32.xlu0 %v4740, 32
    %v4745 = vpop.permute.xlu0 %4744
    %v4747 = vsel %vm63, %v673, %v4745
    %vm4748 = vcmask 523264
    %v4749 = vsel %vm4748, %v4747, 0.0
    %4750 = vst [vmem:[#allocation8] sm:$0xff] %v4749
    // Predicated region
    $region22: #{link_transformer_forward.1} parent=1 // pred_check
      _
    $region23: #{link_transformer_forward.1} parent=1 // pred_check_branch
      %4752 = sbr.rel (0) target = $region25
    $region24: #{link_transformer_forward.1} parent=1 // pred_region
      %s4754 = ssub.s32 128, 128
      %4755 = vsyncadd [#allocation5], %s4754
      %s4757 = sshll.u32 [#allocation8], 4
      %s4758 = int_to_ptr.vmem [resolvable:$true] %s4757
      %4760 = dma.vmem_to_hbm [thread:$0]  %s4758, 128, %s3, [#allocation5]
    $region25: #{link_transformer_forward.1} parent=1 // pred_fallthru
      _
    // Predicated region
    $region26: #{link_transformer_forward.1} parent=1 // pred_check
      _
    $region27: #{link_transformer_forward.1} parent=1 // pred_check_branch
      %4762 = sbr.rel (0) target = $region29
    $region28: #{link_transformer_forward.1} parent=1 // pred_region
      %4763 = dma.done [#allocation5], 128
    $region29: #{link_transformer_forward.1} parent=1 // pred_fallthru
      _
    %4764 = vsyncpa [#allocation4], 1
    %4765 = vsyncpa [#allocation7], 1
    %4766 = vsyncpa [#allocation5], 1

</llo_original>
